<compile_context>
chip_gen: v7x
topology: tpu7x:2x2x1
jax: 0.10.0
libtpu: 0.0.40
codegen_flags: <defaults>
</compile_context>

<pallas_src>
import functools

import jax
import jax.numpy as jnp
from jax.experimental import pallas as pl
from jax.experimental.pallas import tpu as pltpu


def _round_up(n, m):
    return ((n + m - 1) // m) * m


def _cdiv(a, b):
    return (a + b - 1) // b


def _vmem_capacity_bytes():
    try:
        return int(pltpu.get_tpu_info().vmem_capacity_bytes)
    except Exception:
        return 64 * 1024 * 1024  # conservative fallback (v7x per-core VMEM)


def _pick_chunk(seq_len, tb, hidden_p, dtype_bytes, vmem_cap, max_chunk=128):
    """VMEM-aware timesteps-per-grid-step (double-buffered gates chunk must fit)."""
    per_t = 2 * tb * 3 * hidden_p * dtype_bytes               # 2 bufs of gates per timestep
    resident = (2 * hidden_p * 3 * hidden_p * dtype_bytes     # fused h-weights (worst case 2 bufs)
                + 2 * tb * hidden_p * 4                       # h output block
                + 2 * hidden_p * 4                            # b_nh
                + (4 << 20))                                  # slack / internal scratch
    budget = int(vmem_cap * 0.7) - resident
    t = budget // per_t if budget > 0 else 1
    return int(max(1, min(seq_len, max_chunk, t)))


def _gru_recurrent_kernel(gates_ref, w_h3_ref, b_nh_ref, h_ref, *,
                          hidden_p, chunk, seq_len, seq_pad, unroll):
    """One grid step processes a chunk of `chunk` timesteps for one batch block.

    gates_ref : (T, TB, 3*Hp) precomputed x-side pre-activations (+fused r/z biases)
    w_h3_ref  : (Hp, 3*Hp)    fused hidden-side weights [w_rh | w_zh | w_nh]
    b_nh_ref  : (1, Hp)       hidden-side bias of the n gate (cannot be fused)
    h_ref     : (TB, Hp)      output block; constant block index along the sequence
                              grid axis -> VMEM-resident hidden-state accumulator.
    """
    Hp = hidden_p
    TB = h_ref.shape[0]

    # Zero-init on the FIRST sequence chunk of this batch block.
    # Grid axis 0 = batch split ("parallel"), axis 1 = sequence ("arbitrary").
    @pl.when(pl.program_id(1) == 0)
    def _():
        h_ref[...] = jnp.zeros_like(h_ref)

    # Hoisted loop-invariant load and broadcast (no per-unrolled-step re-emit).
    w_h3 = w_h3_ref[...]                                     # (Hp, 3Hp) compute dtype
    b_nh_b = jnp.broadcast_to(b_nh_ref[...], (TB, Hp))       # (TB, Hp) f32

    base_t = pl.program_id(1) * chunk

    def step(t, h):
        g = gates_ref[t]                                                  # (TB, 3Hp)
        gh = jnp.dot(h.astype(w_h3.dtype), w_h3,
                     preferred_element_type=jnp.float32)                  # (TB, 3Hp) f32
        r = jax.nn.sigmoid(g[:, 0 * Hp:1 * Hp] + gh[:, 0 * Hp:1 * Hp])
        z = jax.nn.sigmoid(g[:, 1 * Hp:2 * Hp] + gh[:, 1 * Hp:2 * Hp])
        n = jnp.tanh(g[:, 2 * Hp:3 * Hp] + r * (gh[:, 2 * Hp:3 * Hp] + b_nh_b))
        h_new = (1.0 - z) * n + z * h
        if seq_pad != seq_len:        # only emitted when S was padded up
            h_new = jnp.where(base_t + t < seq_len, h_new, h)
        return h_new

    h_ref[...] = jax.lax.fori_loop(0, chunk, step, h_ref[...], unroll=unroll)


def gru_forward(x, params, *, compute_dtype=jnp.bfloat16, max_chunk=128):
    """x: (batch, seq, embed) float32.  Returns final hidden (batch, hidden) f32."""
    B, S, E = x.shape
    H = params["w_rh"].shape[0]
    assert S >= 1, "sequence length must be >= 1"

    f32 = jnp.float32
    dtype_bytes = jnp.finfo(compute_dtype).bits // 8

    Bp = _round_up(max(B, 8), 8)        # sublane-aligned batch
    Hp = _round_up(H, 128)              # lane-dense hidden width

    # Batch split -> 2 independent recurrences for the 2 v7x TensorCores
    # (harmless on 1-TC v5e/v6e; skipped when the batch is tiny).
    if Bp >= 16 and Bp % 16 == 0:
        TB = Bp // 2
    else:
        TB = Bp
    nb = Bp // TB

    vmem_cap = _vmem_capacity_bytes()
    T = _pick_chunk(S, TB, Hp, dtype_bytes, vmem_cap, max_chunk)
    S_pad = _cdiv(S, T) * T
    nc = S_pad // T

    def pad2d(w, rows, cols):
        w = w.astype(f32)
        return jnp.pad(w, ((0, rows - w.shape[0]), (0, cols - w.shape[1])))

    # Fused x-side weights (E, 3Hp) and fused per-gate biases (1, 3Hp).
    # b_rx+b_rh and b_zx+b_zh fold exactly into the x-side bias; b_nh cannot
    # (it sits inside the r*(...) term of the n gate).
    w_x3 = jnp.concatenate([pad2d(params["w_rx"], E, Hp),
                            pad2d(params["w_zx"], E, Hp),
                            pad2d(params["w_nx"], E, Hp)], axis=1)
    b_x3 = jnp.concatenate([pad2d(params["b_rx"] + params["b_rh"], 1, Hp),
                            pad2d(params["b_zx"] + params["b_zh"], 1, Hp),
                            pad2d(params["b_nx"], 1, Hp)], axis=1)

    # Fused hidden-side weights (Hp, 3Hp) in the MXU compute dtype; n-gate bias f32.
    w_h3 = jnp.concatenate([pad2d(params["w_rh"], Hp, Hp),
                            pad2d(params["w_zh"], Hp, Hp),
                            pad2d(params["w_nh"], Hp, Hp)],
                           axis=1).astype(compute_dtype)
    b_nh = pad2d(params["b_nh"], 1, Hp)

    # Pad x (cheap: B*S*E) BEFORE the projection so the big gates tensor is
    # written already padded -- no second HBM round trip of (S, Bp, 3Hp).
    x_p = jnp.pad(x.astype(f32), ((0, Bp - B), (0, S_pad - S), (0, 0)))

    # Hoisted input projection: ONE large matmul over all timesteps (plain XLA),
    # time-major output, stored in compute_dtype (bf16 halves the only large
    # HBM stream).  Accumulation and bias add stay f32.
    gates = (jnp.einsum("bse,eg->sbg", x_p, w_x3,
                        preferred_element_type=f32) + b_x3).astype(compute_dtype)

    kernel = functools.partial(
        _gru_recurrent_kernel, hidden_p=Hp, chunk=T,
        seq_len=S, seq_pad=S_pad, unroll=min(T, 8))

    gates_block_bytes = T * TB * 3 * Hp * dtype_bytes
    resident_bytes = 2 * Hp * 3 * Hp * dtype_bytes + 2 * Hp * 4 + 2 * TB * Hp * 4
    vmem_limit = int(min(vmem_cap,
                         max(2 * gates_block_bytes + resident_bytes + (8 << 20),
                             32 << 20)))

    def build(single_buffer_resident):
        resident_kw = ({"pipeline_mode": pl.Buffered(1)}
                       if single_buffer_resident else {})
        return pl.pallas_call(
            kernel,
            out_shape=jax.ShapeDtypeStruct((Bp, Hp), f32),
            grid_spec=pltpu.PrefetchScalarGridSpec(
                num_scalar_prefetch=0,
                grid=(nb, nc),
                in_specs=[
                    pl.BlockSpec((T, TB, 3 * Hp), lambda b, c: (c, b, 0)),   # seq chunk
                    pl.BlockSpec((Hp, 3 * Hp), lambda b, c: (0, 0), **resident_kw),
                    pl.BlockSpec((1, Hp), lambda b, c: (0, 0), **resident_kw),
                ],
                out_specs=pl.BlockSpec((TB, Hp), lambda b, c: (b, 0)),       # h accumulator
            ),
            compiler_params=pltpu.CompilerParams(
                dimension_semantics=("parallel", "arbitrary"),  # batch || , seq sequential
                vmem_limit_bytes=vmem_limit),
        )

    try:
        # Grid-invariant operands single-buffered -> frees VMEM for a deeper
        # gates pipeline (matters most under v7x's 64 MiB VMEM).
        h_padded = build(True)(gates, w_h3, b_nh)
    except Exception:
        # This jax build does not honor pipeline_mode here -> default buffering.
        h_padded = build(False)(gates, w_h3, b_nh)

    return h_padded[:B, :H]


def gru_reference(x, params):
    """Plain-JAX replica of the PyTorch forward for verification."""
    B, S, E = x.shape
    H = params["w_rh"].shape[0]
    h = jnp.zeros((B, H), jnp.float32)
    for t in range(S):
        xt = x[:, t]
        r = jax.nn.sigmoid(xt @ params["w_rx"] + params["b_rx"]
                           + h @ params["w_rh"] + params["b_rh"])
        z = jax.nn.sigmoid(xt @ params["w_zx"] + params["b_zx"]
                           + h @ params["w_zh"] + params["b_zh"])
        n = jnp.tanh(xt @ params["w_nx"] + params["b_nx"]
                     + r * (h @ params["w_nh"] + params["b_nh"]))
        h = (1.0 - z) * n + z * h
    return h


def init_params(key, embed_size, hidden_size):
    """torch.rand -> uniform [0, 1), deterministic via PRNGKey splits."""
    names_shapes = [
        ("w_rh", (hidden_size, hidden_size)), ("b_rh", (1, hidden_size)),
        ("w_rx", (embed_size, hidden_size)),  ("b_rx", (1, hidden_size)),
        ("w_zh", (hidden_size, hidden_size)), ("b_zh", (1, hidden_size)),
        ("w_zx", (embed_size, hidden_size)),  ("b_zx", (1, hidden_size)),
        ("w_nh", (hidden_size, hidden_size)), ("b_nh", (1, hidden_size)),
        ("w_nx", (embed_size, hidden_size)),  ("b_nx", (1, hidden_size)),
    ]
    keys = jax.random.split(key, len(names_shapes))
    return {name: jax.random.uniform(k, shape, jnp.float32)
            for (name, shape), k in zip(names_shapes, keys)}


if __name__ == "__main__":
    embed_size = 4
    hidden_size = 32
    batch = 2
    seq = 8

    root = jax.random.PRNGKey(0)
    k_params, k_x = jax.random.split(root)
    params = init_params(k_params, embed_size, hidden_size)
    x = jax.random.normal(k_x, (batch, seq, embed_size), jnp.float32)

    ref = gru_reference(x, params)

    # Exact-semantics check: the f32 compute path must match the reference tightly.
    out_f32 = jax.block_until_ready(gru_forward(x, params, compute_dtype=jnp.float32))
    assert out_f32.shape == (batch, hidden_size)
    assert jnp.allclose(out_f32, ref, atol=1e-5, rtol=1e-5), "f32 path mismatch"

    # Fast path: bf16 gates stream + bf16 MXU operands, f32 accumulation & gate math.
    out = jax.block_until_ready(gru_forward(x, params))
    assert out.shape == (batch, hidden_size)
    assert jnp.allclose(out, ref, atol=1e-1, rtol=1e-1), "bf16 path mismatch vs reference"

    print("KERNEL_OK")
</pallas_src>

<mosaic_0001>
module attributes {stable_mosaic.version = 11 : i64} {
  func.func @_gru_recurrent_kernel(%arg0: i32, %arg1: i32, %arg2: memref<8x8x384xf32, #tpu.memory_space<vmem>>, %arg3: memref<128x384xf32, #tpu.memory_space<vmem>>, %arg4: memref<1x128xf32, #tpu.memory_space<vmem>>, %arg5: memref<8x128xf32, #tpu.memory_space<vmem>>) attributes {dimension_semantics = [#tpu.dimension_semantics<parallel>, #tpu.dimension_semantics<arbitrary>], iteration_bounds = array<i64: 1, 1>, scalar_prefetch = 0 : i64, scratch_operands = 0 : i64, tpu.core_type = #tpu.core_type<tc>, window_params = [{transform_indices = @transform_0, window_bounds = array<i64: 8, 8, 384>}, {pipeline_mode = #tpu.pipeline_mode<synchronous>, transform_indices = @transform_1, window_bounds = array<i64: 128, 384>}, {pipeline_mode = #tpu.pipeline_mode<synchronous>, transform_indices = @transform_2, window_bounds = array<i64: 1, 128>}, {transform_indices = @transform_3, window_bounds = array<i64: 8, 128>}]} {
    %c0_i32 = arith.constant 0 : i32
    %0 = arith.cmpi eq, %arg1, %c0_i32 : i32
    %1 = arith.extui %0 : i1 to i32
    %c0_i32_0 = arith.constant 0 : i32
    %2 = arith.cmpi ne, %1, %c0_i32_0 : i32
    scf.if %2 {
      %cst_56 = arith.constant 0.000000e+00 : f32
      %257 = vector.broadcast %cst_56 : f32 to vector<8x128xf32>
      %c0_57 = arith.constant 0 : index
      %c0_58 = arith.constant 0 : index
      %258 = vector.load %arg5[%c0_57, %c0_58] : memref<8x128xf32, #tpu.memory_space<vmem>>, vector<8x128xf32>
      tpu.vector_store %arg5[%c0_57, %c0_58], %257 {strides = array<i32>} : memref<8x128xf32, #tpu.memory_space<vmem>>, vector<8x128xf32>,
    } else {
    }
    %c0 = arith.constant 0 : index
    %c0_1 = arith.constant 0 : index
    %3 = vector.load %arg3[%c0, %c0_1] : memref<128x384xf32, #tpu.memory_space<vmem>>, vector<128x384xf32>
    %c0_2 = arith.constant 0 : index
    %c0_3 = arith.constant 0 : index
    %4 = vector.load %arg4[%c0_2, %c0_3] : memref<1x128xf32, #tpu.memory_space<vmem>>, vector<1x128xf32>
    %5 = vector.shape_cast %4 : vector<1x128xf32> to vector<1x128xf32>
    %6 = vector.broadcast %5 : vector<1x128xf32> to vector<8x128xf32>
    %c0_4 = arith.constant 0 : index
    %c0_5 = arith.constant 0 : index
    %7 = vector.load %arg5[%c0_4, %c0_5] : memref<8x128xf32, #tpu.memory_space<vmem>>, vector<8x128xf32>
    %c0_i32_6 = arith.constant 0 : i32
    %8 = arith.index_cast %c0_i32_6 : i32 to index
    %c0_7 = arith.constant 0 : index
    %c0_8 = arith.constant 0 : index
    %9 = vector.load %arg2[%8, %c0_7, %c0_8] : memref<8x8x384xf32, #tpu.memory_space<vmem>>, vector<1x8x384xf32>
    %10 = vector.shape_cast %9 : vector<1x8x384xf32> to vector<8x384xf32>
    %cst = arith.constant dense<0.000000e+00> : vector<8x384xf32>
    %11 = tpu.matmul %7, %3, %cst {dimension_numbers = #tpu.dot_dimension_numbers<[1], [0], [0], [1], [0, 0, 1, 1], [], []>} : vector<8x128xf32>, vector<128x384xf32>, vector<8x384xf32> -> vector<8x384xf32>
    %12 = vector.extract_strided_slice %10 {offsets = [0, 0], sizes = [8, 128], strides = [1, 1]} : vector<8x384xf32> to vector<8x128xf32>
    %13 = vector.extract_strided_slice %11 {offsets = [0, 0], sizes = [8, 128], strides = [1, 1]} : vector<8x384xf32> to vector<8x128xf32>
    %14 = arith.addf %12, %13 : vector<8x128xf32>
    %15 = arith.negf %14 : vector<8x128xf32>
    %16 = math.exp %15 : vector<8x128xf32>
    %cst_9 = arith.constant 1.000000e+00 : f32
    %17 = vector.broadcast %cst_9 : f32 to vector<8x128xf32>
    %18 = arith.addf %17, %16 : vector<8x128xf32>
    %19 = arith.divf %17, %18 : vector<8x128xf32>
    %20 = vector.extract_strided_slice %10 {offsets = [0, 128], sizes = [8, 128], strides = [1, 1]} : vector<8x384xf32> to vector<8x128xf32>
    %21 = vector.extract_strided_slice %11 {offsets = [0, 128], sizes = [8, 128], strides = [1, 1]} : vector<8x384xf32> to vector<8x128xf32>
    %22 = arith.addf %20, %21 : vector<8x128xf32>
    %23 = arith.negf %22 : vector<8x128xf32>
    %24 = math.exp %23 : vector<8x128xf32>
    %cst_10 = arith.constant 1.000000e+00 : f32
    %25 = vector.broadcast %cst_10 : f32 to vector<8x128xf32>
    %26 = arith.addf %25, %24 : vector<8x128xf32>
    %27 = arith.divf %25, %26 : vector<8x128xf32>
    %28 = vector.extract_strided_slice %10 {offsets = [0, 256], sizes = [8, 128], strides = [1, 1]} : vector<8x384xf32> to vector<8x128xf32>
    %29 = vector.extract_strided_slice %11 {offsets = [0, 256], sizes = [8, 128], strides = [1, 1]} : vector<8x384xf32> to vector<8x128xf32>
    %30 = arith.addf %29, %6 : vector<8x128xf32>
    %31 = arith.mulf %19, %30 : vector<8x128xf32>
    %32 = arith.addf %28, %31 : vector<8x128xf32>
    %33 = math.tanh %32 : vector<8x128xf32>
    %cst_11 = arith.constant 1.000000e+00 : f32
    %34 = vector.broadcast %cst_11 : f32 to vector<8x128xf32>
    %35 = arith.subf %34, %27 : vector<8x128xf32>
    %36 = arith.mulf %35, %33 : vector<8x128xf32>
    %37 = arith.mulf %27, %7 : vector<8x128xf32>
    %38 = arith.addf %36, %37 : vector<8x128xf32>
    %c1_i32 = arith.constant 1 : i32
    %39 = arith.index_cast %c1_i32 : i32 to index
    %c0_12 = arith.constant 0 : index
    %c0_13 = arith.constant 0 : index
    %40 = vector.load %arg2[%39, %c0_12, %c0_13] : memref<8x8x384xf32, #tpu.memory_space<vmem>>, vector<1x8x384xf32>
    %41 = vector.shape_cast %40 : vector<1x8x384xf32> to vector<8x384xf32>
    %cst_14 = arith.constant dense<0.000000e+00> : vector<8x384xf32>
    %42 = tpu.matmul %38, %3, %cst_14 {dimension_numbers = #tpu.dot_dimension_numbers<[1], [0], [0], [1], [0, 0, 1, 1], [], []>} : vector<8x128xf32>, vector<128x384xf32>, vector<8x384xf32> -> vector<8x384xf32>
    %43 = vector.extract_strided_slice %41 {offsets = [0, 0], sizes = [8, 128], strides = [1, 1]} : vector<8x384xf32> to vector<8x128xf32>
    %44 = vector.extract_strided_slice %42 {offsets = [0, 0], sizes = [8, 128], strides = [1, 1]} : vector<8x384xf32> to vector<8x128xf32>
    %45 = arith.addf %43, %44 : vector<8x128xf32>
    %46 = arith.negf %45 : vector<8x128xf32>
    %47 = math.exp %46 : vector<8x128xf32>
    %cst_15 = arith.constant 1.000000e+00 : f32
    %48 = vector.broadcast %cst_15 : f32 to vector<8x128xf32>
    %49 = arith.addf %48, %47 : vector<8x128xf32>
    %50 = arith.divf %48, %49 : vector<8x128xf32>
    %51 = vector.extract_strided_slice %41 {offsets = [0, 128], sizes = [8, 128], strides = [1, 1]} : vector<8x384xf32> to vector<8x128xf32>
    %52 = vector.extract_strided_slice %42 {offsets = [0, 128], sizes = [8, 128], strides = [1, 1]} : vector<8x384xf32> to vector<8x128xf32>
    %53 = arith.addf %51, %52 : vector<8x128xf32>
    %54 = arith.negf %53 : vector<8x128xf32>
    %55 = math.exp %54 : vector<8x128xf32>
    %cst_16 = arith.constant 1.000000e+00 : f32
    %56 = vector.broadcast %cst_16 : f32 to vector<8x128xf32>
    %57 = arith.addf %56, %55 : vector<8x128xf32>
    %58 = arith.divf %56, %57 : vector<8x128xf32>
    %59 = vector.extract_strided_slice %41 {offsets = [0, 256], sizes = [8, 128], strides = [1, 1]} : vector<8x384xf32> to vector<8x128xf32>
    %60 = vector.extract_strided_slice %42 {offsets = [0, 256], sizes = [8, 128], strides = [1, 1]} : vector<8x384xf32> to vector<8x128xf32>
    %61 = arith.addf %60, %6 : vector<8x128xf32>
    %62 = arith.mulf %50, %61 : vector<8x128xf32>
    %63 = arith.addf %59, %62 : vector<8x128xf32>
    %64 = math.tanh %63 : vector<8x128xf32>
    %cst_17 = arith.constant 1.000000e+00 : f32
    %65 = vector.broadcast %cst_17 : f32 to vector<8x128xf32>
    %66 = arith.subf %65, %58 : vector<8x128xf32>
    %67 = arith.mulf %66, %64 : vector<8x128xf32>
    %68 = arith.mulf %58, %38 : vector<8x128xf32>
    %69 = arith.addf %67, %68 : vector<8x128xf32>
    %c2_i32 = arith.constant 2 : i32
    %70 = arith.index_cast %c2_i32 : i32 to index
    %c0_18 = arith.constant 0 : index
    %c0_19 = arith.constant 0 : index
    %71 = vector.load %arg2[%70, %c0_18, %c0_19] : memref<8x8x384xf32, #tpu.memory_space<vmem>>, vector<1x8x384xf32>
    %72 = vector.shape_cast %71 : vector<1x8x384xf32> to vector<8x384xf32>
    %cst_20 = arith.constant dense<0.000000e+00> : vector<8x384xf32>
    %73 = tpu.matmul %69, %3, %cst_20 {dimension_numbers = #tpu.dot_dimension_numbers<[1], [0], [0], [1], [0, 0, 1, 1], [], []>} : vector<8x128xf32>, vector<128x384xf32>, vector<8x384xf32> -> vector<8x384xf32>
    %74 = vector.extract_strided_slice %72 {offsets = [0, 0], sizes = [8, 128], strides = [1, 1]} : vector<8x384xf32> to vector<8x128xf32>
    %75 = vector.extract_strided_slice %73 {offsets = [0, 0], sizes = [8, 128], strides = [1, 1]} : vector<8x384xf32> to vector<8x128xf32>
    %76 = arith.addf %74, %75 : vector<8x128xf32>
    %77 = arith.negf %76 : vector<8x128xf32>
    %78 = math.exp %77 : vector<8x128xf32>
    %cst_21 = arith.constant 1.000000e+00 : f32
    %79 = vector.broadcast %cst_21 : f32 to vector<8x128xf32>
    %80 = arith.addf %79, %78 : vector<8x128xf32>
    %81 = arith.divf %79, %80 : vector<8x128xf32>
    %82 = vector.extract_strided_slice %72 {offsets = [0, 128], sizes = [8, 128], strides = [1, 1]} : vector<8x384xf32> to vector<8x128xf32>
    %83 = vector.extract_strided_slice %73 {offsets = [0, 128], sizes = [8, 128], strides = [1, 1]} : vector<8x384xf32> to vector<8x128xf32>
    %84 = arith.addf %82, %83 : vector<8x128xf32>
    %85 = arith.negf %84 : vector<8x128xf32>
    %86 = math.exp %85 : vector<8x128xf32>
    %cst_22 = arith.constant 1.000000e+00 : f32
    %87 = vector.broadcast %cst_22 : f32 to vector<8x128xf32>
    %88 = arith.addf %87, %86 : vector<8x128xf32>
    %89 = arith.divf %87, %88 : vector<8x128xf32>
    %90 = vector.extract_strided_slice %72 {offsets = [0, 256], sizes = [8, 128], strides = [1, 1]} : vector<8x384xf32> to vector<8x128xf32>
    %91 = vector.extract_strided_slice %73 {offsets = [0, 256], sizes = [8, 128], strides = [1, 1]} : vector<8x384xf32> to vector<8x128xf32>
    %92 = arith.addf %91, %6 : vector<8x128xf32>
    %93 = arith.mulf %81, %92 : vector<8x128xf32>
    %94 = arith.addf %90, %93 : vector<8x128xf32>
    %95 = math.tanh %94 : vector<8x128xf32>
    %cst_23 = arith.constant 1.000000e+00 : f32
    %96 = vector.broadcast %cst_23 : f32 to vector<8x128xf32>
    %97 = arith.subf %96, %89 : vector<8x128xf32>
    %98 = arith.mulf %97, %95 : vector<8x128xf32>
    %99 = arith.mulf %89, %69 : vector<8x128xf32>
    %100 = arith.addf %98, %99 : vector<8x128xf32>
    %c3_i32 = arith.constant 3 : i32
    %101 = arith.index_cast %c3_i32 : i32 to index
    %c0_24 = arith.constant 0 : index
    %c0_25 = arith.constant 0 : index
    %102 = vector.load %arg2[%101, %c0_24, %c0_25] : memref<8x8x384xf32, #tpu.memory_space<vmem>>, vector<1x8x384xf32>
    %103 = vector.shape_cast %102 : vector<1x8x384xf32> to vector<8x384xf32>
    %cst_26 = arith.constant dense<0.000000e+00> : vector<8x384xf32>
    %104 = tpu.matmul %100, %3, %cst_26 {dimension_numbers = #tpu.dot_dimension_numbers<[1], [0], [0], [1], [0, 0, 1, 1], [], []>} : vector<8x128xf32>, vector<128x384xf32>, vector<8x384xf32> -> vector<8x384xf32>
    %105 = vector.extract_strided_slice %103 {offsets = [0, 0], sizes = [8, 128], strides = [1, 1]} : vector<8x384xf32> to vector<8x128xf32>
    %106 = vector.extract_strided_slice %104 {offsets = [0, 0], sizes = [8, 128], strides = [1, 1]} : vector<8x384xf32> to vector<8x128xf32>
    %107 = arith.addf %105, %106 : vector<8x128xf32>
    %108 = arith.negf %107 : vector<8x128xf32>
    %109 = math.exp %108 : vector<8x128xf32>
    %cst_27 = arith.constant 1.000000e+00 : f32
    %110 = vector.broadcast %cst_27 : f32 to vector<8x128xf32>
    %111 = arith.addf %110, %109 : vector<8x128xf32>
    %112 = arith.divf %110, %111 : vector<8x128xf32>
    %113 = vector.extract_strided_slice %103 {offsets = [0, 128], sizes = [8, 128], strides = [1, 1]} : vector<8x384xf32> to vector<8x128xf32>
    %114 = vector.extract_strided_slice %104 {offsets = [0, 128], sizes = [8, 128], strides = [1, 1]} : vector<8x384xf32> to vector<8x128xf32>
    %115 = arith.addf %113, %114 : vector<8x128xf32>
    %116 = arith.negf %115 : vector<8x128xf32>
    %117 = math.exp %116 : vector<8x128xf32>
    %cst_28 = arith.constant 1.000000e+00 : f32
    %118 = vector.broadcast %cst_28 : f32 to vector<8x128xf32>
    %119 = arith.addf %118, %117 : vector<8x128xf32>
    %120 = arith.divf %118, %119 : vector<8x128xf32>
    %121 = vector.extract_strided_slice %103 {offsets = [0, 256], sizes = [8, 128], strides = [1, 1]} : vector<8x384xf32> to vector<8x128xf32>
    %122 = vector.extract_strided_slice %104 {offsets = [0, 256], sizes = [8, 128], strides = [1, 1]} : vector<8x384xf32> to vector<8x128xf32>
    %123 = arith.addf %122, %6 : vector<8x128xf32>
    %124 = arith.mulf %112, %123 : vector<8x128xf32>
    %125 = arith.addf %121, %124 : vector<8x128xf32>
    %126 = math.tanh %125 : vector<8x128xf32>
    %cst_29 = arith.constant 1.000000e+00 : f32
    %127 = vector.broadcast %cst_29 : f32 to vector<8x128xf32>
    %128 = arith.subf %127, %120 : vector<8x128xf32>
    %129 = arith.mulf %128, %126 : vector<8x128xf32>
    %130 = arith.mulf %120, %100 : vector<8x128xf32>
    %131 = arith.addf %129, %130 : vector<8x128xf32>
    %c4_i32 = arith.constant 4 : i32
    %132 = arith.index_cast %c4_i32 : i32 to index
    %c0_30 = arith.constant 0 : index
    %c0_31 = arith.constant 0 : index
    %133 = vector.load %arg2[%132, %c0_30, %c0_31] : memref<8x8x384xf32, #tpu.memory_space<vmem>>, vector<1x8x384xf32>
    %134 = vector.shape_cast %133 : vector<1x8x384xf32> to vector<8x384xf32>
    %cst_32 = arith.constant dense<0.000000e+00> : vector<8x384xf32>
    %135 = tpu.matmul %131, %3, %cst_32 {dimension_numbers = #tpu.dot_dimension_numbers<[1], [0], [0], [1], [0, 0, 1, 1], [], []>} : vector<8x128xf32>, vector<128x384xf32>, vector<8x384xf32> -> vector<8x384xf32>
    %136 = vector.extract_strided_slice %134 {offsets = [0, 0], sizes = [8, 128], strides = [1, 1]} : vector<8x384xf32> to vector<8x128xf32>
    %137 = vector.extract_strided_slice %135 {offsets = [0, 0], sizes = [8, 128], strides = [1, 1]} : vector<8x384xf32> to vector<8x128xf32>
    %138 = arith.addf %136, %137 : vector<8x128xf32>
    %139 = arith.negf %138 : vector<8x128xf32>
    %140 = math.exp %139 : vector<8x128xf32>
    %cst_33 = arith.constant 1.000000e+00 : f32
    %141 = vector.broadcast %cst_33 : f32 to vector<8x128xf32>
    %142 = arith.addf %141, %140 : vector<8x128xf32>
    %143 = arith.divf %141, %142 : vector<8x128xf32>
    %144 = vector.extract_strided_slice %134 {offsets = [0, 128], sizes = [8, 128], strides = [1, 1]} : vector<8x384xf32> to vector<8x128xf32>
    %145 = vector.extract_strided_slice %135 {offsets = [0, 128], sizes = [8, 128], strides = [1, 1]} : vector<8x384xf32> to vector<8x128xf32>
    %146 = arith.addf %144, %145 : vector<8x128xf32>
    %147 = arith.negf %146 : vector<8x128xf32>
    %148 = math.exp %147 : vector<8x128xf32>
    %cst_34 = arith.constant 1.000000e+00 : f32
    %149 = vector.broadcast %cst_34 : f32 to vector<8x128xf32>
    %150 = arith.addf %149, %148 : vector<8x128xf32>
    %151 = arith.divf %149, %150 : vector<8x128xf32>
    %152 = vector.extract_strided_slice %134 {offsets = [0, 256], sizes = [8, 128], strides = [1, 1]} : vector<8x384xf32> to vector<8x128xf32>
    %153 = vector.extract_strided_slice %135 {offsets = [0, 256], sizes = [8, 128], strides = [1, 1]} : vector<8x384xf32> to vector<8x128xf32>
    %154 = arith.addf %153, %6 : vector<8x128xf32>
    %155 = arith.mulf %143, %154 : vector<8x128xf32>
    %156 = arith.addf %152, %155 : vector<8x128xf32>
    %157 = math.tanh %156 : vector<8x128xf32>
    %cst_35 = arith.constant 1.000000e+00 : f32
    %158 = vector.broadcast %cst_35 : f32 to vector<8x128xf32>
    %159 = arith.subf %158, %151 : vector<8x128xf32>
    %160 = arith.mulf %159, %157 : vector<8x128xf32>
    %161 = arith.mulf %151, %131 : vector<8x128xf32>
    %162 = arith.addf %160, %161 : vector<8x128xf32>
    %c5_i32 = arith.constant 5 : i32
    %163 = arith.index_cast %c5_i32 : i32 to index
    %c0_36 = arith.constant 0 : index
    %c0_37 = arith.constant 0 : index
    %164 = vector.load %arg2[%163, %c0_36, %c0_37] : memref<8x8x384xf32, #tpu.memory_space<vmem>>, vector<1x8x384xf32>
    %165 = vector.shape_cast %164 : vector<1x8x384xf32> to vector<8x384xf32>
    %cst_38 = arith.constant dense<0.000000e+00> : vector<8x384xf32>
    %166 = tpu.matmul %162, %3, %cst_38 {dimension_numbers = #tpu.dot_dimension_numbers<[1], [0], [0], [1], [0, 0, 1, 1], [], []>} : vector<8x128xf32>, vector<128x384xf32>, vector<8x384xf32> -> vector<8x384xf32>
    %167 = vector.extract_strided_slice %165 {offsets = [0, 0], sizes = [8, 128], strides = [1, 1]} : vector<8x384xf32> to vector<8x128xf32>
    %168 = vector.extract_strided_slice %166 {offsets = [0, 0], sizes = [8, 128], strides = [1, 1]} : vector<8x384xf32> to vector<8x128xf32>
    %169 = arith.addf %167, %168 : vector<8x128xf32>
    %170 = arith.negf %169 : vector<8x128xf32>
    %171 = math.exp %170 : vector<8x128xf32>
    %cst_39 = arith.constant 1.000000e+00 : f32
    %172 = vector.broadcast %cst_39 : f32 to vector<8x128xf32>
    %173 = arith.addf %172, %171 : vector<8x128xf32>
    %174 = arith.divf %172, %173 : vector<8x128xf32>
    %175 = vector.extract_strided_slice %165 {offsets = [0, 128], sizes = [8, 128], strides = [1, 1]} : vector<8x384xf32> to vector<8x128xf32>
    %176 = vector.extract_strided_slice %166 {offsets = [0, 128], sizes = [8, 128], strides = [1, 1]} : vector<8x384xf32> to vector<8x128xf32>
    %177 = arith.addf %175, %176 : vector<8x128xf32>
    %178 = arith.negf %177 : vector<8x128xf32>
    %179 = math.exp %178 : vector<8x128xf32>
    %cst_40 = arith.constant 1.000000e+00 : f32
    %180 = vector.broadcast %cst_40 : f32 to vector<8x128xf32>
    %181 = arith.addf %180, %179 : vector<8x128xf32>
    %182 = arith.divf %180, %181 : vector<8x128xf32>
    %183 = vector.extract_strided_slice %165 {offsets = [0, 256], sizes = [8, 128], strides = [1, 1]} : vector<8x384xf32> to vector<8x128xf32>
    %184 = vector.extract_strided_slice %166 {offsets = [0, 256], sizes = [8, 128], strides = [1, 1]} : vector<8x384xf32> to vector<8x128xf32>
    %185 = arith.addf %184, %6 : vector<8x128xf32>
    %186 = arith.mulf %174, %185 : vector<8x128xf32>
    %187 = arith.addf %183, %186 : vector<8x128xf32>
    %188 = math.tanh %187 : vector<8x128xf32>
    %cst_41 = arith.constant 1.000000e+00 : f32
    %189 = vector.broadcast %cst_41 : f32 to vector<8x128xf32>
    %190 = arith.subf %189, %182 : vector<8x128xf32>
    %191 = arith.mulf %190, %188 : vector<8x128xf32>
    %192 = arith.mulf %182, %162 : vector<8x128xf32>
    %193 = arith.addf %191, %192 : vector<8x128xf32>
    %c6_i32 = arith.constant 6 : i32
    %194 = arith.index_cast %c6_i32 : i32 to index
    %c0_42 = arith.constant 0 : index
    %c0_43 = arith.constant 0 : index
    %195 = vector.load %arg2[%194, %c0_42, %c0_43] : memref<8x8x384xf32, #tpu.memory_space<vmem>>, vector<1x8x384xf32>
    %196 = vector.shape_cast %195 : vector<1x8x384xf32> to vector<8x384xf32>
    %cst_44 = arith.constant dense<0.000000e+00> : vector<8x384xf32>
    %197 = tpu.matmul %193, %3, %cst_44 {dimension_numbers = #tpu.dot_dimension_numbers<[1], [0], [0], [1], [0, 0, 1, 1], [], []>} : vector<8x128xf32>, vector<128x384xf32>, vector<8x384xf32> -> vector<8x384xf32>
    %198 = vector.extract_strided_slice %196 {offsets = [0, 0], sizes = [8, 128], strides = [1, 1]} : vector<8x384xf32> to vector<8x128xf32>
    %199 = vector.extract_strided_slice %197 {offsets = [0, 0], sizes = [8, 128], strides = [1, 1]} : vector<8x384xf32> to vector<8x128xf32>
    %200 = arith.addf %198, %199 : vector<8x128xf32>
    %201 = arith.negf %200 : vector<8x128xf32>
    %202 = math.exp %201 : vector<8x128xf32>
    %cst_45 = arith.constant 1.000000e+00 : f32
    %203 = vector.broadcast %cst_45 : f32 to vector<8x128xf32>
    %204 = arith.addf %203, %202 : vector<8x128xf32>
    %205 = arith.divf %203, %204 : vector<8x128xf32>
    %206 = vector.extract_strided_slice %196 {offsets = [0, 128], sizes = [8, 128], strides = [1, 1]} : vector<8x384xf32> to vector<8x128xf32>
    %207 = vector.extract_strided_slice %197 {offsets = [0, 128], sizes = [8, 128], strides = [1, 1]} : vector<8x384xf32> to vector<8x128xf32>
    %208 = arith.addf %206, %207 : vector<8x128xf32>
    %209 = arith.negf %208 : vector<8x128xf32>
    %210 = math.exp %209 : vector<8x128xf32>
    %cst_46 = arith.constant 1.000000e+00 : f32
    %211 = vector.broadcast %cst_46 : f32 to vector<8x128xf32>
    %212 = arith.addf %211, %210 : vector<8x128xf32>
    %213 = arith.divf %211, %212 : vector<8x128xf32>
    %214 = vector.extract_strided_slice %196 {offsets = [0, 256], sizes = [8, 128], strides = [1, 1]} : vector<8x384xf32> to vector<8x128xf32>
    %215 = vector.extract_strided_slice %197 {offsets = [0, 256], sizes = [8, 128], strides = [1, 1]} : vector<8x384xf32> to vector<8x128xf32>
    %216 = arith.addf %215, %6 : vector<8x128xf32>
    %217 = arith.mulf %205, %216 : vector<8x128xf32>
    %218 = arith.addf %214, %217 : vector<8x128xf32>
    %219 = math.tanh %218 : vector<8x128xf32>
    %cst_47 = arith.constant 1.000000e+00 : f32
    %220 = vector.broadcast %cst_47 : f32 to vector<8x128xf32>
    %221 = arith.subf %220, %213 : vector<8x128xf32>
    %222 = arith.mulf %221, %219 : vector<8x128xf32>
    %223 = arith.mulf %213, %193 : vector<8x128xf32>
    %224 = arith.addf %222, %223 : vector<8x128xf32>
    %c7_i32 = arith.constant 7 : i32
    %225 = arith.index_cast %c7_i32 : i32 to index
    %c0_48 = arith.constant 0 : index
    %c0_49 = arith.constant 0 : index
    %226 = vector.load %arg2[%225, %c0_48, %c0_49] : memref<8x8x384xf32, #tpu.memory_space<vmem>>, vector<1x8x384xf32>
    %227 = vector.shape_cast %226 : vector<1x8x384xf32> to vector<8x384xf32>
    %cst_50 = arith.constant dense<0.000000e+00> : vector<8x384xf32>
    %228 = tpu.matmul %224, %3, %cst_50 {dimension_numbers = #tpu.dot_dimension_numbers<[1], [0], [0], [1], [0, 0, 1, 1], [], []>} : vector<8x128xf32>, vector<128x384xf32>, vector<8x384xf32> -> vector<8x384xf32>
    %229 = vector.extract_strided_slice %227 {offsets = [0, 0], sizes = [8, 128], strides = [1, 1]} : vector<8x384xf32> to vector<8x128xf32>
    %230 = vector.extract_strided_slice %228 {offsets = [0, 0], sizes = [8, 128], strides = [1, 1]} : vector<8x384xf32> to vector<8x128xf32>
    %231 = arith.addf %229, %230 : vector<8x128xf32>
    %232 = arith.negf %231 : vector<8x128xf32>
    %233 = math.exp %232 : vector<8x128xf32>
    %cst_51 = arith.constant 1.000000e+00 : f32
    %234 = vector.broadcast %cst_51 : f32 to vector<8x128xf32>
    %235 = arith.addf %234, %233 : vector<8x128xf32>
    %236 = arith.divf %234, %235 : vector<8x128xf32>
    %237 = vector.extract_strided_slice %227 {offsets = [0, 128], sizes = [8, 128], strides = [1, 1]} : vector<8x384xf32> to vector<8x128xf32>
    %238 = vector.extract_strided_slice %228 {offsets = [0, 128], sizes = [8, 128], strides = [1, 1]} : vector<8x384xf32> to vector<8x128xf32>
    %239 = arith.addf %237, %238 : vector<8x128xf32>
    %240 = arith.negf %239 : vector<8x128xf32>
    %241 = math.exp %240 : vector<8x128xf32>
    %cst_52 = arith.constant 1.000000e+00 : f32
    %242 = vector.broadcast %cst_52 : f32 to vector<8x128xf32>
    %243 = arith.addf %242, %241 : vector<8x128xf32>
    %244 = arith.divf %242, %243 : vector<8x128xf32>
    %245 = vector.extract_strided_slice %227 {offsets = [0, 256], sizes = [8, 128], strides = [1, 1]} : vector<8x384xf32> to vector<8x128xf32>
    %246 = vector.extract_strided_slice %228 {offsets = [0, 256], sizes = [8, 128], strides = [1, 1]} : vector<8x384xf32> to vector<8x128xf32>
    %247 = arith.addf %246, %6 : vector<8x128xf32>
    %248 = arith.mulf %236, %247 : vector<8x128xf32>
    %249 = arith.addf %245, %248 : vector<8x128xf32>
    %250 = math.tanh %249 : vector<8x128xf32>
    %cst_53 = arith.constant 1.000000e+00 : f32
    %251 = vector.broadcast %cst_53 : f32 to vector<8x128xf32>
    %252 = arith.subf %251, %244 : vector<8x128xf32>
    %253 = arith.mulf %252, %250 : vector<8x128xf32>
    %254 = arith.mulf %244, %224 : vector<8x128xf32>
    %255 = arith.addf %253, %254 : vector<8x128xf32>
    %c8_i32 = arith.constant 8 : i32
    %c0_54 = arith.constant 0 : index
    %c0_55 = arith.constant 0 : index
    %256 = vector.load %arg5[%c0_54, %c0_55] : memref<8x128xf32, #tpu.memory_space<vmem>>, vector<8x128xf32>
    tpu.vector_store %arg5[%c0_54, %c0_55], %255 {strides = array<i32>} : memref<8x128xf32, #tpu.memory_space<vmem>>, vector<8x128xf32>,
    return
  }
  func.func @transform_0(%arg0: i32, %arg1: i32) -> (i32, i32, i32) {
    %c0_i32 = arith.constant 0 : i32
    %c0_i32_0 = arith.constant 0 : i32
    return %arg1, %arg0, %c0_i32 : i32, i32, i32
  }
  func.func @transform_1(%arg0: i32, %arg1: i32) -> (i32, i32) {
    %c0_i32 = arith.constant 0 : i32
    %c0_i32_0 = arith.constant 0 : i32
    %c0_i32_1 = arith.constant 0 : i32
    return %c0_i32, %c0_i32_0 : i32, i32
  }
  func.func @transform_2(%arg0: i32, %arg1: i32) -> (i32, i32) {
    %c0_i32 = arith.constant 0 : i32
    %c0_i32_0 = arith.constant 0 : i32
    %c0_i32_1 = arith.constant 0 : i32
    return %c0_i32, %c0_i32_0 : i32, i32
  }
  func.func @transform_3(%arg0: i32, %arg1: i32) -> (i32, i32) {
    %c0_i32 = arith.constant 0 : i32
    %c0_i32_0 = arith.constant 0 : i32
    return %arg0, %c0_i32 : i32, i32
  }
}

module attributes {stable_mosaic.version = 11 : i64} {
  func.func @_gru_recurrent_kernel(%arg0: i32, %arg1: i32, %arg2: memref<8x8x384xf32, #tpu.memory_space<vmem>>, %arg3: memref<128x384xf32, #tpu.memory_space<vmem>>, %arg4: memref<1x128xf32, #tpu.memory_space<vmem>>, %arg5: memref<8x128xf32, #tpu.memory_space<vmem>>) attributes {dimension_semantics = [#tpu.dimension_semantics<parallel>, #tpu.dimension_semantics<arbitrary>], iteration_bounds = array<i64: 1, 1>, scalar_prefetch = 0 : i64, scratch_operands = 0 : i64, tpu.core_type = #tpu.core_type<tc>, window_params = [{transform_indices = @transform_0, window_bounds = array<i64: 8, 8, 384>}, {pipeline_mode = #tpu.pipeline_mode<synchronous>, transform_indices = @transform_1, window_bounds = array<i64: 128, 384>}, {pipeline_mode = #tpu.pipeline_mode<synchronous>, transform_indices = @transform_2, window_bounds = array<i64: 1, 128>}, {transform_indices = @transform_3, window_bounds = array<i64: 8, 128>}]} {
    %c0_i32 = arith.constant 0 : i32
    %0 = arith.cmpi eq, %arg1, %c0_i32 : i32
    %1 = arith.extui %0 : i1 to i32
    %c0_i32_0 = arith.constant 0 : i32
    %2 = arith.cmpi ne, %1, %c0_i32_0 : i32
    scf.if %2 {
      %cst_56 = arith.constant 0.000000e+00 : f32
      %257 = vector.broadcast %cst_56 : f32 to vector<8x128xf32>
      %c0_57 = arith.constant 0 : index
      %c0_58 = arith.constant 0 : index
      %258 = vector.load %arg5[%c0_57, %c0_58] : memref<8x128xf32, #tpu.memory_space<vmem>>, vector<8x128xf32>
      tpu.vector_store %arg5[%c0_57, %c0_58], %257 {strides = array<i32>} : memref<8x128xf32, #tpu.memory_space<vmem>>, vector<8x128xf32>,
    } else {
    }
    %c0 = arith.constant 0 : index
    %c0_1 = arith.constant 0 : index
    %3 = vector.load %arg3[%c0, %c0_1] : memref<128x384xf32, #tpu.memory_space<vmem>>, vector<128x384xf32>
    %c0_2 = arith.constant 0 : index
    %c0_3 = arith.constant 0 : index
    %4 = vector.load %arg4[%c0_2, %c0_3] : memref<1x128xf32, #tpu.memory_space<vmem>>, vector<1x128xf32>
    %5 = vector.shape_cast %4 : vector<1x128xf32> to vector<1x128xf32>
    %6 = vector.broadcast %5 : vector<1x128xf32> to vector<8x128xf32>
    %c0_4 = arith.constant 0 : index
    %c0_5 = arith.constant 0 : index
    %7 = vector.load %arg5[%c0_4, %c0_5] : memref<8x128xf32, #tpu.memory_space<vmem>>, vector<8x128xf32>
    %c0_i32_6 = arith.constant 0 : i32
    %8 = arith.index_cast %c0_i32_6 : i32 to index
    %c0_7 = arith.constant 0 : index
    %c0_8 = arith.constant 0 : index
    %9 = vector.load %arg2[%8, %c0_7, %c0_8] : memref<8x8x384xf32, #tpu.memory_space<vmem>>, vector<1x8x384xf32>
    %10 = vector.shape_cast %9 : vector<1x8x384xf32> to vector<8x384xf32>
    %cst = arith.constant dense<0.000000e+00> : vector<8x384xf32>
    %11 = tpu.matmul %7, %3, %cst {dimension_numbers = #tpu.dot_dimension_numbers<[1], [0], [0], [1], [0, 0, 1, 1], [], []>} : vector<8x128xf32>, vector<128x384xf32>, vector<8x384xf32> -> vector<8x384xf32>
    %12 = vector.extract_strided_slice %10 {offsets = [0, 0], sizes = [8, 128], strides = [1, 1]} : vector<8x384xf32> to vector<8x128xf32>
    %13 = vector.extract_strided_slice %11 {offsets = [0, 0], sizes = [8, 128], strides = [1, 1]} : vector<8x384xf32> to vector<8x128xf32>
    %14 = arith.addf %12, %13 : vector<8x128xf32>
    %15 = arith.negf %14 : vector<8x128xf32>
    %16 = math.exp %15 : vector<8x128xf32>
    %cst_9 = arith.constant 1.000000e+00 : f32
    %17 = vector.broadcast %cst_9 : f32 to vector<8x128xf32>
    %18 = arith.addf %17, %16 : vector<8x128xf32>
    %19 = arith.divf %17, %18 : vector<8x128xf32>
    %20 = vector.extract_strided_slice %10 {offsets = [0, 128], sizes = [8, 128], strides = [1, 1]} : vector<8x384xf32> to vector<8x128xf32>
    %21 = vector.extract_strided_slice %11 {offsets = [0, 128], sizes = [8, 128], strides = [1, 1]} : vector<8x384xf32> to vector<8x128xf32>
    %22 = arith.addf %20, %21 : vector<8x128xf32>
    %23 = arith.negf %22 : vector<8x128xf32>
    %24 = math.exp %23 : vector<8x128xf32>
    %cst_10 = arith.constant 1.000000e+00 : f32
    %25 = vector.broadcast %cst_10 : f32 to vector<8x128xf32>
    %26 = arith.addf %25, %24 : vector<8x128xf32>
    %27 = arith.divf %25, %26 : vector<8x128xf32>
    %28 = vector.extract_strided_slice %10 {offsets = [0, 256], sizes = [8, 128], strides = [1, 1]} : vector<8x384xf32> to vector<8x128xf32>
    %29 = vector.extract_strided_slice %11 {offsets = [0, 256], sizes = [8, 128], strides = [1, 1]} : vector<8x384xf32> to vector<8x128xf32>
    %30 = arith.addf %29, %6 : vector<8x128xf32>
    %31 = arith.mulf %19, %30 : vector<8x128xf32>
    %32 = arith.addf %28, %31 : vector<8x128xf32>
    %33 = math.tanh %32 : vector<8x128xf32>
    %cst_11 = arith.constant 1.000000e+00 : f32
    %34 = vector.broadcast %cst_11 : f32 to vector<8x128xf32>
    %35 = arith.subf %34, %27 : vector<8x128xf32>
    %36 = arith.mulf %35, %33 : vector<8x128xf32>
    %37 = arith.mulf %27, %7 : vector<8x128xf32>
    %38 = arith.addf %36, %37 : vector<8x128xf32>
    %c1_i32 = arith.constant 1 : i32
    %39 = arith.index_cast %c1_i32 : i32 to index
    %c0_12 = arith.constant 0 : index
    %c0_13 = arith.constant 0 : index
    %40 = vector.load %arg2[%39, %c0_12, %c0_13] : memref<8x8x384xf32, #tpu.memory_space<vmem>>, vector<1x8x384xf32>
    %41 = vector.shape_cast %40 : vector<1x8x384xf32> to vector<8x384xf32>
    %cst_14 = arith.constant dense<0.000000e+00> : vector<8x384xf32>
    %42 = tpu.matmul %38, %3, %cst_14 {dimension_numbers = #tpu.dot_dimension_numbers<[1], [0], [0], [1], [0, 0, 1, 1], [], []>} : vector<8x128xf32>, vector<128x384xf32>, vector<8x384xf32> -> vector<8x384xf32>
    %43 = vector.extract_strided_slice %41 {offsets = [0, 0], sizes = [8, 128], strides = [1, 1]} : vector<8x384xf32> to vector<8x128xf32>
    %44 = vector.extract_strided_slice %42 {offsets = [0, 0], sizes = [8, 128], strides = [1, 1]} : vector<8x384xf32> to vector<8x128xf32>
    %45 = arith.addf %43, %44 : vector<8x128xf32>
    %46 = arith.negf %45 : vector<8x128xf32>
    %47 = math.exp %46 : vector<8x128xf32>
    %cst_15 = arith.constant 1.000000e+00 : f32
    %48 = vector.broadcast %cst_15 : f32 to vector<8x128xf32>
    %49 = arith.addf %48, %47 : vector<8x128xf32>
    %50 = arith.divf %48, %49 : vector<8x128xf32>
    %51 = vector.extract_strided_slice %41 {offsets = [0, 128], sizes = [8, 128], strides = [1, 1]} : vector<8x384xf32> to vector<8x128xf32>
    %52 = vector.extract_strided_slice %42 {offsets = [0, 128], sizes = [8, 128], strides = [1, 1]} : vector<8x384xf32> to vector<8x128xf32>
    %53 = arith.addf %51, %52 : vector<8x128xf32>
    %54 = arith.negf %53 : vector<8x128xf32>
    %55 = math.exp %54 : vector<8x128xf32>
    %cst_16 = arith.constant 1.000000e+00 : f32
    %56 = vector.broadcast %cst_16 : f32 to vector<8x128xf32>
    %57 = arith.addf %56, %55 : vector<8x128xf32>
    %58 = arith.divf %56, %57 : vector<8x128xf32>
    %59 = vector.extract_strided_slice %41 {offsets = [0, 256], sizes = [8, 128], strides = [1, 1]} : vector<8x384xf32> to vector<8x128xf32>
    %60 = vector.extract_strided_slice %42 {offsets = [0, 256], sizes = [8, 128], strides = [1, 1]} : vector<8x384xf32> to vector<8x128xf32>
    %61 = arith.addf %60, %6 : vector<8x128xf32>
    %62 = arith.mulf %50, %61 : vector<8x128xf32>
    %63 = arith.addf %59, %62 : vector<8x128xf32>
    %64 = math.tanh %63 : vector<8x128xf32>
    %cst_17 = arith.constant 1.000000e+00 : f32
    %65 = vector.broadcast %cst_17 : f32 to vector<8x128xf32>
    %66 = arith.subf %65, %58 : vector<8x128xf32>
    %67 = arith.mulf %66, %64 : vector<8x128xf32>
    %68 = arith.mulf %58, %38 : vector<8x128xf32>
    %69 = arith.addf %67, %68 : vector<8x128xf32>
    %c2_i32 = arith.constant 2 : i32
    %70 = arith.index_cast %c2_i32 : i32 to index
    %c0_18 = arith.constant 0 : index
    %c0_19 = arith.constant 0 : index
    %71 = vector.load %arg2[%70, %c0_18, %c0_19] : memref<8x8x384xf32, #tpu.memory_space<vmem>>, vector<1x8x384xf32>
    %72 = vector.shape_cast %71 : vector<1x8x384xf32> to vector<8x384xf32>
    %cst_20 = arith.constant dense<0.000000e+00> : vector<8x384xf32>
    %73 = tpu.matmul %69, %3, %cst_20 {dimension_numbers = #tpu.dot_dimension_numbers<[1], [0], [0], [1], [0, 0, 1, 1], [], []>} : vector<8x128xf32>, vector<128x384xf32>, vector<8x384xf32> -> vector<8x384xf32>
    %74 = vector.extract_strided_slice %72 {offsets = [0, 0], sizes = [8, 128], strides = [1, 1]} : vector<8x384xf32> to vector<8x128xf32>
    %75 = vector.extract_strided_slice %73 {offsets = [0, 0], sizes = [8, 128], strides = [1, 1]} : vector<8x384xf32> to vector<8x128xf32>
    %76 = arith.addf %74, %75 : vector<8x128xf32>
    %77 = arith.negf %76 : vector<8x128xf32>
    %78 = math.exp %77 : vector<8x128xf32>
    %cst_21 = arith.constant 1.000000e+00 : f32
    %79 = vector.broadcast %cst_21 : f32 to vector<8x128xf32>
    %80 = arith.addf %79, %78 : vector<8x128xf32>
    %81 = arith.divf %79, %80 : vector<8x128xf32>
    %82 = vector.extract_strided_slice %72 {offsets = [0, 128], sizes = [8, 128], strides = [1, 1]} : vector<8x384xf32> to vector<8x128xf32>
    %83 = vector.extract_strided_slice %73 {offsets = [0, 128], sizes = [8, 128], strides = [1, 1]} : vector<8x384xf32> to vector<8x128xf32>
    %84 = arith.addf %82, %83 : vector<8x128xf32>
    %85 = arith.negf %84 : vector<8x128xf32>
    %86 = math.exp %85 : vector<8x128xf32>
    %cst_22 = arith.constant 1.000000e+00 : f32
    %87 = vector.broadcast %cst_22 : f32 to vector<8x128xf32>
    %88 = arith.addf %87, %86 : vector<8x128xf32>
    %89 = arith.divf %87, %88 : vector<8x128xf32>
    %90 = vector.extract_strided_slice %72 {offsets = [0, 256], sizes = [8, 128], strides = [1, 1]} : vector<8x384xf32> to vector<8x128xf32>
    %91 = vector.extract_strided_slice %73 {offsets = [0, 256], sizes = [8, 128], strides = [1, 1]} : vector<8x384xf32> to vector<8x128xf32>
    %92 = arith.addf %91, %6 : vector<8x128xf32>
    %93 = arith.mulf %81, %92 : vector<8x128xf32>
    %94 = arith.addf %90, %93 : vector<8x128xf32>
    %95 = math.tanh %94 : vector<8x128xf32>
    %cst_23 = arith.constant 1.000000e+00 : f32
    %96 = vector.broadcast %cst_23 : f32 to vector<8x128xf32>
    %97 = arith.subf %96, %89 : vector<8x128xf32>
    %98 = arith.mulf %97, %95 : vector<8x128xf32>
    %99 = arith.mulf %89, %69 : vector<8x128xf32>
    %100 = arith.addf %98, %99 : vector<8x128xf32>
    %c3_i32 = arith.constant 3 : i32
    %101 = arith.index_cast %c3_i32 : i32 to index
    %c0_24 = arith.constant 0 : index
    %c0_25 = arith.constant 0 : index
    %102 = vector.load %arg2[%101, %c0_24, %c0_25] : memref<8x8x384xf32, #tpu.memory_space<vmem>>, vector<1x8x384xf32>
    %103 = vector.shape_cast %102 : vector<1x8x384xf32> to vector<8x384xf32>
    %cst_26 = arith.constant dense<0.000000e+00> : vector<8x384xf32>
    %104 = tpu.matmul %100, %3, %cst_26 {dimension_numbers = #tpu.dot_dimension_numbers<[1], [0], [0], [1], [0, 0, 1, 1], [], []>} : vector<8x128xf32>, vector<128x384xf32>, vector<8x384xf32> -> vector<8x384xf32>
    %105 = vector.extract_strided_slice %103 {offsets = [0, 0], sizes = [8, 128], strides = [1, 1]} : vector<8x384xf32> to vector<8x128xf32>
    %106 = vector.extract_strided_slice %104 {offsets = [0, 0], sizes = [8, 128], strides = [1, 1]} : vector<8x384xf32> to vector<8x128xf32>
    %107 = arith.addf %105, %106 : vector<8x128xf32>
    %108 = arith.negf %107 : vector<8x128xf32>
    %109 = math.exp %108 : vector<8x128xf32>
    %cst_27 = arith.constant 1.000000e+00 : f32
    %110 = vector.broadcast %cst_27 : f32 to vector<8x128xf32>
    %111 = arith.addf %110, %109 : vector<8x128xf32>
    %112 = arith.divf %110, %111 : vector<8x128xf32>
    %113 = vector.extract_strided_slice %103 {offsets = [0, 128], sizes = [8, 128], strides = [1, 1]} : vector<8x384xf32> to vector<8x128xf32>
    %114 = vector.extract_strided_slice %104 {offsets = [0, 128], sizes = [8, 128], strides = [1, 1]} : vector<8x384xf32> to vector<8x128xf32>
    %115 = arith.addf %113, %114 : vector<8x128xf32>
    %116 = arith.negf %115 : vector<8x128xf32>
    %117 = math.exp %116 : vector<8x128xf32>
    %cst_28 = arith.constant 1.000000e+00 : f32
    %118 = vector.broadcast %cst_28 : f32 to vector<8x128xf32>
    %119 = arith.addf %118, %117 : vector<8x128xf32>
    %120 = arith.divf %118, %119 : vector<8x128xf32>
    %121 = vector.extract_strided_slice %103 {offsets = [0, 256], sizes = [8, 128], strides = [1, 1]} : vector<8x384xf32> to vector<8x128xf32>
    %122 = vector.extract_strided_slice %104 {offsets = [0, 256], sizes = [8, 128], strides = [1, 1]} : vector<8x384xf32> to vector<8x128xf32>
    %123 = arith.addf %122, %6 : vector<8x128xf32>
    %124 = arith.mulf %112, %123 : vector<8x128xf32>
    %125 = arith.addf %121, %124 : vector<8x128xf32>
    %126 = math.tanh %125 : vector<8x128xf32>
    %cst_29 = arith.constant 1.000000e+00 : f32
    %127 = vector.broadcast %cst_29 : f32 to vector<8x128xf32>
    %128 = arith.subf %127, %120 : vector<8x128xf32>
    %129 = arith.mulf %128, %126 : vector<8x128xf32>
    %130 = arith.mulf %120, %100 : vector<8x128xf32>
    %131 = arith.addf %129, %130 : vector<8x128xf32>
    %c4_i32 = arith.constant 4 : i32
    %132 = arith.index_cast %c4_i32 : i32 to index
    %c0_30 = arith.constant 0 : index
    %c0_31 = arith.constant 0 : index
    %133 = vector.load %arg2[%132, %c0_30, %c0_31] : memref<8x8x384xf32, #tpu.memory_space<vmem>>, vector<1x8x384xf32>
    %134 = vector.shape_cast %133 : vector<1x8x384xf32> to vector<8x384xf32>
    %cst_32 = arith.constant dense<0.000000e+00> : vector<8x384xf32>
    %135 = tpu.matmul %131, %3, %cst_32 {dimension_numbers = #tpu.dot_dimension_numbers<[1], [0], [0], [1], [0, 0, 1, 1], [], []>} : vector<8x128xf32>, vector<128x384xf32>, vector<8x384xf32> -> vector<8x384xf32>
    %136 = vector.extract_strided_slice %134 {offsets = [0, 0], sizes = [8, 128], strides = [1, 1]} : vector<8x384xf32> to vector<8x128xf32>
    %137 = vector.extract_strided_slice %135 {offsets = [0, 0], sizes = [8, 128], strides = [1, 1]} : vector<8x384xf32> to vector<8x128xf32>
    %138 = arith.addf %136, %137 : vector<8x128xf32>
    %139 = arith.negf %138 : vector<8x128xf32>
    %140 = math.exp %139 : vector<8x128xf32>
    %cst_33 = arith.constant 1.000000e+00 : f32
    %141 = vector.broadcast %cst_33 : f32 to vector<8x128xf32>
    %142 = arith.addf %141, %140 : vector<8x128xf32>
    %143 = arith.divf %141, %142 : vector<8x128xf32>
    %144 = vector.extract_strided_slice %134 {offsets = [0, 128], sizes = [8, 128], strides = [1, 1]} : vector<8x384xf32> to vector<8x128xf32>
    %145 = vector.extract_strided_slice %135 {offsets = [0, 128], sizes = [8, 128], strides = [1, 1]} : vector<8x384xf32> to vector<8x128xf32>
    %146 = arith.addf %144, %145 : vector<8x128xf32>
    %147 = arith.negf %146 : vector<8x128xf32>
    %148 = math.exp %147 : vector<8x128xf32>
    %cst_34 = arith.constant 1.000000e+00 : f32
    %149 = vector.broadcast %cst_34 : f32 to vector<8x128xf32>
    %150 = arith.addf %149, %148 : vector<8x128xf32>
    %151 = arith.divf %149, %150 : vector<8x128xf32>
    %152 = vector.extract_strided_slice %134 {offsets = [0, 256], sizes = [8, 128], strides = [1, 1]} : vector<8x384xf32> to vector<8x128xf32>
    %153 = vector.extract_strided_slice %135 {offsets = [0, 256], sizes = [8, 128], strides = [1, 1]} : vector<8x384xf32> to vector<8x128xf32>
    %154 = arith.addf %153, %6 : vector<8x128xf32>
    %155 = arith.mulf %143, %154 : vector<8x128xf32>
    %156 = arith.addf %152, %155 : vector<8x128xf32>
    %157 = math.tanh %156 : vector<8x128xf32>
    %cst_35 = arith.constant 1.000000e+00 : f32
    %158 = vector.broadcast %cst_35 : f32 to vector<8x128xf32>
    %159 = arith.subf %158, %151 : vector<8x128xf32>
    %160 = arith.mulf %159, %157 : vector<8x128xf32>
    %161 = arith.mulf %151, %131 : vector<8x128xf32>
    %162 = arith.addf %160, %161 : vector<8x128xf32>
    %c5_i32 = arith.constant 5 : i32
    %163 = arith.index_cast %c5_i32 : i32 to index
    %c0_36 = arith.constant 0 : index
    %c0_37 = arith.constant 0 : index
    %164 = vector.load %arg2[%163, %c0_36, %c0_37] : memref<8x8x384xf32, #tpu.memory_space<vmem>>, vector<1x8x384xf32>
    %165 = vector.shape_cast %164 : vector<1x8x384xf32> to vector<8x384xf32>
    %cst_38 = arith.constant dense<0.000000e+00> : vector<8x384xf32>
    %166 = tpu.matmul %162, %3, %cst_38 {dimension_numbers = #tpu.dot_dimension_numbers<[1], [0], [0], [1], [0, 0, 1, 1], [], []>} : vector<8x128xf32>, vector<128x384xf32>, vector<8x384xf32> -> vector<8x384xf32>
    %167 = vector.extract_strided_slice %165 {offsets = [0, 0], sizes = [8, 128], strides = [1, 1]} : vector<8x384xf32> to vector<8x128xf32>
    %168 = vector.extract_strided_slice %166 {offsets = [0, 0], sizes = [8, 128], strides = [1, 1]} : vector<8x384xf32> to vector<8x128xf32>
    %169 = arith.addf %167, %168 : vector<8x128xf32>
    %170 = arith.negf %169 : vector<8x128xf32>
    %171 = math.exp %170 : vector<8x128xf32>
    %cst_39 = arith.constant 1.000000e+00 : f32
    %172 = vector.broadcast %cst_39 : f32 to vector<8x128xf32>
    %173 = arith.addf %172, %171 : vector<8x128xf32>
    %174 = arith.divf %172, %173 : vector<8x128xf32>
    %175 = vector.extract_strided_slice %165 {offsets = [0, 128], sizes = [8, 128], strides = [1, 1]} : vector<8x384xf32> to vector<8x128xf32>
    %176 = vector.extract_strided_slice %166 {offsets = [0, 128], sizes = [8, 128], strides = [1, 1]} : vector<8x384xf32> to vector<8x128xf32>
    %177 = arith.addf %175, %176 : vector<8x128xf32>
    %178 = arith.negf %177 : vector<8x128xf32>
    %179 = math.exp %178 : vector<8x128xf32>
    %cst_40 = arith.constant 1.000000e+00 : f32
    %180 = vector.broadcast %cst_40 : f32 to vector<8x128xf32>
    %181 = arith.addf %180, %179 : vector<8x128xf32>
    %182 = arith.divf %180, %181 : vector<8x128xf32>
    %183 = vector.extract_strided_slice %165 {offsets = [0, 256], sizes = [8, 128], strides = [1, 1]} : vector<8x384xf32> to vector<8x128xf32>
    %184 = vector.extract_strided_slice %166 {offsets = [0, 256], sizes = [8, 128], strides = [1, 1]} : vector<8x384xf32> to vector<8x128xf32>
    %185 = arith.addf %184, %6 : vector<8x128xf32>
    %186 = arith.mulf %174, %185 : vector<8x128xf32>
    %187 = arith.addf %183, %186 : vector<8x128xf32>
    %188 = math.tanh %187 : vector<8x128xf32>
    %cst_41 = arith.constant 1.000000e+00 : f32
    %189 = vector.broadcast %cst_41 : f32 to vector<8x128xf32>
    %190 = arith.subf %189, %182 : vector<8x128xf32>
    %191 = arith.mulf %190, %188 : vector<8x128xf32>
    %192 = arith.mulf %182, %162 : vector<8x128xf32>
    %193 = arith.addf %191, %192 : vector<8x128xf32>
    %c6_i32 = arith.constant 6 : i32
    %194 = arith.index_cast %c6_i32 : i32 to index
    %c0_42 = arith.constant 0 : index
    %c0_43 = arith.constant 0 : index
    %195 = vector.load %arg2[%194, %c0_42, %c0_43] : memref<8x8x384xf32, #tpu.memory_space<vmem>>, vector<1x8x384xf32>
    %196 = vector.shape_cast %195 : vector<1x8x384xf32> to vector<8x384xf32>
    %cst_44 = arith.constant dense<0.000000e+00> : vector<8x384xf32>
    %197 = tpu.matmul %193, %3, %cst_44 {dimension_numbers = #tpu.dot_dimension_numbers<[1], [0], [0], [1], [0, 0, 1, 1], [], []>} : vector<8x128xf32>, vector<128x384xf32>, vector<8x384xf32> -> vector<8x384xf32>
    %198 = vector.extract_strided_slice %196 {offsets = [0, 0], sizes = [8, 128], strides = [1, 1]} : vector<8x384xf32> to vector<8x128xf32>
    %199 = vector.extract_strided_slice %197 {offsets = [0, 0], sizes = [8, 128], strides = [1, 1]} : vector<8x384xf32> to vector<8x128xf32>
    %200 = arith.addf %198, %199 : vector<8x128xf32>
    %201 = arith.negf %200 : vector<8x128xf32>
    %202 = math.exp %201 : vector<8x128xf32>
    %cst_45 = arith.constant 1.000000e+00 : f32
    %203 = vector.broadcast %cst_45 : f32 to vector<8x128xf32>
    %204 = arith.addf %203, %202 : vector<8x128xf32>
    %205 = arith.divf %203, %204 : vector<8x128xf32>
    %206 = vector.extract_strided_slice %196 {offsets = [0, 128], sizes = [8, 128], strides = [1, 1]} : vector<8x384xf32> to vector<8x128xf32>
    %207 = vector.extract_strided_slice %197 {offsets = [0, 128], sizes = [8, 128], strides = [1, 1]} : vector<8x384xf32> to vector<8x128xf32>
    %208 = arith.addf %206, %207 : vector<8x128xf32>
    %209 = arith.negf %208 : vector<8x128xf32>
    %210 = math.exp %209 : vector<8x128xf32>
    %cst_46 = arith.constant 1.000000e+00 : f32
    %211 = vector.broadcast %cst_46 : f32 to vector<8x128xf32>
    %212 = arith.addf %211, %210 : vector<8x128xf32>
    %213 = arith.divf %211, %212 : vector<8x128xf32>
    %214 = vector.extract_strided_slice %196 {offsets = [0, 256], sizes = [8, 128], strides = [1, 1]} : vector<8x384xf32> to vector<8x128xf32>
    %215 = vector.extract_strided_slice %197 {offsets = [0, 256], sizes = [8, 128], strides = [1, 1]} : vector<8x384xf32> to vector<8x128xf32>
    %216 = arith.addf %215, %6 : vector<8x128xf32>
    %217 = arith.mulf %205, %216 : vector<8x128xf32>
    %218 = arith.addf %214, %217 : vector<8x128xf32>
    %219 = math.tanh %218 : vector<8x128xf32>
    %cst_47 = arith.constant 1.000000e+00 : f32
    %220 = vector.broadcast %cst_47 : f32 to vector<8x128xf32>
    %221 = arith.subf %220, %213 : vector<8x128xf32>
    %222 = arith.mulf %221, %219 : vector<8x128xf32>
    %223 = arith.mulf %213, %193 : vector<8x128xf32>
    %224 = arith.addf %222, %223 : vector<8x128xf32>
    %c7_i32 = arith.constant 7 : i32
    %225 = arith.index_cast %c7_i32 : i32 to index
    %c0_48 = arith.constant 0 : index
    %c0_49 = arith.constant 0 : index
    %226 = vector.load %arg2[%225, %c0_48, %c0_49] : memref<8x8x384xf32, #tpu.memory_space<vmem>>, vector<1x8x384xf32>
    %227 = vector.shape_cast %226 : vector<1x8x384xf32> to vector<8x384xf32>
    %cst_50 = arith.constant dense<0.000000e+00> : vector<8x384xf32>
    %228 = tpu.matmul %224, %3, %cst_50 {dimension_numbers = #tpu.dot_dimension_numbers<[1], [0], [0], [1], [0, 0, 1, 1], [], []>} : vector<8x128xf32>, vector<128x384xf32>, vector<8x384xf32> -> vector<8x384xf32>
    %229 = vector.extract_strided_slice %227 {offsets = [0, 0], sizes = [8, 128], strides = [1, 1]} : vector<8x384xf32> to vector<8x128xf32>
    %230 = vector.extract_strided_slice %228 {offsets = [0, 0], sizes = [8, 128], strides = [1, 1]} : vector<8x384xf32> to vector<8x128xf32>
    %231 = arith.addf %229, %230 : vector<8x128xf32>
    %232 = arith.negf %231 : vector<8x128xf32>
    %233 = math.exp %232 : vector<8x128xf32>
    %cst_51 = arith.constant 1.000000e+00 : f32
    %234 = vector.broadcast %cst_51 : f32 to vector<8x128xf32>
    %235 = arith.addf %234, %233 : vector<8x128xf32>
    %236 = arith.divf %234, %235 : vector<8x128xf32>
    %237 = vector.extract_strided_slice %227 {offsets = [0, 128], sizes = [8, 128], strides = [1, 1]} : vector<8x384xf32> to vector<8x128xf32>
    %238 = vector.extract_strided_slice %228 {offsets = [0, 128], sizes = [8, 128], strides = [1, 1]} : vector<8x384xf32> to vector<8x128xf32>
    %239 = arith.addf %237, %238 : vector<8x128xf32>
    %240 = arith.negf %239 : vector<8x128xf32>
    %241 = math.exp %240 : vector<8x128xf32>
    %cst_52 = arith.constant 1.000000e+00 : f32
    %242 = vector.broadcast %cst_52 : f32 to vector<8x128xf32>
    %243 = arith.addf %242, %241 : vector<8x128xf32>
    %244 = arith.divf %242, %243 : vector<8x128xf32>
    %245 = vector.extract_strided_slice %227 {offsets = [0, 256], sizes = [8, 128], strides = [1, 1]} : vector<8x384xf32> to vector<8x128xf32>
    %246 = vector.extract_strided_slice %228 {offsets = [0, 256], sizes = [8, 128], strides = [1, 1]} : vector<8x384xf32> to vector<8x128xf32>
    %247 = arith.addf %246, %6 : vector<8x128xf32>
    %248 = arith.mulf %236, %247 : vector<8x128xf32>
    %249 = arith.addf %245, %248 : vector<8x128xf32>
    %250 = math.tanh %249 : vector<8x128xf32>
    %cst_53 = arith.constant 1.000000e+00 : f32
    %251 = vector.broadcast %cst_53 : f32 to vector<8x128xf32>
    %252 = arith.subf %251, %244 : vector<8x128xf32>
    %253 = arith.mulf %252, %250 : vector<8x128xf32>
    %254 = arith.mulf %244, %224 : vector<8x128xf32>
    %255 = arith.addf %253, %254 : vector<8x128xf32>
    %c8_i32 = arith.constant 8 : i32
    %c0_54 = arith.constant 0 : index
    %c0_55 = arith.constant 0 : index
    %256 = vector.load %arg5[%c0_54, %c0_55] : memref<8x128xf32, #tpu.memory_space<vmem>>, vector<8x128xf32>
    tpu.vector_store %arg5[%c0_54, %c0_55], %255 {strides = array<i32>} : memref<8x128xf32, #tpu.memory_space<vmem>>, vector<8x128xf32>,
    return
  }
  func.func @transform_0(%arg0: i32, %arg1: i32) -> (i32, i32, i32) {
    %c0_i32 = arith.constant 0 : i32
    %c0_i32_0 = arith.constant 0 : i32
    return %arg1, %arg0, %c0_i32 : i32, i32, i32
  }
  func.func @transform_1(%arg0: i32, %arg1: i32) -> (i32, i32) {
    %c0_i32 = arith.constant 0 : i32
    %c0_i32_0 = arith.constant 0 : i32
    %c0_i32_1 = arith.constant 0 : i32
    return %c0_i32, %c0_i32_0 : i32, i32
  }
  func.func @transform_2(%arg0: i32, %arg1: i32) -> (i32, i32) {
    %c0_i32 = arith.constant 0 : i32
    %c0_i32_0 = arith.constant 0 : i32
    %c0_i32_1 = arith.constant 0 : i32
    return %c0_i32, %c0_i32_0 : i32, i32
  }
  func.func @transform_3(%arg0: i32, %arg1: i32) -> (i32, i32) {
    %c0_i32 = arith.constant 0 : i32
    %c0_i32_0 = arith.constant 0 : i32
    return %arg0, %c0_i32 : i32, i32
  }
}

</mosaic_0001>

<llo_original>
// kernel: tpu_custom_call.1
$region0: #{tpu_custom_call.1}
  #allocation0 [shape = 'u32[]', space=smem, size = 0x4, offset = 0x4, fixed_abs, tag = 'smem constant byte address 0x4 - core index']
  #allocation1 [shape = 'u32[144,128]{1,0:T(1,128)}', space=vmem, size = 0x12000, scoped, tag = 'internal scratch']
  %s0 = inlined_call_operand.hbm [shape: f32[8,8,384], index: 0, kind: input, shape index: {}]
  %s1 = inlined_call_operand.hbm [shape: f32[128,384], index: 1, kind: input, shape index: {}]
  %s2 = inlined_call_operand.vmem [shape: f32[1,128], index: 2, kind: input, shape index: {}]
  %s3 = inlined_call_operand.hbm [shape: f32[8,128], index: 3, kind: output, shape index: {}]
  %s4 = sld [smem:[#allocation0]]
  $region34: #{tpu_custom_call.1} parent=0
    _
  %s6 = ssub.s32 1, %s4
  %s7 = scalar_select 0, %s6, %s4
  $region1: #{tpu_custom_call.1} parent=0
    #allocation2 [shape = 'u8[98304]{0}', space=vmem, size = 0x18000, scoped, tag = 'input window, operand 0, single buffered']
    #allocation3 [shape = 's32[1]{0}', space=sflag, size = 0x4, scoped, tag = 'scoped memory for tpu_custom_call.1']
    #allocation4 [shape = 's32[1]{0}', space=sflag, size = 0x4, scoped, tag = 'scoped memory for tpu_custom_call.1']
    #allocation5 [shape = 'u8[196608]{0}', space=vmem, size = 0x30000, scoped, tag = 'input window, operand 1, single buffered']
    #allocation6 [shape = 's32[1]{0}', space=sflag, size = 0x4, scoped, tag = 'scoped memory for tpu_custom_call.1']
    #allocation7 [shape = 'u8[4096]{0}', space=vmem, size = 0x1000, scoped, tag = 'output window, operand 0, single buffered']
    %8 = vsyncpa [#allocation3], 0
    %9 = vsyncpa [#allocation6], 0
    %10 = vsyncpa [#allocation4], 0
    // Predicated region
    $region2: #{tpu_custom_call.1} parent=1 // pred_check
      _
    $region3: #{tpu_custom_call.1} parent=1 // pred_check_branch
      %12 = sbr.rel (0) target = $region5
    $region4: #{tpu_custom_call.1} parent=1 // pred_region
      %s14 = ssub.s32 3072, 3072
      %15 = vsyncadd [#allocation3], %s14
      %s16 = sshll.u32 [#allocation2], 4
      %s17 = int_to_ptr.vmem [resolvable:$true] %s16
      %22 = dma.hbm_to_vmem [thread:$0]  %s0, 3072, %s17, [#allocation3], 384, 384, 24
    $region5: #{tpu_custom_call.1} parent=1 // pred_fallthru
      _
    // Predicated region
    $region6: #{tpu_custom_call.1} parent=1 // pred_check
      _
    $region7: #{tpu_custom_call.1} parent=1 // pred_check_branch
      %24 = sbr.rel (0) target = $region9
    $region8: #{tpu_custom_call.1} parent=1 // pred_region
      %s26 = ssub.s32 6144, 6144
      %27 = vsyncadd [#allocation6], %s26
      %s28 = sshll.u32 [#allocation5], 4
      %s29 = int_to_ptr.vmem [resolvable:$true] %s28
      %34 = dma.hbm_to_vmem [thread:$0]  %s1, 6144, %s29, [#allocation6], 384, 384, 24
    $region9: #{tpu_custom_call.1} parent=1 // pred_fallthru
      _
    // Predicated region
    $region10: #{tpu_custom_call.1} parent=1 // pred_check
      _
    $region11: #{tpu_custom_call.1} parent=1 // pred_check_branch
      %36 = sbr.rel (0) target = $region13
    $region12: #{tpu_custom_call.1} parent=1 // pred_region
      _
    $region13: #{tpu_custom_call.1} parent=1 // pred_fallthru
      _
    // Predicated region
    $region14: #{tpu_custom_call.1} parent=1 // pred_check
      _
    $region15: #{tpu_custom_call.1} parent=1 // pred_check_branch
      %38 = sbr.rel (0) target = $region17
    $region16: #{tpu_custom_call.1} parent=1 // pred_region
      %39 = dma.done [#allocation3], 3072
    $region17: #{tpu_custom_call.1} parent=1 // pred_fallthru
      _
    // Predicated region
    $region18: #{tpu_custom_call.1} parent=1 // pred_check
      _
    $region19: #{tpu_custom_call.1} parent=1 // pred_check_branch
      %41 = sbr.rel (0) target = $region21
    $region20: #{tpu_custom_call.1} parent=1 // pred_region
      %42 = dma.done [#allocation6], 6144
    $region21: #{tpu_custom_call.1} parent=1 // pred_fallthru
      _
    %p43 = scmp.eq.s32.totalorder 0, 0
    // Predicated region
    $region22: #{tpu_custom_call.1} parent=1 // pred_check
      %p44 = pneg %p43
    $region23: #{tpu_custom_call.1} parent=1 // pred_check_branch
      %46 = sbr.rel (%p44) target = $region25
    $region24: #{tpu_custom_call.1} parent=1 // pred_region
      %47 = vst [vmem:[#allocation7] sm:$0xff] 0.0
    $region25: #{tpu_custom_call.1} parent=1 // pred_fallthru
      _
    %v48 = vld [vmem:[#allocation5] sm:$0xff]
    %v49 = vld [vmem:[#allocation5 + $0x8] sm:$0xff]
    %v50 = vld [vmem:[#allocation5 + $0x10] sm:$0xff]
    %v51 = vld [vmem:[#allocation5 + $0x18] sm:$0xff]
    %v52 = vld [vmem:[#allocation5 + $0x20] sm:$0xff]
    %v53 = vld [vmem:[#allocation5 + $0x28] sm:$0xff]
    %v54 = vld [vmem:[#allocation5 + $0x30] sm:$0xff]
    %v55 = vld [vmem:[#allocation5 + $0x38] sm:$0xff]
    %v56 = vld [vmem:[#allocation5 + $0x40] sm:$0xff]
    %v57 = vld [vmem:[#allocation5 + $0x48] sm:$0xff]
    %v58 = vld [vmem:[#allocation5 + $0x50] sm:$0xff]
    %v59 = vld [vmem:[#allocation5 + $0x58] sm:$0xff]
    %v60 = vld [vmem:[#allocation5 + $0x60] sm:$0xff]
    %v61 = vld [vmem:[#allocation5 + $0x68] sm:$0xff]
    %v62 = vld [vmem:[#allocation5 + $0x70] sm:$0xff]
    %v63 = vld [vmem:[#allocation5 + $0x78] sm:$0xff]
    %v64 = vld [vmem:[#allocation5 + $0x80] sm:$0xff]
    %v65 = vld [vmem:[#allocation5 + $0x88] sm:$0xff]
    %v66 = vld [vmem:[#allocation5 + $0x90] sm:$0xff]
    %v67 = vld [vmem:[#allocation5 + $0x98] sm:$0xff]
    %v68 = vld [vmem:[#allocation5 + $0xa0] sm:$0xff]
    %v69 = vld [vmem:[#allocation5 + $0xa8] sm:$0xff]
    %v70 = vld [vmem:[#allocation5 + $0xb0] sm:$0xff]
    %v71 = vld [vmem:[#allocation5 + $0xb8] sm:$0xff]
    %v72 = vld [vmem:[#allocation5 + $0xc0] sm:$0xff]
    %v73 = vld [vmem:[#allocation5 + $0xc8] sm:$0xff]
    %v74 = vld [vmem:[#allocation5 + $0xd0] sm:$0xff]
    %v75 = vld [vmem:[#allocation5 + $0xd8] sm:$0xff]
    %v76 = vld [vmem:[#allocation5 + $0xe0] sm:$0xff]
    %v77 = vld [vmem:[#allocation5 + $0xe8] sm:$0xff]
    %v78 = vld [vmem:[#allocation5 + $0xf0] sm:$0xff]
    %v79 = vld [vmem:[#allocation5 + $0xf8] sm:$0xff]
    %v80 = vld [vmem:[#allocation5 + $0x100] sm:$0xff]
    %v81 = vld [vmem:[#allocation5 + $0x108] sm:$0xff]
    %v82 = vld [vmem:[#allocation5 + $0x110] sm:$0xff]
    %v83 = vld [vmem:[#allocation5 + $0x118] sm:$0xff]
    %v84 = vld [vmem:[#allocation5 + $0x120] sm:$0xff]
    %v85 = vld [vmem:[#allocation5 + $0x128] sm:$0xff]
    %v86 = vld [vmem:[#allocation5 + $0x130] sm:$0xff]
    %v87 = vld [vmem:[#allocation5 + $0x138] sm:$0xff]
    %v88 = vld [vmem:[#allocation5 + $0x140] sm:$0xff]
    %v89 = vld [vmem:[#allocation5 + $0x148] sm:$0xff]
    %v90 = vld [vmem:[#allocation5 + $0x150] sm:$0xff]
    %v91 = vld [vmem:[#allocation5 + $0x158] sm:$0xff]
    %v92 = vld [vmem:[#allocation5 + $0x160] sm:$0xff]
    %v93 = vld [vmem:[#allocation5 + $0x168] sm:$0xff]
    %v94 = vld [vmem:[#allocation5 + $0x170] sm:$0xff]
    %v95 = vld [vmem:[#allocation5 + $0x178] sm:$0xff]
    %v96 = vld [vmem:[%s2] sm:$0x1]
    %v98 = vlaneseq
    %v99 = vshrl.u32 %v98, 7
    %v100 = vsub.s32 0, %v99
    %v101 = vrot.slane %v96, %v100
    %v103 = vld [vmem:[#allocation7] sm:$0xff]
    %v104 = vld [vmem:[#allocation2] sm:$0xff]
    %v105 = vld [vmem:[#allocation2 + $0x8] sm:$0xff]
    %v106 = vld [vmem:[#allocation2 + $0x10] sm:$0xff]
    %107 = vmatprep.subr.mxu0 %v49
    %108 = vmatpush1.msra.mxu0 %v48
    %109 = vmatprep.subr.mxu0 %v52
    %110 = vmatpush1.msra.mxu0 %v51
    %111 = vmatprep.subr.mxu0 %v55
    %112 = vmatpush1.msra.mxu0 %v54
    %113 = vmatprep.subr.mxu0 %v58
    %114 = vmatpush1.msra.mxu0 %v57
    %115 = vmatprep.subr.mxu0 %v61
    %116 = vmatpush1.msra.mxu0 %v60
    %117 = vmatprep.subr.mxu0 %v64
    %118 = vmatpush1.msra.mxu0 %v63
    %119 = vmatprep.subr.mxu0 %v67
    %120 = vmatpush1.msra.mxu0 %v66
    %121 = vmatprep.subr.mxu0 %v70
    %122 = vmatpush1.msra.mxu0 %v69
    %123 = vmatprep.subr.mxu0 %v73
    %124 = vmatpush1.msra.mxu0 %v72
    %125 = vmatprep.subr.mxu0 %v76
    %126 = vmatpush1.msra.mxu0 %v75
    %127 = vmatprep.subr.mxu0 %v79
    %128 = vmatpush1.msra.mxu0 %v78
    %129 = vmatprep.subr.mxu0 %v82
    %130 = vmatpush1.msra.mxu0 %v81
    %131 = vmatprep.subr.mxu0 %v85
    %132 = vmatpush1.msra.mxu0 %v84
    %133 = vmatprep.subr.mxu0 %v88
    %134 = vmatpush1.msra.mxu0 %v87
    %135 = vmatprep.subr.mxu0 %v91
    %136 = vmatpush1.msra.mxu0 %v90
    %137 = vmatprep.subr.mxu0 %v94
    %138 = vmatpush1.msra.mxu0 %v93
    %139 = vmatprep.subr.mxu0 0.0
    %140 = vmatpush1.msra.mxu0 0.0
    %141 = vmatprep.subr.mxu0 0.0
    %142 = vmatpush1.msra.mxu0 0.0
    %143 = vmatprep.subr.mxu0 0.0
    %144 = vmatpush1.msra.mxu0 0.0
    %145 = vmatprep.subr.mxu0 0.0
    %146 = vmatpush1.msra.mxu0 0.0
    %147 = vmatprep.subr.mxu0 0.0
    %148 = vmatpush1.msra.mxu0 0.0
    %149 = vmatprep.subr.mxu0 0.0
    %150 = vmatpush1.msra.mxu0 0.0
    %151 = vmatprep.subr.mxu0 0.0
    %152 = vmatpush1.msra.mxu0 0.0
    %153 = vmatprep.subr.mxu0 0.0
    %154 = vmatpush1.msra.mxu0 0.0
    %155 = vmatprep.subr.mxu0 0.0
    %156 = vmatpush1.msra.mxu0 0.0
    %157 = vmatprep.subr.mxu0 0.0
    %158 = vmatpush1.msra.mxu0 0.0
    %159 = vmatprep.subr.mxu0 0.0
    %160 = vmatpush1.msra.mxu0 0.0
    %161 = vmatprep.subr.mxu0 0.0
    %162 = vmatpush1.msra.mxu0 0.0
    %163 = vmatprep.subr.mxu0 0.0
    %164 = vmatpush1.msra.mxu0 0.0
    %165 = vmatprep.subr.mxu0 0.0
    %166 = vmatpush1.msra.mxu0 0.0
    %167 = vmatprep.subr.mxu0 0.0
    %168 = vmatpush1.msra.mxu0 0.0
    %169 = vmatprep.subr.mxu0 0.0
    %170 = vmatpush1.msra.mxu0 0.0
    %171 = vmatprep.mubr.f32.mxu0 0.0
    %172 = vmatmul.mubr.f32.gmra.mrb[0].mxu0 %v103
    %v173 = vpop.f32.mrb[0].mxu0
    %v174 = vadd.f32 0.0, %v173
    %v175 = vpop.f32.mrb[0].mxu0
    %v176 = vadd.f32 0.0, %v175
    %177 = vdwg.mxu0
    %178 = vmatprep.subr.mxu0 0.0
    %179 = vmatpush1.msra.mxu0 %v50
    %180 = vmatprep.subr.mxu0 0.0
    %181 = vmatpush1.msra.mxu0 %v53
    %182 = vmatprep.subr.mxu0 0.0
    %183 = vmatpush1.msra.mxu0 %v56
    %184 = vmatprep.subr.mxu0 0.0
    %185 = vmatpush1.msra.mxu0 %v59
    %186 = vmatprep.subr.mxu0 0.0
    %187 = vmatpush1.msra.mxu0 %v62
    %188 = vmatprep.subr.mxu0 0.0
    %189 = vmatpush1.msra.mxu0 %v65
    %190 = vmatprep.subr.mxu0 0.0
    %191 = vmatpush1.msra.mxu0 %v68
    %192 = vmatprep.subr.mxu0 0.0
    %193 = vmatpush1.msra.mxu0 %v71
    %194 = vmatprep.subr.mxu0 0.0
    %195 = vmatpush1.msra.mxu0 %v74
    %196 = vmatprep.subr.mxu0 0.0
    %197 = vmatpush1.msra.mxu0 %v77
    %198 = vmatprep.subr.mxu0 0.0
    %199 = vmatpush1.msra.mxu0 %v80
    %200 = vmatprep.subr.mxu0 0.0
    %201 = vmatpush1.msra.mxu0 %v83
    %202 = vmatprep.subr.mxu0 0.0
    %203 = vmatpush1.msra.mxu0 %v86
    %204 = vmatprep.subr.mxu0 0.0
    %205 = vmatpush1.msra.mxu0 %v89
    %206 = vmatprep.subr.mxu0 0.0
    %207 = vmatpush1.msra.mxu0 %v92
    %208 = vmatprep.subr.mxu0 0.0
    %209 = vmatpush1.msra.mxu0 %v95
    %210 = vmatprep.subr.mxu0 0.0
    %211 = vmatpush1.msra.mxu0 0.0
    %212 = vmatprep.subr.mxu0 0.0
    %213 = vmatpush1.msra.mxu0 0.0
    %214 = vmatprep.subr.mxu0 0.0
    %215 = vmatpush1.msra.mxu0 0.0
    %216 = vmatprep.subr.mxu0 0.0
    %217 = vmatpush1.msra.mxu0 0.0
    %218 = vmatprep.subr.mxu0 0.0
    %219 = vmatpush1.msra.mxu0 0.0
    %220 = vmatprep.subr.mxu0 0.0
    %221 = vmatpush1.msra.mxu0 0.0
    %222 = vmatprep.subr.mxu0 0.0
    %223 = vmatpush1.msra.mxu0 0.0
    %224 = vmatprep.subr.mxu0 0.0
    %225 = vmatpush1.msra.mxu0 0.0
    %226 = vmatprep.subr.mxu0 0.0
    %227 = vmatpush1.msra.mxu0 0.0
    %228 = vmatprep.subr.mxu0 0.0
    %229 = vmatpush1.msra.mxu0 0.0
    %230 = vmatprep.subr.mxu0 0.0
    %231 = vmatpush1.msra.mxu0 0.0
    %232 = vmatprep.subr.mxu0 0.0
    %233 = vmatpush1.msra.mxu0 0.0
    %234 = vmatprep.subr.mxu0 0.0
    %235 = vmatpush1.msra.mxu0 0.0
    %236 = vmatprep.subr.mxu0 0.0
    %237 = vmatpush1.msra.mxu0 0.0
    %238 = vmatprep.subr.mxu0 0.0
    %239 = vmatpush1.msra.mxu0 0.0
    %240 = vmatprep.subr.mxu0 0.0
    %241 = vmatpush1.msra.mxu0 0.0
    %242 = vmatprep.mubr.f32.mxu0 0.0
    %243 = vmatmul.mubr.f32.gmra.mrb[0].mxu0 %v103
    %v244 = vpop.f32.mrb[0].mxu0
    %v245 = vadd.f32 0.0, %v244
    %v246 = vpop.f32.mrb[0].mxu0
    %247 = vdwg.mxu0
    %v248 = vadd.f32 %v104, %v174
    %v249 = vxor.u32 %v248, 2147483648
    %v250 = vmul.f32 %v249, 1.442695
    %v251 = vpow.pop %v250
    %v252 = vadd.f32 %v251, 1.0
    %v253 = vrcp.pop %v252
    %v254 = vmul.f32 1.0, %v253
    %v255 = vadd.f32 %v105, %v176
    %v256 = vxor.u32 %v255, 2147483648
    %v257 = vmul.f32 %v256, 1.442695
    %v258 = vpow.pop %v257
    %v259 = vadd.f32 %v258, 1.0
    %v260 = vrcp.pop %v259
    %v261 = vmul.f32 1.0, %v260
    %v262 = vadd.f32 %v245, %v101
    %v263 = vmul.f32 %v254, %v262
    %v264 = vadd.f32 %v106, %v263
    %v265 = vtanh.pop %v264
    %v266 = vsub.f32 1.0, %v261
    %v267 = vmul.f32 %v266, %v265
    %v268 = vmul.f32 %v261, %v103
    %v269 = vadd.f32 %v267, %v268
    %s270 = scalar_lea.vmem [#allocation2], 24
    %v271 = vld [vmem:[%s270] sm:$0xff]
    %v272 = vld [vmem:[%s270 + $0x8] sm:$0xff]
    %v273 = vld [vmem:[%s270 + $0x10] sm:$0xff]
    %274 = vmatprep.subr.mxu0 %v49
    %275 = vmatpush1.msra.mxu0 %v48
    %276 = vmatprep.subr.mxu0 %v52
    %277 = vmatpush1.msra.mxu0 %v51
    %278 = vmatprep.subr.mxu0 %v55
    %279 = vmatpush1.msra.mxu0 %v54
    %280 = vmatprep.subr.mxu0 %v58
    %281 = vmatpush1.msra.mxu0 %v57
    %282 = vmatprep.subr.mxu0 %v61
    %283 = vmatpush1.msra.mxu0 %v60
    %284 = vmatprep.subr.mxu0 %v64
    %285 = vmatpush1.msra.mxu0 %v63
    %286 = vmatprep.subr.mxu0 %v67
    %287 = vmatpush1.msra.mxu0 %v66
    %288 = vmatprep.subr.mxu0 %v70
    %289 = vmatpush1.msra.mxu0 %v69
    %290 = vmatprep.subr.mxu0 %v73
    %291 = vmatpush1.msra.mxu0 %v72
    %292 = vmatprep.subr.mxu0 %v76
    %293 = vmatpush1.msra.mxu0 %v75
    %294 = vmatprep.subr.mxu0 %v79
    %295 = vmatpush1.msra.mxu0 %v78
    %296 = vmatprep.subr.mxu0 %v82
    %297 = vmatpush1.msra.mxu0 %v81
    %298 = vmatprep.subr.mxu0 %v85
    %299 = vmatpush1.msra.mxu0 %v84
    %300 = vmatprep.subr.mxu0 %v88
    %301 = vmatpush1.msra.mxu0 %v87
    %302 = vmatprep.subr.mxu0 %v91
    %303 = vmatpush1.msra.mxu0 %v90
    %304 = vmatprep.subr.mxu0 %v94
    %305 = vmatpush1.msra.mxu0 %v93
    %306 = vmatprep.subr.mxu0 0.0
    %307 = vmatpush1.msra.mxu0 0.0
    %308 = vmatprep.subr.mxu0 0.0
    %309 = vmatpush1.msra.mxu0 0.0
    %310 = vmatprep.subr.mxu0 0.0
    %311 = vmatpush1.msra.mxu0 0.0
    %312 = vmatprep.subr.mxu0 0.0
    %313 = vmatpush1.msra.mxu0 0.0
    %314 = vmatprep.subr.mxu0 0.0
    %315 = vmatpush1.msra.mxu0 0.0
    %316 = vmatprep.subr.mxu0 0.0
    %317 = vmatpush1.msra.mxu0 0.0
    %318 = vmatprep.subr.mxu0 0.0
    %319 = vmatpush1.msra.mxu0 0.0
    %320 = vmatprep.subr.mxu0 0.0
    %321 = vmatpush1.msra.mxu0 0.0
    %322 = vmatprep.subr.mxu0 0.0
    %323 = vmatpush1.msra.mxu0 0.0
    %324 = vmatprep.subr.mxu0 0.0
    %325 = vmatpush1.msra.mxu0 0.0
    %326 = vmatprep.subr.mxu0 0.0
    %327 = vmatpush1.msra.mxu0 0.0
    %328 = vmatprep.subr.mxu0 0.0
    %329 = vmatpush1.msra.mxu0 0.0
    %330 = vmatprep.subr.mxu0 0.0
    %331 = vmatpush1.msra.mxu0 0.0
    %332 = vmatprep.subr.mxu0 0.0
    %333 = vmatpush1.msra.mxu0 0.0
    %334 = vmatprep.subr.mxu0 0.0
    %335 = vmatpush1.msra.mxu0 0.0
    %336 = vmatprep.subr.mxu0 0.0
    %337 = vmatpush1.msra.mxu0 0.0
    %338 = vmatprep.mubr.f32.mxu0 0.0
    %339 = vmatmul.mubr.f32.gmra.mrb[0].mxu0 %v269
    %v340 = vpop.f32.mrb[0].mxu0
    %v341 = vadd.f32 0.0, %v340
    %v342 = vpop.f32.mrb[0].mxu0
    %v343 = vadd.f32 0.0, %v342
    %344 = vdwg.mxu0
    %345 = vmatprep.subr.mxu0 0.0
    %346 = vmatpush1.msra.mxu0 %v50
    %347 = vmatprep.subr.mxu0 0.0
    %348 = vmatpush1.msra.mxu0 %v53
    %349 = vmatprep.subr.mxu0 0.0
    %350 = vmatpush1.msra.mxu0 %v56
    %351 = vmatprep.subr.mxu0 0.0
    %352 = vmatpush1.msra.mxu0 %v59
    %353 = vmatprep.subr.mxu0 0.0
    %354 = vmatpush1.msra.mxu0 %v62
    %355 = vmatprep.subr.mxu0 0.0
    %356 = vmatpush1.msra.mxu0 %v65
    %357 = vmatprep.subr.mxu0 0.0
    %358 = vmatpush1.msra.mxu0 %v68
    %359 = vmatprep.subr.mxu0 0.0
    %360 = vmatpush1.msra.mxu0 %v71
    %361 = vmatprep.subr.mxu0 0.0
    %362 = vmatpush1.msra.mxu0 %v74
    %363 = vmatprep.subr.mxu0 0.0
    %364 = vmatpush1.msra.mxu0 %v77
    %365 = vmatprep.subr.mxu0 0.0
    %366 = vmatpush1.msra.mxu0 %v80
    %367 = vmatprep.subr.mxu0 0.0
    %368 = vmatpush1.msra.mxu0 %v83
    %369 = vmatprep.subr.mxu0 0.0
    %370 = vmatpush1.msra.mxu0 %v86
    %371 = vmatprep.subr.mxu0 0.0
    %372 = vmatpush1.msra.mxu0 %v89
    %373 = vmatprep.subr.mxu0 0.0
    %374 = vmatpush1.msra.mxu0 %v92
    %375 = vmatprep.subr.mxu0 0.0
    %376 = vmatpush1.msra.mxu0 %v95
    %377 = vmatprep.subr.mxu0 0.0
    %378 = vmatpush1.msra.mxu0 0.0
    %379 = vmatprep.subr.mxu0 0.0
    %380 = vmatpush1.msra.mxu0 0.0
    %381 = vmatprep.subr.mxu0 0.0
    %382 = vmatpush1.msra.mxu0 0.0
    %383 = vmatprep.subr.mxu0 0.0
    %384 = vmatpush1.msra.mxu0 0.0
    %385 = vmatprep.subr.mxu0 0.0
    %386 = vmatpush1.msra.mxu0 0.0
    %387 = vmatprep.subr.mxu0 0.0
    %388 = vmatpush1.msra.mxu0 0.0
    %389 = vmatprep.subr.mxu0 0.0
    %390 = vmatpush1.msra.mxu0 0.0
    %391 = vmatprep.subr.mxu0 0.0
    %392 = vmatpush1.msra.mxu0 0.0
    %393 = vmatprep.subr.mxu0 0.0
    %394 = vmatpush1.msra.mxu0 0.0
    %395 = vmatprep.subr.mxu0 0.0
    %396 = vmatpush1.msra.mxu0 0.0
    %397 = vmatprep.subr.mxu0 0.0
    %398 = vmatpush1.msra.mxu0 0.0
    %399 = vmatprep.subr.mxu0 0.0
    %400 = vmatpush1.msra.mxu0 0.0
    %401 = vmatprep.subr.mxu0 0.0
    %402 = vmatpush1.msra.mxu0 0.0
    %403 = vmatprep.subr.mxu0 0.0
    %404 = vmatpush1.msra.mxu0 0.0
    %405 = vmatprep.subr.mxu0 0.0
    %406 = vmatpush1.msra.mxu0 0.0
    %407 = vmatprep.subr.mxu0 0.0
    %408 = vmatpush1.msra.mxu0 0.0
    %409 = vmatprep.mubr.f32.mxu0 0.0
    %410 = vmatmul.mubr.f32.gmra.mrb[0].mxu0 %v269
    %v411 = vpop.f32.mrb[0].mxu0
    %v412 = vadd.f32 0.0, %v411
    %v413 = vpop.f32.mrb[0].mxu0
    %414 = vdwg.mxu0
    %v415 = vadd.f32 %v271, %v341
    %v416 = vxor.u32 %v415, 2147483648
    %v417 = vmul.f32 %v416, 1.442695
    %v418 = vpow.pop %v417
    %v419 = vadd.f32 %v418, 1.0
    %v420 = vrcp.pop %v419
    %v421 = vmul.f32 1.0, %v420
    %v422 = vadd.f32 %v272, %v343
    %v423 = vxor.u32 %v422, 2147483648
    %v424 = vmul.f32 %v423, 1.442695
    %v425 = vpow.pop %v424
    %v426 = vadd.f32 %v425, 1.0
    %v427 = vrcp.pop %v426
    %v428 = vmul.f32 1.0, %v427
    %v429 = vadd.f32 %v412, %v101
    %v430 = vmul.f32 %v421, %v429
    %v431 = vadd.f32 %v273, %v430
    %v432 = vtanh.pop %v431
    %v433 = vsub.f32 1.0, %v428
    %v434 = vmul.f32 %v433, %v432
    %v435 = vmul.f32 %v428, %v269
    %v436 = vadd.f32 %v434, %v435
    %s437 = scalar_lea.vmem [#allocation2], 48
    %v438 = vld [vmem:[%s437] sm:$0xff]
    %v439 = vld [vmem:[%s437 + $0x8] sm:$0xff]
    %v440 = vld [vmem:[%s437 + $0x10] sm:$0xff]
    %441 = vmatprep.subr.mxu0 %v49
    %442 = vmatpush1.msra.mxu0 %v48
    %443 = vmatprep.subr.mxu0 %v52
    %444 = vmatpush1.msra.mxu0 %v51
    %445 = vmatprep.subr.mxu0 %v55
    %446 = vmatpush1.msra.mxu0 %v54
    %447 = vmatprep.subr.mxu0 %v58
    %448 = vmatpush1.msra.mxu0 %v57
    %449 = vmatprep.subr.mxu0 %v61
    %450 = vmatpush1.msra.mxu0 %v60
    %451 = vmatprep.subr.mxu0 %v64
    %452 = vmatpush1.msra.mxu0 %v63
    %453 = vmatprep.subr.mxu0 %v67
    %454 = vmatpush1.msra.mxu0 %v66
    %455 = vmatprep.subr.mxu0 %v70
    %456 = vmatpush1.msra.mxu0 %v69
    %457 = vmatprep.subr.mxu0 %v73
    %458 = vmatpush1.msra.mxu0 %v72
    %459 = vmatprep.subr.mxu0 %v76
    %460 = vmatpush1.msra.mxu0 %v75
    %461 = vmatprep.subr.mxu0 %v79
    %462 = vmatpush1.msra.mxu0 %v78
    %463 = vmatprep.subr.mxu0 %v82
    %464 = vmatpush1.msra.mxu0 %v81
    %465 = vmatprep.subr.mxu0 %v85
    %466 = vmatpush1.msra.mxu0 %v84
    %467 = vmatprep.subr.mxu0 %v88
    %468 = vmatpush1.msra.mxu0 %v87
    %469 = vmatprep.subr.mxu0 %v91
    %470 = vmatpush1.msra.mxu0 %v90
    %471 = vmatprep.subr.mxu0 %v94
    %472 = vmatpush1.msra.mxu0 %v93
    %473 = vmatprep.subr.mxu0 0.0
    %474 = vmatpush1.msra.mxu0 0.0
    %475 = vmatprep.subr.mxu0 0.0
    %476 = vmatpush1.msra.mxu0 0.0
    %477 = vmatprep.subr.mxu0 0.0
    %478 = vmatpush1.msra.mxu0 0.0
    %479 = vmatprep.subr.mxu0 0.0
    %480 = vmatpush1.msra.mxu0 0.0
    %481 = vmatprep.subr.mxu0 0.0
    %482 = vmatpush1.msra.mxu0 0.0
    %483 = vmatprep.subr.mxu0 0.0
    %484 = vmatpush1.msra.mxu0 0.0
    %485 = vmatprep.subr.mxu0 0.0
    %486 = vmatpush1.msra.mxu0 0.0
    %487 = vmatprep.subr.mxu0 0.0
    %488 = vmatpush1.msra.mxu0 0.0
    %489 = vmatprep.subr.mxu0 0.0
    %490 = vmatpush1.msra.mxu0 0.0
    %491 = vmatprep.subr.mxu0 0.0
    %492 = vmatpush1.msra.mxu0 0.0
    %493 = vmatprep.subr.mxu0 0.0
    %494 = vmatpush1.msra.mxu0 0.0
    %495 = vmatprep.subr.mxu0 0.0
    %496 = vmatpush1.msra.mxu0 0.0
    %497 = vmatprep.subr.mxu0 0.0
    %498 = vmatpush1.msra.mxu0 0.0
    %499 = vmatprep.subr.mxu0 0.0
    %500 = vmatpush1.msra.mxu0 0.0
    %501 = vmatprep.subr.mxu0 0.0
    %502 = vmatpush1.msra.mxu0 0.0
    %503 = vmatprep.subr.mxu0 0.0
    %504 = vmatpush1.msra.mxu0 0.0
    %505 = vmatprep.mubr.f32.mxu0 0.0
    %506 = vmatmul.mubr.f32.gmra.mrb[0].mxu0 %v436
    %v507 = vpop.f32.mrb[0].mxu0
    %v508 = vadd.f32 0.0, %v507
    %v509 = vpop.f32.mrb[0].mxu0
    %v510 = vadd.f32 0.0, %v509
    %511 = vdwg.mxu0
    %512 = vmatprep.subr.mxu0 0.0
    %513 = vmatpush1.msra.mxu0 %v50
    %514 = vmatprep.subr.mxu0 0.0
    %515 = vmatpush1.msra.mxu0 %v53
    %516 = vmatprep.subr.mxu0 0.0
    %517 = vmatpush1.msra.mxu0 %v56
    %518 = vmatprep.subr.mxu0 0.0
    %519 = vmatpush1.msra.mxu0 %v59
    %520 = vmatprep.subr.mxu0 0.0
    %521 = vmatpush1.msra.mxu0 %v62
    %522 = vmatprep.subr.mxu0 0.0
    %523 = vmatpush1.msra.mxu0 %v65
    %524 = vmatprep.subr.mxu0 0.0
    %525 = vmatpush1.msra.mxu0 %v68
    %526 = vmatprep.subr.mxu0 0.0
    %527 = vmatpush1.msra.mxu0 %v71
    %528 = vmatprep.subr.mxu0 0.0
    %529 = vmatpush1.msra.mxu0 %v74
    %530 = vmatprep.subr.mxu0 0.0
    %531 = vmatpush1.msra.mxu0 %v77
    %532 = vmatprep.subr.mxu0 0.0
    %533 = vmatpush1.msra.mxu0 %v80
    %534 = vmatprep.subr.mxu0 0.0
    %535 = vmatpush1.msra.mxu0 %v83
    %536 = vmatprep.subr.mxu0 0.0
    %537 = vmatpush1.msra.mxu0 %v86
    %538 = vmatprep.subr.mxu0 0.0
    %539 = vmatpush1.msra.mxu0 %v89
    %540 = vmatprep.subr.mxu0 0.0
    %541 = vmatpush1.msra.mxu0 %v92
    %542 = vmatprep.subr.mxu0 0.0
    %543 = vmatpush1.msra.mxu0 %v95
    %544 = vmatprep.subr.mxu0 0.0
    %545 = vmatpush1.msra.mxu0 0.0
    %546 = vmatprep.subr.mxu0 0.0
    %547 = vmatpush1.msra.mxu0 0.0
    %548 = vmatprep.subr.mxu0 0.0
    %549 = vmatpush1.msra.mxu0 0.0
    %550 = vmatprep.subr.mxu0 0.0
    %551 = vmatpush1.msra.mxu0 0.0
    %552 = vmatprep.subr.mxu0 0.0
    %553 = vmatpush1.msra.mxu0 0.0
    %554 = vmatprep.subr.mxu0 0.0
    %555 = vmatpush1.msra.mxu0 0.0
    %556 = vmatprep.subr.mxu0 0.0
    %557 = vmatpush1.msra.mxu0 0.0
    %558 = vmatprep.subr.mxu0 0.0
    %559 = vmatpush1.msra.mxu0 0.0
    %560 = vmatprep.subr.mxu0 0.0
    %561 = vmatpush1.msra.mxu0 0.0
    %562 = vmatprep.subr.mxu0 0.0
    %563 = vmatpush1.msra.mxu0 0.0
    %564 = vmatprep.subr.mxu0 0.0
    %565 = vmatpush1.msra.mxu0 0.0
    %566 = vmatprep.subr.mxu0 0.0
    %567 = vmatpush1.msra.mxu0 0.0
    %568 = vmatprep.subr.mxu0 0.0
    %569 = vmatpush1.msra.mxu0 0.0
    %570 = vmatprep.subr.mxu0 0.0
    %571 = vmatpush1.msra.mxu0 0.0
    %572 = vmatprep.subr.mxu0 0.0
    %573 = vmatpush1.msra.mxu0 0.0
    %574 = vmatprep.subr.mxu0 0.0
    %575 = vmatpush1.msra.mxu0 0.0
    %576 = vmatprep.mubr.f32.mxu0 0.0
    %577 = vmatmul.mubr.f32.gmra.mrb[0].mxu0 %v436
    %v578 = vpop.f32.mrb[0].mxu0
    %v579 = vadd.f32 0.0, %v578
    %v580 = vpop.f32.mrb[0].mxu0
    %581 = vdwg.mxu0
    %v582 = vadd.f32 %v438, %v508
    %v583 = vxor.u32 %v582, 2147483648
    %v584 = vmul.f32 %v583, 1.442695
    %v585 = vpow.pop %v584
    %v586 = vadd.f32 %v585, 1.0
    %v587 = vrcp.pop %v586
    %v588 = vmul.f32 1.0, %v587
    %v589 = vadd.f32 %v439, %v510
    %v590 = vxor.u32 %v589, 2147483648
    %v591 = vmul.f32 %v590, 1.442695
    %v592 = vpow.pop %v591
    %v593 = vadd.f32 %v592, 1.0
    %v594 = vrcp.pop %v593
    %v595 = vmul.f32 1.0, %v594
    %v596 = vadd.f32 %v579, %v101
    %v597 = vmul.f32 %v588, %v596
    %v598 = vadd.f32 %v440, %v597
    %v599 = vtanh.pop %v598
    %v600 = vsub.f32 1.0, %v595
    %v601 = vmul.f32 %v600, %v599
    %v602 = vmul.f32 %v595, %v436
    %v603 = vadd.f32 %v601, %v602
    %s604 = scalar_lea.vmem [#allocation2], 72
    %v605 = vld [vmem:[%s604] sm:$0xff]
    %v606 = vld [vmem:[%s604 + $0x8] sm:$0xff]
    %v607 = vld [vmem:[%s604 + $0x10] sm:$0xff]
    %608 = vmatprep.subr.mxu0 %v49
    %609 = vmatpush1.msra.mxu0 %v48
    %610 = vmatprep.subr.mxu0 %v52
    %611 = vmatpush1.msra.mxu0 %v51
    %612 = vmatprep.subr.mxu0 %v55
    %613 = vmatpush1.msra.mxu0 %v54
    %614 = vmatprep.subr.mxu0 %v58
    %615 = vmatpush1.msra.mxu0 %v57
    %616 = vmatprep.subr.mxu0 %v61
    %617 = vmatpush1.msra.mxu0 %v60
    %618 = vmatprep.subr.mxu0 %v64
    %619 = vmatpush1.msra.mxu0 %v63
    %620 = vmatprep.subr.mxu0 %v67
    %621 = vmatpush1.msra.mxu0 %v66
    %622 = vmatprep.subr.mxu0 %v70
    %623 = vmatpush1.msra.mxu0 %v69
    %624 = vmatprep.subr.mxu0 %v73
    %625 = vmatpush1.msra.mxu0 %v72
    %626 = vmatprep.subr.mxu0 %v76
    %627 = vmatpush1.msra.mxu0 %v75
    %628 = vmatprep.subr.mxu0 %v79
    %629 = vmatpush1.msra.mxu0 %v78
    %630 = vmatprep.subr.mxu0 %v82
    %631 = vmatpush1.msra.mxu0 %v81
    %632 = vmatprep.subr.mxu0 %v85
    %633 = vmatpush1.msra.mxu0 %v84
    %634 = vmatprep.subr.mxu0 %v88
    %635 = vmatpush1.msra.mxu0 %v87
    %636 = vmatprep.subr.mxu0 %v91
    %637 = vmatpush1.msra.mxu0 %v90
    %638 = vmatprep.subr.mxu0 %v94
    %639 = vmatpush1.msra.mxu0 %v93
    %640 = vmatprep.subr.mxu0 0.0
    %641 = vmatpush1.msra.mxu0 0.0
    %642 = vmatprep.subr.mxu0 0.0
    %643 = vmatpush1.msra.mxu0 0.0
    %644 = vmatprep.subr.mxu0 0.0
    %645 = vmatpush1.msra.mxu0 0.0
    %646 = vmatprep.subr.mxu0 0.0
    %647 = vmatpush1.msra.mxu0 0.0
    %648 = vmatprep.subr.mxu0 0.0
    %649 = vmatpush1.msra.mxu0 0.0
    %650 = vmatprep.subr.mxu0 0.0
    %651 = vmatpush1.msra.mxu0 0.0
    %652 = vmatprep.subr.mxu0 0.0
    %653 = vmatpush1.msra.mxu0 0.0
    %654 = vmatprep.subr.mxu0 0.0
    %655 = vmatpush1.msra.mxu0 0.0
    %656 = vmatprep.subr.mxu0 0.0
    %657 = vmatpush1.msra.mxu0 0.0
    %658 = vmatprep.subr.mxu0 0.0
    %659 = vmatpush1.msra.mxu0 0.0
    %660 = vmatprep.subr.mxu0 0.0
    %661 = vmatpush1.msra.mxu0 0.0
    %662 = vmatprep.subr.mxu0 0.0
    %663 = vmatpush1.msra.mxu0 0.0
    %664 = vmatprep.subr.mxu0 0.0
    %665 = vmatpush1.msra.mxu0 0.0
    %666 = vmatprep.subr.mxu0 0.0
    %667 = vmatpush1.msra.mxu0 0.0
    %668 = vmatprep.subr.mxu0 0.0
    %669 = vmatpush1.msra.mxu0 0.0
    %670 = vmatprep.subr.mxu0 0.0
    %671 = vmatpush1.msra.mxu0 0.0
    %672 = vmatprep.mubr.f32.mxu0 0.0
    %673 = vmatmul.mubr.f32.gmra.mrb[0].mxu0 %v603
    %v674 = vpop.f32.mrb[0].mxu0
    %v675 = vadd.f32 0.0, %v674
    %v676 = vpop.f32.mrb[0].mxu0
    %v677 = vadd.f32 0.0, %v676
    %678 = vdwg.mxu0
    %679 = vmatprep.subr.mxu0 0.0
    %680 = vmatpush1.msra.mxu0 %v50
    %681 = vmatprep.subr.mxu0 0.0
    %682 = vmatpush1.msra.mxu0 %v53
    %683 = vmatprep.subr.mxu0 0.0
    %684 = vmatpush1.msra.mxu0 %v56
    %685 = vmatprep.subr.mxu0 0.0
    %686 = vmatpush1.msra.mxu0 %v59
    %687 = vmatprep.subr.mxu0 0.0
    %688 = vmatpush1.msra.mxu0 %v62
    %689 = vmatprep.subr.mxu0 0.0
    %690 = vmatpush1.msra.mxu0 %v65
    %691 = vmatprep.subr.mxu0 0.0
    %692 = vmatpush1.msra.mxu0 %v68
    %693 = vmatprep.subr.mxu0 0.0
    %694 = vmatpush1.msra.mxu0 %v71
    %695 = vmatprep.subr.mxu0 0.0
    %696 = vmatpush1.msra.mxu0 %v74
    %697 = vmatprep.subr.mxu0 0.0
    %698 = vmatpush1.msra.mxu0 %v77
    %699 = vmatprep.subr.mxu0 0.0
    %700 = vmatpush1.msra.mxu0 %v80
    %701 = vmatprep.subr.mxu0 0.0
    %702 = vmatpush1.msra.mxu0 %v83
    %703 = vmatprep.subr.mxu0 0.0
    %704 = vmatpush1.msra.mxu0 %v86
    %705 = vmatprep.subr.mxu0 0.0
    %706 = vmatpush1.msra.mxu0 %v89
    %707 = vmatprep.subr.mxu0 0.0
    %708 = vmatpush1.msra.mxu0 %v92
    %709 = vmatprep.subr.mxu0 0.0
    %710 = vmatpush1.msra.mxu0 %v95
    %711 = vmatprep.subr.mxu0 0.0
    %712 = vmatpush1.msra.mxu0 0.0
    %713 = vmatprep.subr.mxu0 0.0
    %714 = vmatpush1.msra.mxu0 0.0
    %715 = vmatprep.subr.mxu0 0.0
    %716 = vmatpush1.msra.mxu0 0.0
    %717 = vmatprep.subr.mxu0 0.0
    %718 = vmatpush1.msra.mxu0 0.0
    %719 = vmatprep.subr.mxu0 0.0
    %720 = vmatpush1.msra.mxu0 0.0
    %721 = vmatprep.subr.mxu0 0.0
    %722 = vmatpush1.msra.mxu0 0.0
    %723 = vmatprep.subr.mxu0 0.0
    %724 = vmatpush1.msra.mxu0 0.0
    %725 = vmatprep.subr.mxu0 0.0
    %726 = vmatpush1.msra.mxu0 0.0
    %727 = vmatprep.subr.mxu0 0.0
    %728 = vmatpush1.msra.mxu0 0.0
    %729 = vmatprep.subr.mxu0 0.0
    %730 = vmatpush1.msra.mxu0 0.0
    %731 = vmatprep.subr.mxu0 0.0
    %732 = vmatpush1.msra.mxu0 0.0
    %733 = vmatprep.subr.mxu0 0.0
    %734 = vmatpush1.msra.mxu0 0.0
    %735 = vmatprep.subr.mxu0 0.0
    %736 = vmatpush1.msra.mxu0 0.0
    %737 = vmatprep.subr.mxu0 0.0
    %738 = vmatpush1.msra.mxu0 0.0
    %739 = vmatprep.subr.mxu0 0.0
    %740 = vmatpush1.msra.mxu0 0.0
    %741 = vmatprep.subr.mxu0 0.0
    %742 = vmatpush1.msra.mxu0 0.0
    %743 = vmatprep.mubr.f32.mxu0 0.0
    %744 = vmatmul.mubr.f32.gmra.mrb[0].mxu0 %v603
    %v745 = vpop.f32.mrb[0].mxu0
    %v746 = vadd.f32 0.0, %v745
    %v747 = vpop.f32.mrb[0].mxu0
    %748 = vdwg.mxu0
    %v749 = vadd.f32 %v605, %v675
    %v750 = vxor.u32 %v749, 2147483648
    %v751 = vmul.f32 %v750, 1.442695
    %v752 = vpow.pop %v751
    %v753 = vadd.f32 %v752, 1.0
    %v754 = vrcp.pop %v753
    %v755 = vmul.f32 1.0, %v754
    %v756 = vadd.f32 %v606, %v677
    %v757 = vxor.u32 %v756, 2147483648
    %v758 = vmul.f32 %v757, 1.442695
    %v759 = vpow.pop %v758
    %v760 = vadd.f32 %v759, 1.0
    %v761 = vrcp.pop %v760
    %v762 = vmul.f32 1.0, %v761
    %v763 = vadd.f32 %v746, %v101
    %v764 = vmul.f32 %v755, %v763
    %v765 = vadd.f32 %v607, %v764
    %v766 = vtanh.pop %v765
    %v767 = vsub.f32 1.0, %v762
    %v768 = vmul.f32 %v767, %v766
    %v769 = vmul.f32 %v762, %v603
    %v770 = vadd.f32 %v768, %v769
    %s771 = scalar_lea.vmem [#allocation2], 96
    %v772 = vld [vmem:[%s771] sm:$0xff]
    %v773 = vld [vmem:[%s771 + $0x8] sm:$0xff]
    %v774 = vld [vmem:[%s771 + $0x10] sm:$0xff]
    %775 = vmatprep.subr.mxu0 %v49
    %776 = vmatpush1.msra.mxu0 %v48
    %777 = vmatprep.subr.mxu0 %v52
    %778 = vmatpush1.msra.mxu0 %v51
    %779 = vmatprep.subr.mxu0 %v55
    %780 = vmatpush1.msra.mxu0 %v54
    %781 = vmatprep.subr.mxu0 %v58
    %782 = vmatpush1.msra.mxu0 %v57
    %783 = vmatprep.subr.mxu0 %v61
    %784 = vmatpush1.msra.mxu0 %v60
    %785 = vmatprep.subr.mxu0 %v64
    %786 = vmatpush1.msra.mxu0 %v63
    %787 = vmatprep.subr.mxu0 %v67
    %788 = vmatpush1.msra.mxu0 %v66
    %789 = vmatprep.subr.mxu0 %v70
    %790 = vmatpush1.msra.mxu0 %v69
    %791 = vmatprep.subr.mxu0 %v73
    %792 = vmatpush1.msra.mxu0 %v72
    %793 = vmatprep.subr.mxu0 %v76
    %794 = vmatpush1.msra.mxu0 %v75
    %795 = vmatprep.subr.mxu0 %v79
    %796 = vmatpush1.msra.mxu0 %v78
    %797 = vmatprep.subr.mxu0 %v82
    %798 = vmatpush1.msra.mxu0 %v81
    %799 = vmatprep.subr.mxu0 %v85
    %800 = vmatpush1.msra.mxu0 %v84
    %801 = vmatprep.subr.mxu0 %v88
    %802 = vmatpush1.msra.mxu0 %v87
    %803 = vmatprep.subr.mxu0 %v91
    %804 = vmatpush1.msra.mxu0 %v90
    %805 = vmatprep.subr.mxu0 %v94
    %806 = vmatpush1.msra.mxu0 %v93
    %807 = vmatprep.subr.mxu0 0.0
    %808 = vmatpush1.msra.mxu0 0.0
    %809 = vmatprep.subr.mxu0 0.0
    %810 = vmatpush1.msra.mxu0 0.0
    %811 = vmatprep.subr.mxu0 0.0
    %812 = vmatpush1.msra.mxu0 0.0
    %813 = vmatprep.subr.mxu0 0.0
    %814 = vmatpush1.msra.mxu0 0.0
    %815 = vmatprep.subr.mxu0 0.0
    %816 = vmatpush1.msra.mxu0 0.0
    %817 = vmatprep.subr.mxu0 0.0
    %818 = vmatpush1.msra.mxu0 0.0
    %819 = vmatprep.subr.mxu0 0.0
    %820 = vmatpush1.msra.mxu0 0.0
    %821 = vmatprep.subr.mxu0 0.0
    %822 = vmatpush1.msra.mxu0 0.0
    %823 = vmatprep.subr.mxu0 0.0
    %824 = vmatpush1.msra.mxu0 0.0
    %825 = vmatprep.subr.mxu0 0.0
    %826 = vmatpush1.msra.mxu0 0.0
    %827 = vmatprep.subr.mxu0 0.0
    %828 = vmatpush1.msra.mxu0 0.0
    %829 = vmatprep.subr.mxu0 0.0
    %830 = vmatpush1.msra.mxu0 0.0
    %831 = vmatprep.subr.mxu0 0.0
    %832 = vmatpush1.msra.mxu0 0.0
    %833 = vmatprep.subr.mxu0 0.0
    %834 = vmatpush1.msra.mxu0 0.0
    %835 = vmatprep.subr.mxu0 0.0
    %836 = vmatpush1.msra.mxu0 0.0
    %837 = vmatprep.subr.mxu0 0.0
    %838 = vmatpush1.msra.mxu0 0.0
    %839 = vmatprep.mubr.f32.mxu0 0.0
    %840 = vmatmul.mubr.f32.gmra.mrb[0].mxu0 %v770
    %v841 = vpop.f32.mrb[0].mxu0
    %v842 = vadd.f32 0.0, %v841
    %v843 = vpop.f32.mrb[0].mxu0
    %v844 = vadd.f32 0.0, %v843
    %845 = vdwg.mxu0
    %846 = vmatprep.subr.mxu0 0.0
    %847 = vmatpush1.msra.mxu0 %v50
    %848 = vmatprep.subr.mxu0 0.0
    %849 = vmatpush1.msra.mxu0 %v53
    %850 = vmatprep.subr.mxu0 0.0
    %851 = vmatpush1.msra.mxu0 %v56
    %852 = vmatprep.subr.mxu0 0.0
    %853 = vmatpush1.msra.mxu0 %v59
    %854 = vmatprep.subr.mxu0 0.0
    %855 = vmatpush1.msra.mxu0 %v62
    %856 = vmatprep.subr.mxu0 0.0
    %857 = vmatpush1.msra.mxu0 %v65
    %858 = vmatprep.subr.mxu0 0.0
    %859 = vmatpush1.msra.mxu0 %v68
    %860 = vmatprep.subr.mxu0 0.0
    %861 = vmatpush1.msra.mxu0 %v71
    %862 = vmatprep.subr.mxu0 0.0
    %863 = vmatpush1.msra.mxu0 %v74
    %864 = vmatprep.subr.mxu0 0.0
    %865 = vmatpush1.msra.mxu0 %v77
    %866 = vmatprep.subr.mxu0 0.0
    %867 = vmatpush1.msra.mxu0 %v80
    %868 = vmatprep.subr.mxu0 0.0
    %869 = vmatpush1.msra.mxu0 %v83
    %870 = vmatprep.subr.mxu0 0.0
    %871 = vmatpush1.msra.mxu0 %v86
    %872 = vmatprep.subr.mxu0 0.0
    %873 = vmatpush1.msra.mxu0 %v89
    %874 = vmatprep.subr.mxu0 0.0
    %875 = vmatpush1.msra.mxu0 %v92
    %876 = vmatprep.subr.mxu0 0.0
    %877 = vmatpush1.msra.mxu0 %v95
    %878 = vmatprep.subr.mxu0 0.0
    %879 = vmatpush1.msra.mxu0 0.0
    %880 = vmatprep.subr.mxu0 0.0
    %881 = vmatpush1.msra.mxu0 0.0
    %882 = vmatprep.subr.mxu0 0.0
    %883 = vmatpush1.msra.mxu0 0.0
    %884 = vmatprep.subr.mxu0 0.0
    %885 = vmatpush1.msra.mxu0 0.0
    %886 = vmatprep.subr.mxu0 0.0
    %887 = vmatpush1.msra.mxu0 0.0
    %888 = vmatprep.subr.mxu0 0.0
    %889 = vmatpush1.msra.mxu0 0.0
    %890 = vmatprep.subr.mxu0 0.0
    %891 = vmatpush1.msra.mxu0 0.0
    %892 = vmatprep.subr.mxu0 0.0
    %893 = vmatpush1.msra.mxu0 0.0
    %894 = vmatprep.subr.mxu0 0.0
    %895 = vmatpush1.msra.mxu0 0.0
    %896 = vmatprep.subr.mxu0 0.0
    %897 = vmatpush1.msra.mxu0 0.0
    %898 = vmatprep.subr.mxu0 0.0
    %899 = vmatpush1.msra.mxu0 0.0
    %900 = vmatprep.subr.mxu0 0.0
    %901 = vmatpush1.msra.mxu0 0.0
    %902 = vmatprep.subr.mxu0 0.0
    %903 = vmatpush1.msra.mxu0 0.0
    %904 = vmatprep.subr.mxu0 0.0
    %905 = vmatpush1.msra.mxu0 0.0
    %906 = vmatprep.subr.mxu0 0.0
    %907 = vmatpush1.msra.mxu0 0.0
    %908 = vmatprep.subr.mxu0 0.0
    %909 = vmatpush1.msra.mxu0 0.0
    %910 = vmatprep.mubr.f32.mxu0 0.0
    %911 = vmatmul.mubr.f32.gmra.mrb[0].mxu0 %v770
    %v912 = vpop.f32.mrb[0].mxu0
    %v913 = vadd.f32 0.0, %v912
    %v914 = vpop.f32.mrb[0].mxu0
    %915 = vdwg.mxu0
    %v916 = vadd.f32 %v772, %v842
    %v917 = vxor.u32 %v916, 2147483648
    %v918 = vmul.f32 %v917, 1.442695
    %v919 = vpow.pop %v918
    %v920 = vadd.f32 %v919, 1.0
    %v921 = vrcp.pop %v920
    %v922 = vmul.f32 1.0, %v921
    %v923 = vadd.f32 %v773, %v844
    %v924 = vxor.u32 %v923, 2147483648
    %v925 = vmul.f32 %v924, 1.442695
    %v926 = vpow.pop %v925
    %v927 = vadd.f32 %v926, 1.0
    %v928 = vrcp.pop %v927
    %v929 = vmul.f32 1.0, %v928
    %v930 = vadd.f32 %v913, %v101
    %v931 = vmul.f32 %v922, %v930
    %v932 = vadd.f32 %v774, %v931
    %v933 = vtanh.pop %v932
    %v934 = vsub.f32 1.0, %v929
    %v935 = vmul.f32 %v934, %v933
    %v936 = vmul.f32 %v929, %v770
    %v937 = vadd.f32 %v935, %v936
    %s938 = scalar_lea.vmem [#allocation2], 120
    %v939 = vld [vmem:[%s938] sm:$0xff]
    %v940 = vld [vmem:[%s938 + $0x8] sm:$0xff]
    %v941 = vld [vmem:[%s938 + $0x10] sm:$0xff]
    %942 = vmatprep.subr.mxu0 %v49
    %943 = vmatpush1.msra.mxu0 %v48
    %944 = vmatprep.subr.mxu0 %v52
    %945 = vmatpush1.msra.mxu0 %v51
    %946 = vmatprep.subr.mxu0 %v55
    %947 = vmatpush1.msra.mxu0 %v54
    %948 = vmatprep.subr.mxu0 %v58
    %949 = vmatpush1.msra.mxu0 %v57
    %950 = vmatprep.subr.mxu0 %v61
    %951 = vmatpush1.msra.mxu0 %v60
    %952 = vmatprep.subr.mxu0 %v64
    %953 = vmatpush1.msra.mxu0 %v63
    %954 = vmatprep.subr.mxu0 %v67
    %955 = vmatpush1.msra.mxu0 %v66
    %956 = vmatprep.subr.mxu0 %v70
    %957 = vmatpush1.msra.mxu0 %v69
    %958 = vmatprep.subr.mxu0 %v73
    %959 = vmatpush1.msra.mxu0 %v72
    %960 = vmatprep.subr.mxu0 %v76
    %961 = vmatpush1.msra.mxu0 %v75
    %962 = vmatprep.subr.mxu0 %v79
    %963 = vmatpush1.msra.mxu0 %v78
    %964 = vmatprep.subr.mxu0 %v82
    %965 = vmatpush1.msra.mxu0 %v81
    %966 = vmatprep.subr.mxu0 %v85
    %967 = vmatpush1.msra.mxu0 %v84
    %968 = vmatprep.subr.mxu0 %v88
    %969 = vmatpush1.msra.mxu0 %v87
    %970 = vmatprep.subr.mxu0 %v91
    %971 = vmatpush1.msra.mxu0 %v90
    %972 = vmatprep.subr.mxu0 %v94
    %973 = vmatpush1.msra.mxu0 %v93
    %974 = vmatprep.subr.mxu0 0.0
    %975 = vmatpush1.msra.mxu0 0.0
    %976 = vmatprep.subr.mxu0 0.0
    %977 = vmatpush1.msra.mxu0 0.0
    %978 = vmatprep.subr.mxu0 0.0
    %979 = vmatpush1.msra.mxu0 0.0
    %980 = vmatprep.subr.mxu0 0.0
    %981 = vmatpush1.msra.mxu0 0.0
    %982 = vmatprep.subr.mxu0 0.0
    %983 = vmatpush1.msra.mxu0 0.0
    %984 = vmatprep.subr.mxu0 0.0
    %985 = vmatpush1.msra.mxu0 0.0
    %986 = vmatprep.subr.mxu0 0.0
    %987 = vmatpush1.msra.mxu0 0.0
    %988 = vmatprep.subr.mxu0 0.0
    %989 = vmatpush1.msra.mxu0 0.0
    %990 = vmatprep.subr.mxu0 0.0
    %991 = vmatpush1.msra.mxu0 0.0
    %992 = vmatprep.subr.mxu0 0.0
    %993 = vmatpush1.msra.mxu0 0.0
    %994 = vmatprep.subr.mxu0 0.0
    %995 = vmatpush1.msra.mxu0 0.0
    %996 = vmatprep.subr.mxu0 0.0
    %997 = vmatpush1.msra.mxu0 0.0
    %998 = vmatprep.subr.mxu0 0.0
    %999 = vmatpush1.msra.mxu0 0.0
    %1000 = vmatprep.subr.mxu0 0.0
    %1001 = vmatpush1.msra.mxu0 0.0
    %1002 = vmatprep.subr.mxu0 0.0
    %1003 = vmatpush1.msra.mxu0 0.0
    %1004 = vmatprep.subr.mxu0 0.0
    %1005 = vmatpush1.msra.mxu0 0.0
    %1006 = vmatprep.mubr.f32.mxu0 0.0
    %1007 = vmatmul.mubr.f32.gmra.mrb[0].mxu0 %v937
    %v1008 = vpop.f32.mrb[0].mxu0
    %v1009 = vadd.f32 0.0, %v1008
    %v1010 = vpop.f32.mrb[0].mxu0
    %v1011 = vadd.f32 0.0, %v1010
    %1012 = vdwg.mxu0
    %1013 = vmatprep.subr.mxu0 0.0
    %1014 = vmatpush1.msra.mxu0 %v50
    %1015 = vmatprep.subr.mxu0 0.0
    %1016 = vmatpush1.msra.mxu0 %v53
    %1017 = vmatprep.subr.mxu0 0.0
    %1018 = vmatpush1.msra.mxu0 %v56
    %1019 = vmatprep.subr.mxu0 0.0
    %1020 = vmatpush1.msra.mxu0 %v59
    %1021 = vmatprep.subr.mxu0 0.0
    %1022 = vmatpush1.msra.mxu0 %v62
    %1023 = vmatprep.subr.mxu0 0.0
    %1024 = vmatpush1.msra.mxu0 %v65
    %1025 = vmatprep.subr.mxu0 0.0
    %1026 = vmatpush1.msra.mxu0 %v68
    %1027 = vmatprep.subr.mxu0 0.0
    %1028 = vmatpush1.msra.mxu0 %v71
    %1029 = vmatprep.subr.mxu0 0.0
    %1030 = vmatpush1.msra.mxu0 %v74
    %1031 = vmatprep.subr.mxu0 0.0
    %1032 = vmatpush1.msra.mxu0 %v77
    %1033 = vmatprep.subr.mxu0 0.0
    %1034 = vmatpush1.msra.mxu0 %v80
    %1035 = vmatprep.subr.mxu0 0.0
    %1036 = vmatpush1.msra.mxu0 %v83
    %1037 = vmatprep.subr.mxu0 0.0
    %1038 = vmatpush1.msra.mxu0 %v86
    %1039 = vmatprep.subr.mxu0 0.0
    %1040 = vmatpush1.msra.mxu0 %v89
    %1041 = vmatprep.subr.mxu0 0.0
    %1042 = vmatpush1.msra.mxu0 %v92
    %1043 = vmatprep.subr.mxu0 0.0
    %1044 = vmatpush1.msra.mxu0 %v95
    %1045 = vmatprep.subr.mxu0 0.0
    %1046 = vmatpush1.msra.mxu0 0.0
    %1047 = vmatprep.subr.mxu0 0.0
    %1048 = vmatpush1.msra.mxu0 0.0
    %1049 = vmatprep.subr.mxu0 0.0
    %1050 = vmatpush1.msra.mxu0 0.0
    %1051 = vmatprep.subr.mxu0 0.0
    %1052 = vmatpush1.msra.mxu0 0.0
    %1053 = vmatprep.subr.mxu0 0.0
    %1054 = vmatpush1.msra.mxu0 0.0
    %1055 = vmatprep.subr.mxu0 0.0
    %1056 = vmatpush1.msra.mxu0 0.0
    %1057 = vmatprep.subr.mxu0 0.0
    %1058 = vmatpush1.msra.mxu0 0.0
    %1059 = vmatprep.subr.mxu0 0.0
    %1060 = vmatpush1.msra.mxu0 0.0
    %1061 = vmatprep.subr.mxu0 0.0
    %1062 = vmatpush1.msra.mxu0 0.0
    %1063 = vmatprep.subr.mxu0 0.0
    %1064 = vmatpush1.msra.mxu0 0.0
    %1065 = vmatprep.subr.mxu0 0.0
    %1066 = vmatpush1.msra.mxu0 0.0
    %1067 = vmatprep.subr.mxu0 0.0
    %1068 = vmatpush1.msra.mxu0 0.0
    %1069 = vmatprep.subr.mxu0 0.0
    %1070 = vmatpush1.msra.mxu0 0.0
    %1071 = vmatprep.subr.mxu0 0.0
    %1072 = vmatpush1.msra.mxu0 0.0
    %1073 = vmatprep.subr.mxu0 0.0
    %1074 = vmatpush1.msra.mxu0 0.0
    %1075 = vmatprep.subr.mxu0 0.0
    %1076 = vmatpush1.msra.mxu0 0.0
    %1077 = vmatprep.mubr.f32.mxu0 0.0
    %1078 = vmatmul.mubr.f32.gmra.mrb[0].mxu0 %v937
    %v1079 = vpop.f32.mrb[0].mxu0
    %v1080 = vadd.f32 0.0, %v1079
    %v1081 = vpop.f32.mrb[0].mxu0
    %1082 = vdwg.mxu0
    %v1083 = vadd.f32 %v939, %v1009
    %v1084 = vxor.u32 %v1083, 2147483648
    %v1085 = vmul.f32 %v1084, 1.442695
    %v1086 = vpow.pop %v1085
    %v1087 = vadd.f32 %v1086, 1.0
    %v1088 = vrcp.pop %v1087
    %v1089 = vmul.f32 1.0, %v1088
    %v1090 = vadd.f32 %v940, %v1011
    %v1091 = vxor.u32 %v1090, 2147483648
    %v1092 = vmul.f32 %v1091, 1.442695
    %v1093 = vpow.pop %v1092
    %v1094 = vadd.f32 %v1093, 1.0
    %v1095 = vrcp.pop %v1094
    %v1096 = vmul.f32 1.0, %v1095
    %v1097 = vadd.f32 %v1080, %v101
    %v1098 = vmul.f32 %v1089, %v1097
    %v1099 = vadd.f32 %v941, %v1098
    %v1100 = vtanh.pop %v1099
    %v1101 = vsub.f32 1.0, %v1096
    %v1102 = vmul.f32 %v1101, %v1100
    %v1103 = vmul.f32 %v1096, %v937
    %v1104 = vadd.f32 %v1102, %v1103
    %s1105 = scalar_lea.vmem [#allocation2], 144
    %v1106 = vld [vmem:[%s1105] sm:$0xff]
    %v1107 = vld [vmem:[%s1105 + $0x8] sm:$0xff]
    %v1108 = vld [vmem:[%s1105 + $0x10] sm:$0xff]
    %1109 = vmatprep.subr.mxu0 %v49
    %1110 = vmatpush1.msra.mxu0 %v48
    %1111 = vmatprep.subr.mxu0 %v52
    %1112 = vmatpush1.msra.mxu0 %v51
    %1113 = vmatprep.subr.mxu0 %v55
    %1114 = vmatpush1.msra.mxu0 %v54
    %1115 = vmatprep.subr.mxu0 %v58
    %1116 = vmatpush1.msra.mxu0 %v57
    %1117 = vmatprep.subr.mxu0 %v61
    %1118 = vmatpush1.msra.mxu0 %v60
    %1119 = vmatprep.subr.mxu0 %v64
    %1120 = vmatpush1.msra.mxu0 %v63
    %1121 = vmatprep.subr.mxu0 %v67
    %1122 = vmatpush1.msra.mxu0 %v66
    %1123 = vmatprep.subr.mxu0 %v70
    %1124 = vmatpush1.msra.mxu0 %v69
    %1125 = vmatprep.subr.mxu0 %v73
    %1126 = vmatpush1.msra.mxu0 %v72
    %1127 = vmatprep.subr.mxu0 %v76
    %1128 = vmatpush1.msra.mxu0 %v75
    %1129 = vmatprep.subr.mxu0 %v79
    %1130 = vmatpush1.msra.mxu0 %v78
    %1131 = vmatprep.subr.mxu0 %v82
    %1132 = vmatpush1.msra.mxu0 %v81
    %1133 = vmatprep.subr.mxu0 %v85
    %1134 = vmatpush1.msra.mxu0 %v84
    %1135 = vmatprep.subr.mxu0 %v88
    %1136 = vmatpush1.msra.mxu0 %v87
    %1137 = vmatprep.subr.mxu0 %v91
    %1138 = vmatpush1.msra.mxu0 %v90
    %1139 = vmatprep.subr.mxu0 %v94
    %1140 = vmatpush1.msra.mxu0 %v93
    %1141 = vmatprep.subr.mxu0 0.0
    %1142 = vmatpush1.msra.mxu0 0.0
    %1143 = vmatprep.subr.mxu0 0.0
    %1144 = vmatpush1.msra.mxu0 0.0
    %1145 = vmatprep.subr.mxu0 0.0
    %1146 = vmatpush1.msra.mxu0 0.0
    %1147 = vmatprep.subr.mxu0 0.0
    %1148 = vmatpush1.msra.mxu0 0.0
    %1149 = vmatprep.subr.mxu0 0.0
    %1150 = vmatpush1.msra.mxu0 0.0
    %1151 = vmatprep.subr.mxu0 0.0
    %1152 = vmatpush1.msra.mxu0 0.0
    %1153 = vmatprep.subr.mxu0 0.0
    %1154 = vmatpush1.msra.mxu0 0.0
    %1155 = vmatprep.subr.mxu0 0.0
    %1156 = vmatpush1.msra.mxu0 0.0
    %1157 = vmatprep.subr.mxu0 0.0
    %1158 = vmatpush1.msra.mxu0 0.0
    %1159 = vmatprep.subr.mxu0 0.0
    %1160 = vmatpush1.msra.mxu0 0.0
    %1161 = vmatprep.subr.mxu0 0.0
    %1162 = vmatpush1.msra.mxu0 0.0
    %1163 = vmatprep.subr.mxu0 0.0
    %1164 = vmatpush1.msra.mxu0 0.0
    %1165 = vmatprep.subr.mxu0 0.0
    %1166 = vmatpush1.msra.mxu0 0.0
    %1167 = vmatprep.subr.mxu0 0.0
    %1168 = vmatpush1.msra.mxu0 0.0
    %1169 = vmatprep.subr.mxu0 0.0
    %1170 = vmatpush1.msra.mxu0 0.0
    %1171 = vmatprep.subr.mxu0 0.0
    %1172 = vmatpush1.msra.mxu0 0.0
    %1173 = vmatprep.mubr.f32.mxu0 0.0
    %1174 = vmatmul.mubr.f32.gmra.mrb[0].mxu0 %v1104
    %v1175 = vpop.f32.mrb[0].mxu0
    %v1176 = vadd.f32 0.0, %v1175
    %v1177 = vpop.f32.mrb[0].mxu0
    %v1178 = vadd.f32 0.0, %v1177
    %1179 = vdwg.mxu0
    %1180 = vmatprep.subr.mxu0 0.0
    %1181 = vmatpush1.msra.mxu0 %v50
    %1182 = vmatprep.subr.mxu0 0.0
    %1183 = vmatpush1.msra.mxu0 %v53
    %1184 = vmatprep.subr.mxu0 0.0
    %1185 = vmatpush1.msra.mxu0 %v56
    %1186 = vmatprep.subr.mxu0 0.0
    %1187 = vmatpush1.msra.mxu0 %v59
    %1188 = vmatprep.subr.mxu0 0.0
    %1189 = vmatpush1.msra.mxu0 %v62
    %1190 = vmatprep.subr.mxu0 0.0
    %1191 = vmatpush1.msra.mxu0 %v65
    %1192 = vmatprep.subr.mxu0 0.0
    %1193 = vmatpush1.msra.mxu0 %v68
    %1194 = vmatprep.subr.mxu0 0.0
    %1195 = vmatpush1.msra.mxu0 %v71
    %1196 = vmatprep.subr.mxu0 0.0
    %1197 = vmatpush1.msra.mxu0 %v74
    %1198 = vmatprep.subr.mxu0 0.0
    %1199 = vmatpush1.msra.mxu0 %v77
    %1200 = vmatprep.subr.mxu0 0.0
    %1201 = vmatpush1.msra.mxu0 %v80
    %1202 = vmatprep.subr.mxu0 0.0
    %1203 = vmatpush1.msra.mxu0 %v83
    %1204 = vmatprep.subr.mxu0 0.0
    %1205 = vmatpush1.msra.mxu0 %v86
    %1206 = vmatprep.subr.mxu0 0.0
    %1207 = vmatpush1.msra.mxu0 %v89
    %1208 = vmatprep.subr.mxu0 0.0
    %1209 = vmatpush1.msra.mxu0 %v92
    %1210 = vmatprep.subr.mxu0 0.0
    %1211 = vmatpush1.msra.mxu0 %v95
    %1212 = vmatprep.subr.mxu0 0.0
    %1213 = vmatpush1.msra.mxu0 0.0
    %1214 = vmatprep.subr.mxu0 0.0
    %1215 = vmatpush1.msra.mxu0 0.0
    %1216 = vmatprep.subr.mxu0 0.0
    %1217 = vmatpush1.msra.mxu0 0.0
    %1218 = vmatprep.subr.mxu0 0.0
    %1219 = vmatpush1.msra.mxu0 0.0
    %1220 = vmatprep.subr.mxu0 0.0
    %1221 = vmatpush1.msra.mxu0 0.0
    %1222 = vmatprep.subr.mxu0 0.0
    %1223 = vmatpush1.msra.mxu0 0.0
    %1224 = vmatprep.subr.mxu0 0.0
    %1225 = vmatpush1.msra.mxu0 0.0
    %1226 = vmatprep.subr.mxu0 0.0
    %1227 = vmatpush1.msra.mxu0 0.0
    %1228 = vmatprep.subr.mxu0 0.0
    %1229 = vmatpush1.msra.mxu0 0.0
    %1230 = vmatprep.subr.mxu0 0.0
    %1231 = vmatpush1.msra.mxu0 0.0
    %1232 = vmatprep.subr.mxu0 0.0
    %1233 = vmatpush1.msra.mxu0 0.0
    %1234 = vmatprep.subr.mxu0 0.0
    %1235 = vmatpush1.msra.mxu0 0.0
    %1236 = vmatprep.subr.mxu0 0.0
    %1237 = vmatpush1.msra.mxu0 0.0
    %1238 = vmatprep.subr.mxu0 0.0
    %1239 = vmatpush1.msra.mxu0 0.0
    %1240 = vmatprep.subr.mxu0 0.0
    %1241 = vmatpush1.msra.mxu0 0.0
    %1242 = vmatprep.subr.mxu0 0.0
    %1243 = vmatpush1.msra.mxu0 0.0
    %1244 = vmatprep.mubr.f32.mxu0 0.0
    %1245 = vmatmul.mubr.f32.gmra.mrb[0].mxu0 %v1104
    %v1246 = vpop.f32.mrb[0].mxu0
    %v1247 = vadd.f32 0.0, %v1246
    %v1248 = vpop.f32.mrb[0].mxu0
    %1249 = vdwg.mxu0
    %v1250 = vadd.f32 %v1106, %v1176
    %v1251 = vxor.u32 %v1250, 2147483648
    %v1252 = vmul.f32 %v1251, 1.442695
    %v1253 = vpow.pop %v1252
    %v1254 = vadd.f32 %v1253, 1.0
    %v1255 = vrcp.pop %v1254
    %v1256 = vmul.f32 1.0, %v1255
    %v1257 = vadd.f32 %v1107, %v1178
    %v1258 = vxor.u32 %v1257, 2147483648
    %v1259 = vmul.f32 %v1258, 1.442695
    %v1260 = vpow.pop %v1259
    %v1261 = vadd.f32 %v1260, 1.0
    %v1262 = vrcp.pop %v1261
    %v1263 = vmul.f32 1.0, %v1262
    %v1264 = vadd.f32 %v1247, %v101
    %v1265 = vmul.f32 %v1256, %v1264
    %v1266 = vadd.f32 %v1108, %v1265
    %v1267 = vtanh.pop %v1266
    %v1268 = vsub.f32 1.0, %v1263
    %v1269 = vmul.f32 %v1268, %v1267
    %v1270 = vmul.f32 %v1263, %v1104
    %v1271 = vadd.f32 %v1269, %v1270
    %s1272 = scalar_lea.vmem [#allocation2], 168
    %v1273 = vld [vmem:[%s1272] sm:$0xff]
    %v1274 = vld [vmem:[%s1272 + $0x8] sm:$0xff]
    %v1275 = vld [vmem:[%s1272 + $0x10] sm:$0xff]
    %1276 = vmatprep.subr.mxu0 %v49
    %1277 = vmatpush1.msra.mxu0 %v48
    %1278 = vmatprep.subr.mxu0 %v52
    %1279 = vmatpush1.msra.mxu0 %v51
    %1280 = vmatprep.subr.mxu0 %v55
    %1281 = vmatpush1.msra.mxu0 %v54
    %1282 = vmatprep.subr.mxu0 %v58
    %1283 = vmatpush1.msra.mxu0 %v57
    %1284 = vmatprep.subr.mxu0 %v61
    %1285 = vmatpush1.msra.mxu0 %v60
    %1286 = vmatprep.subr.mxu0 %v64
    %1287 = vmatpush1.msra.mxu0 %v63
    %1288 = vmatprep.subr.mxu0 %v67
    %1289 = vmatpush1.msra.mxu0 %v66
    %1290 = vmatprep.subr.mxu0 %v70
    %1291 = vmatpush1.msra.mxu0 %v69
    %1292 = vmatprep.subr.mxu0 %v73
    %1293 = vmatpush1.msra.mxu0 %v72
    %1294 = vmatprep.subr.mxu0 %v76
    %1295 = vmatpush1.msra.mxu0 %v75
    %1296 = vmatprep.subr.mxu0 %v79
    %1297 = vmatpush1.msra.mxu0 %v78
    %1298 = vmatprep.subr.mxu0 %v82
    %1299 = vmatpush1.msra.mxu0 %v81
    %1300 = vmatprep.subr.mxu0 %v85
    %1301 = vmatpush1.msra.mxu0 %v84
    %1302 = vmatprep.subr.mxu0 %v88
    %1303 = vmatpush1.msra.mxu0 %v87
    %1304 = vmatprep.subr.mxu0 %v91
    %1305 = vmatpush1.msra.mxu0 %v90
    %1306 = vmatprep.subr.mxu0 %v94
    %1307 = vmatpush1.msra.mxu0 %v93
    %1308 = vmatprep.subr.mxu0 0.0
    %1309 = vmatpush1.msra.mxu0 0.0
    %1310 = vmatprep.subr.mxu0 0.0
    %1311 = vmatpush1.msra.mxu0 0.0
    %1312 = vmatprep.subr.mxu0 0.0
    %1313 = vmatpush1.msra.mxu0 0.0
    %1314 = vmatprep.subr.mxu0 0.0
    %1315 = vmatpush1.msra.mxu0 0.0
    %1316 = vmatprep.subr.mxu0 0.0
    %1317 = vmatpush1.msra.mxu0 0.0
    %1318 = vmatprep.subr.mxu0 0.0
    %1319 = vmatpush1.msra.mxu0 0.0
    %1320 = vmatprep.subr.mxu0 0.0
    %1321 = vmatpush1.msra.mxu0 0.0
    %1322 = vmatprep.subr.mxu0 0.0
    %1323 = vmatpush1.msra.mxu0 0.0
    %1324 = vmatprep.subr.mxu0 0.0
    %1325 = vmatpush1.msra.mxu0 0.0
    %1326 = vmatprep.subr.mxu0 0.0
    %1327 = vmatpush1.msra.mxu0 0.0
    %1328 = vmatprep.subr.mxu0 0.0
    %1329 = vmatpush1.msra.mxu0 0.0
    %1330 = vmatprep.subr.mxu0 0.0
    %1331 = vmatpush1.msra.mxu0 0.0
    %1332 = vmatprep.subr.mxu0 0.0
    %1333 = vmatpush1.msra.mxu0 0.0
    %1334 = vmatprep.subr.mxu0 0.0
    %1335 = vmatpush1.msra.mxu0 0.0
    %1336 = vmatprep.subr.mxu0 0.0
    %1337 = vmatpush1.msra.mxu0 0.0
    %1338 = vmatprep.subr.mxu0 0.0
    %1339 = vmatpush1.msra.mxu0 0.0
    %1340 = vmatprep.mubr.f32.mxu0 0.0
    %1341 = vmatmul.mubr.f32.gmra.mrb[0].mxu0 %v1271
    %v1342 = vpop.f32.mrb[0].mxu0
    %v1343 = vadd.f32 0.0, %v1342
    %v1344 = vpop.f32.mrb[0].mxu0
    %v1345 = vadd.f32 0.0, %v1344
    %1346 = vdwg.mxu0
    %1347 = vmatprep.subr.mxu0 0.0
    %1348 = vmatpush1.msra.mxu0 %v50
    %1349 = vmatprep.subr.mxu0 0.0
    %1350 = vmatpush1.msra.mxu0 %v53
    %1351 = vmatprep.subr.mxu0 0.0
    %1352 = vmatpush1.msra.mxu0 %v56
    %1353 = vmatprep.subr.mxu0 0.0
    %1354 = vmatpush1.msra.mxu0 %v59
    %1355 = vmatprep.subr.mxu0 0.0
    %1356 = vmatpush1.msra.mxu0 %v62
    %1357 = vmatprep.subr.mxu0 0.0
    %1358 = vmatpush1.msra.mxu0 %v65
    %1359 = vmatprep.subr.mxu0 0.0
    %1360 = vmatpush1.msra.mxu0 %v68
    %1361 = vmatprep.subr.mxu0 0.0
    %1362 = vmatpush1.msra.mxu0 %v71
    %1363 = vmatprep.subr.mxu0 0.0
    %1364 = vmatpush1.msra.mxu0 %v74
    %1365 = vmatprep.subr.mxu0 0.0
    %1366 = vmatpush1.msra.mxu0 %v77
    %1367 = vmatprep.subr.mxu0 0.0
    %1368 = vmatpush1.msra.mxu0 %v80
    %1369 = vmatprep.subr.mxu0 0.0
    %1370 = vmatpush1.msra.mxu0 %v83
    %1371 = vmatprep.subr.mxu0 0.0
    %1372 = vmatpush1.msra.mxu0 %v86
    %1373 = vmatprep.subr.mxu0 0.0
    %1374 = vmatpush1.msra.mxu0 %v89
    %1375 = vmatprep.subr.mxu0 0.0
    %1376 = vmatpush1.msra.mxu0 %v92
    %1377 = vmatprep.subr.mxu0 0.0
    %1378 = vmatpush1.msra.mxu0 %v95
    %1379 = vmatprep.subr.mxu0 0.0
    %1380 = vmatpush1.msra.mxu0 0.0
    %1381 = vmatprep.subr.mxu0 0.0
    %1382 = vmatpush1.msra.mxu0 0.0
    %1383 = vmatprep.subr.mxu0 0.0
    %1384 = vmatpush1.msra.mxu0 0.0
    %1385 = vmatprep.subr.mxu0 0.0
    %1386 = vmatpush1.msra.mxu0 0.0
    %1387 = vmatprep.subr.mxu0 0.0
    %1388 = vmatpush1.msra.mxu0 0.0
    %1389 = vmatprep.subr.mxu0 0.0
    %1390 = vmatpush1.msra.mxu0 0.0
    %1391 = vmatprep.subr.mxu0 0.0
    %1392 = vmatpush1.msra.mxu0 0.0
    %1393 = vmatprep.subr.mxu0 0.0
    %1394 = vmatpush1.msra.mxu0 0.0
    %1395 = vmatprep.subr.mxu0 0.0
    %1396 = vmatpush1.msra.mxu0 0.0
    %1397 = vmatprep.subr.mxu0 0.0
    %1398 = vmatpush1.msra.mxu0 0.0
    %1399 = vmatprep.subr.mxu0 0.0
    %1400 = vmatpush1.msra.mxu0 0.0
    %1401 = vmatprep.subr.mxu0 0.0
    %1402 = vmatpush1.msra.mxu0 0.0
    %1403 = vmatprep.subr.mxu0 0.0
    %1404 = vmatpush1.msra.mxu0 0.0
    %1405 = vmatprep.subr.mxu0 0.0
    %1406 = vmatpush1.msra.mxu0 0.0
    %1407 = vmatprep.subr.mxu0 0.0
    %1408 = vmatpush1.msra.mxu0 0.0
    %1409 = vmatprep.subr.mxu0 0.0
    %1410 = vmatpush1.msra.mxu0 0.0
    %1411 = vmatprep.mubr.f32.mxu0 0.0
    %1412 = vmatmul.mubr.f32.gmra.mrb[0].mxu0 %v1271
    %v1413 = vpop.f32.mrb[0].mxu0
    %v1414 = vadd.f32 0.0, %v1413
    %v1415 = vpop.f32.mrb[0].mxu0
    %1416 = vdwg.mxu0
    %v1417 = vadd.f32 %v1273, %v1343
    %v1418 = vxor.u32 %v1417, 2147483648
    %v1419 = vmul.f32 %v1418, 1.442695
    %v1420 = vpow.pop %v1419
    %v1421 = vadd.f32 %v1420, 1.0
    %v1422 = vrcp.pop %v1421
    %v1423 = vmul.f32 1.0, %v1422
    %v1424 = vadd.f32 %v1274, %v1345
    %v1425 = vxor.u32 %v1424, 2147483648
    %v1426 = vmul.f32 %v1425, 1.442695
    %v1427 = vpow.pop %v1426
    %v1428 = vadd.f32 %v1427, 1.0
    %v1429 = vrcp.pop %v1428
    %v1430 = vmul.f32 1.0, %v1429
    %v1431 = vadd.f32 %v1414, %v101
    %v1432 = vmul.f32 %v1423, %v1431
    %v1433 = vadd.f32 %v1275, %v1432
    %v1434 = vtanh.pop %v1433
    %v1435 = vsub.f32 1.0, %v1430
    %v1436 = vmul.f32 %v1435, %v1434
    %v1437 = vmul.f32 %v1430, %v1271
    %v1438 = vadd.f32 %v1436, %v1437
    %1439 = vst [vmem:[#allocation7] sm:$0xff] %v1438
    // Predicated region
    $region26: #{tpu_custom_call.1} parent=1 // pred_check
      _
    $region27: #{tpu_custom_call.1} parent=1 // pred_check_branch
      %1441 = sbr.rel (0) target = $region29
    $region28: #{tpu_custom_call.1} parent=1 // pred_region
      %s1443 = ssub.s32 128, 128
      %1444 = vsyncadd [#allocation4], %s1443
      %s1446 = sshll.u32 [#allocation7], 4
      %s1447 = int_to_ptr.vmem [resolvable:$true] %s1446
      %1449 = dma.vmem_to_hbm [thread:$0]  %s1447, 128, %s3, [#allocation4]
    $region29: #{tpu_custom_call.1} parent=1 // pred_fallthru
      _
    // Predicated region
    $region30: #{tpu_custom_call.1} parent=1 // pred_check
      _
    $region31: #{tpu_custom_call.1} parent=1 // pred_check_branch
      %1451 = sbr.rel (0) target = $region33
    $region32: #{tpu_custom_call.1} parent=1 // pred_region
      %1452 = dma.done [#allocation4], 128
    $region33: #{tpu_custom_call.1} parent=1 // pred_fallthru
      _
    %1453 = vsyncpa [#allocation3], 1
    %1454 = vsyncpa [#allocation6], 1
    %1455 = vsyncpa [#allocation4], 1

// kernel: tpu_custom_call.1
$region0: #{tpu_custom_call.1}
  #allocation0 [shape = 'u32[]', space=smem, size = 0x4, offset = 0x4, fixed_abs, tag = 'smem constant byte address 0x4 - core index']
  #allocation1 [shape = 'u32[144,128]{1,0:T(1,128)}', space=vmem, size = 0x12000, scoped, tag = 'internal scratch']
  %s0 = inlined_call_operand.hbm [shape: f32[8,8,384], index: 0, kind: input, shape index: {}]
  %s1 = inlined_call_operand.hbm [shape: f32[128,384], index: 1, kind: input, shape index: {}]
  %s2 = inlined_call_operand.vmem [shape: f32[1,128], index: 2, kind: input, shape index: {}]
  %s3 = inlined_call_operand.hbm [shape: f32[8,128], index: 3, kind: output, shape index: {}]
  %s4 = sld [smem:[#allocation0]]
  $region34: #{tpu_custom_call.1} parent=0
    _
  %s6 = ssub.s32 1, %s4
  %s7 = scalar_select 0, %s6, %s4
  $region1: #{tpu_custom_call.1} parent=0
    #allocation2 [shape = 'u8[98304]{0}', space=vmem, size = 0x18000, scoped, tag = 'input window, operand 0, single buffered']
    #allocation3 [shape = 's32[1]{0}', space=sflag, size = 0x4, scoped, tag = 'scoped memory for tpu_custom_call.1']
    #allocation4 [shape = 's32[1]{0}', space=sflag, size = 0x4, scoped, tag = 'scoped memory for tpu_custom_call.1']
    #allocation5 [shape = 'u8[196608]{0}', space=vmem, size = 0x30000, scoped, tag = 'input window, operand 1, single buffered']
    #allocation6 [shape = 's32[1]{0}', space=sflag, size = 0x4, scoped, tag = 'scoped memory for tpu_custom_call.1']
    #allocation7 [shape = 'u8[4096]{0}', space=vmem, size = 0x1000, scoped, tag = 'output window, operand 0, single buffered']
    %8 = vsyncpa [#allocation3], 0
    %9 = vsyncpa [#allocation6], 0
    %10 = vsyncpa [#allocation4], 0
    // Predicated region
    $region2: #{tpu_custom_call.1} parent=1 // pred_check
      _
    $region3: #{tpu_custom_call.1} parent=1 // pred_check_branch
      %12 = sbr.rel (0) target = $region5
    $region4: #{tpu_custom_call.1} parent=1 // pred_region
      %s14 = ssub.s32 3072, 3072
      %15 = vsyncadd [#allocation3], %s14
      %s16 = sshll.u32 [#allocation2], 4
      %s17 = int_to_ptr.vmem [resolvable:$true] %s16
      %22 = dma.hbm_to_vmem [thread:$0]  %s0, 3072, %s17, [#allocation3], 384, 384, 24
    $region5: #{tpu_custom_call.1} parent=1 // pred_fallthru
      _
    // Predicated region
    $region6: #{tpu_custom_call.1} parent=1 // pred_check
      _
    $region7: #{tpu_custom_call.1} parent=1 // pred_check_branch
      %24 = sbr.rel (0) target = $region9
    $region8: #{tpu_custom_call.1} parent=1 // pred_region
      %s26 = ssub.s32 6144, 6144
      %27 = vsyncadd [#allocation6], %s26
      %s28 = sshll.u32 [#allocation5], 4
      %s29 = int_to_ptr.vmem [resolvable:$true] %s28
      %34 = dma.hbm_to_vmem [thread:$0]  %s1, 6144, %s29, [#allocation6], 384, 384, 24
    $region9: #{tpu_custom_call.1} parent=1 // pred_fallthru
      _
    // Predicated region
    $region10: #{tpu_custom_call.1} parent=1 // pred_check
      _
    $region11: #{tpu_custom_call.1} parent=1 // pred_check_branch
      %36 = sbr.rel (0) target = $region13
    $region12: #{tpu_custom_call.1} parent=1 // pred_region
      _
    $region13: #{tpu_custom_call.1} parent=1 // pred_fallthru
      _
    // Predicated region
    $region14: #{tpu_custom_call.1} parent=1 // pred_check
      _
    $region15: #{tpu_custom_call.1} parent=1 // pred_check_branch
      %38 = sbr.rel (0) target = $region17
    $region16: #{tpu_custom_call.1} parent=1 // pred_region
      %39 = dma.done [#allocation3], 3072
    $region17: #{tpu_custom_call.1} parent=1 // pred_fallthru
      _
    // Predicated region
    $region18: #{tpu_custom_call.1} parent=1 // pred_check
      _
    $region19: #{tpu_custom_call.1} parent=1 // pred_check_branch
      %41 = sbr.rel (0) target = $region21
    $region20: #{tpu_custom_call.1} parent=1 // pred_region
      %42 = dma.done [#allocation6], 6144
    $region21: #{tpu_custom_call.1} parent=1 // pred_fallthru
      _
    %p43 = scmp.eq.s32.totalorder 0, 0
    // Predicated region
    $region22: #{tpu_custom_call.1} parent=1 // pred_check
      %p44 = pneg %p43
    $region23: #{tpu_custom_call.1} parent=1 // pred_check_branch
      %46 = sbr.rel (%p44) target = $region25
    $region24: #{tpu_custom_call.1} parent=1 // pred_region
      %47 = vst [vmem:[#allocation7] sm:$0xff] 0.0
    $region25: #{tpu_custom_call.1} parent=1 // pred_fallthru
      _
    %v48 = vld [vmem:[#allocation5] sm:$0xff]
    %v49 = vld [vmem:[#allocation5 + $0x8] sm:$0xff]
    %v50 = vld [vmem:[#allocation5 + $0x10] sm:$0xff]
    %v51 = vld [vmem:[#allocation5 + $0x18] sm:$0xff]
    %v52 = vld [vmem:[#allocation5 + $0x20] sm:$0xff]
    %v53 = vld [vmem:[#allocation5 + $0x28] sm:$0xff]
    %v54 = vld [vmem:[#allocation5 + $0x30] sm:$0xff]
    %v55 = vld [vmem:[#allocation5 + $0x38] sm:$0xff]
    %v56 = vld [vmem:[#allocation5 + $0x40] sm:$0xff]
    %v57 = vld [vmem:[#allocation5 + $0x48] sm:$0xff]
    %v58 = vld [vmem:[#allocation5 + $0x50] sm:$0xff]
    %v59 = vld [vmem:[#allocation5 + $0x58] sm:$0xff]
    %v60 = vld [vmem:[#allocation5 + $0x60] sm:$0xff]
    %v61 = vld [vmem:[#allocation5 + $0x68] sm:$0xff]
    %v62 = vld [vmem:[#allocation5 + $0x70] sm:$0xff]
    %v63 = vld [vmem:[#allocation5 + $0x78] sm:$0xff]
    %v64 = vld [vmem:[#allocation5 + $0x80] sm:$0xff]
    %v65 = vld [vmem:[#allocation5 + $0x88] sm:$0xff]
    %v66 = vld [vmem:[#allocation5 + $0x90] sm:$0xff]
    %v67 = vld [vmem:[#allocation5 + $0x98] sm:$0xff]
    %v68 = vld [vmem:[#allocation5 + $0xa0] sm:$0xff]
    %v69 = vld [vmem:[#allocation5 + $0xa8] sm:$0xff]
    %v70 = vld [vmem:[#allocation5 + $0xb0] sm:$0xff]
    %v71 = vld [vmem:[#allocation5 + $0xb8] sm:$0xff]
    %v72 = vld [vmem:[#allocation5 + $0xc0] sm:$0xff]
    %v73 = vld [vmem:[#allocation5 + $0xc8] sm:$0xff]
    %v74 = vld [vmem:[#allocation5 + $0xd0] sm:$0xff]
    %v75 = vld [vmem:[#allocation5 + $0xd8] sm:$0xff]
    %v76 = vld [vmem:[#allocation5 + $0xe0] sm:$0xff]
    %v77 = vld [vmem:[#allocation5 + $0xe8] sm:$0xff]
    %v78 = vld [vmem:[#allocation5 + $0xf0] sm:$0xff]
    %v79 = vld [vmem:[#allocation5 + $0xf8] sm:$0xff]
    %v80 = vld [vmem:[#allocation5 + $0x100] sm:$0xff]
    %v81 = vld [vmem:[#allocation5 + $0x108] sm:$0xff]
    %v82 = vld [vmem:[#allocation5 + $0x110] sm:$0xff]
    %v83 = vld [vmem:[#allocation5 + $0x118] sm:$0xff]
    %v84 = vld [vmem:[#allocation5 + $0x120] sm:$0xff]
    %v85 = vld [vmem:[#allocation5 + $0x128] sm:$0xff]
    %v86 = vld [vmem:[#allocation5 + $0x130] sm:$0xff]
    %v87 = vld [vmem:[#allocation5 + $0x138] sm:$0xff]
    %v88 = vld [vmem:[#allocation5 + $0x140] sm:$0xff]
    %v89 = vld [vmem:[#allocation5 + $0x148] sm:$0xff]
    %v90 = vld [vmem:[#allocation5 + $0x150] sm:$0xff]
    %v91 = vld [vmem:[#allocation5 + $0x158] sm:$0xff]
    %v92 = vld [vmem:[#allocation5 + $0x160] sm:$0xff]
    %v93 = vld [vmem:[#allocation5 + $0x168] sm:$0xff]
    %v94 = vld [vmem:[#allocation5 + $0x170] sm:$0xff]
    %v95 = vld [vmem:[#allocation5 + $0x178] sm:$0xff]
    %v96 = vld [vmem:[%s2] sm:$0x1]
    %v98 = vlaneseq
    %v99 = vshrl.u32 %v98, 7
    %v100 = vsub.s32 0, %v99
    %v101 = vrot.slane %v96, %v100
    %v103 = vld [vmem:[#allocation7] sm:$0xff]
    %v104 = vld [vmem:[#allocation2] sm:$0xff]
    %v105 = vld [vmem:[#allocation2 + $0x8] sm:$0xff]
    %v106 = vld [vmem:[#allocation2 + $0x10] sm:$0xff]
    %107 = vmatprep.subr.mxu0 %v49
    %108 = vmatpush1.msra.mxu0 %v48
    %109 = vmatprep.subr.mxu0 %v52
    %110 = vmatpush1.msra.mxu0 %v51
    %111 = vmatprep.subr.mxu0 %v55
    %112 = vmatpush1.msra.mxu0 %v54
    %113 = vmatprep.subr.mxu0 %v58
    %114 = vmatpush1.msra.mxu0 %v57
    %115 = vmatprep.subr.mxu0 %v61
    %116 = vmatpush1.msra.mxu0 %v60
    %117 = vmatprep.subr.mxu0 %v64
    %118 = vmatpush1.msra.mxu0 %v63
    %119 = vmatprep.subr.mxu0 %v67
    %120 = vmatpush1.msra.mxu0 %v66
    %121 = vmatprep.subr.mxu0 %v70
    %122 = vmatpush1.msra.mxu0 %v69
    %123 = vmatprep.subr.mxu0 %v73
    %124 = vmatpush1.msra.mxu0 %v72
    %125 = vmatprep.subr.mxu0 %v76
    %126 = vmatpush1.msra.mxu0 %v75
    %127 = vmatprep.subr.mxu0 %v79
    %128 = vmatpush1.msra.mxu0 %v78
    %129 = vmatprep.subr.mxu0 %v82
    %130 = vmatpush1.msra.mxu0 %v81
    %131 = vmatprep.subr.mxu0 %v85
    %132 = vmatpush1.msra.mxu0 %v84
    %133 = vmatprep.subr.mxu0 %v88
    %134 = vmatpush1.msra.mxu0 %v87
    %135 = vmatprep.subr.mxu0 %v91
    %136 = vmatpush1.msra.mxu0 %v90
    %137 = vmatprep.subr.mxu0 %v94
    %138 = vmatpush1.msra.mxu0 %v93
    %139 = vmatprep.subr.mxu0 0.0
    %140 = vmatpush1.msra.mxu0 0.0
    %141 = vmatprep.subr.mxu0 0.0
    %142 = vmatpush1.msra.mxu0 0.0
    %143 = vmatprep.subr.mxu0 0.0
    %144 = vmatpush1.msra.mxu0 0.0
    %145 = vmatprep.subr.mxu0 0.0
    %146 = vmatpush1.msra.mxu0 0.0
    %147 = vmatprep.subr.mxu0 0.0
    %148 = vmatpush1.msra.mxu0 0.0
    %149 = vmatprep.subr.mxu0 0.0
    %150 = vmatpush1.msra.mxu0 0.0
    %151 = vmatprep.subr.mxu0 0.0
    %152 = vmatpush1.msra.mxu0 0.0
    %153 = vmatprep.subr.mxu0 0.0
    %154 = vmatpush1.msra.mxu0 0.0
    %155 = vmatprep.subr.mxu0 0.0
    %156 = vmatpush1.msra.mxu0 0.0
    %157 = vmatprep.subr.mxu0 0.0
    %158 = vmatpush1.msra.mxu0 0.0
    %159 = vmatprep.subr.mxu0 0.0
    %160 = vmatpush1.msra.mxu0 0.0
    %161 = vmatprep.subr.mxu0 0.0
    %162 = vmatpush1.msra.mxu0 0.0
    %163 = vmatprep.subr.mxu0 0.0
    %164 = vmatpush1.msra.mxu0 0.0
    %165 = vmatprep.subr.mxu0 0.0
    %166 = vmatpush1.msra.mxu0 0.0
    %167 = vmatprep.subr.mxu0 0.0
    %168 = vmatpush1.msra.mxu0 0.0
    %169 = vmatprep.subr.mxu0 0.0
    %170 = vmatpush1.msra.mxu0 0.0
    %171 = vmatprep.mubr.f32.mxu0 0.0
    %172 = vmatmul.mubr.f32.gmra.mrb[0].mxu0 %v103
    %v173 = vpop.f32.mrb[0].mxu0
    %v174 = vadd.f32 0.0, %v173
    %v175 = vpop.f32.mrb[0].mxu0
    %v176 = vadd.f32 0.0, %v175
    %177 = vdwg.mxu0
    %178 = vmatprep.subr.mxu0 0.0
    %179 = vmatpush1.msra.mxu0 %v50
    %180 = vmatprep.subr.mxu0 0.0
    %181 = vmatpush1.msra.mxu0 %v53
    %182 = vmatprep.subr.mxu0 0.0
    %183 = vmatpush1.msra.mxu0 %v56
    %184 = vmatprep.subr.mxu0 0.0
    %185 = vmatpush1.msra.mxu0 %v59
    %186 = vmatprep.subr.mxu0 0.0
    %187 = vmatpush1.msra.mxu0 %v62
    %188 = vmatprep.subr.mxu0 0.0
    %189 = vmatpush1.msra.mxu0 %v65
    %190 = vmatprep.subr.mxu0 0.0
    %191 = vmatpush1.msra.mxu0 %v68
    %192 = vmatprep.subr.mxu0 0.0
    %193 = vmatpush1.msra.mxu0 %v71
    %194 = vmatprep.subr.mxu0 0.0
    %195 = vmatpush1.msra.mxu0 %v74
    %196 = vmatprep.subr.mxu0 0.0
    %197 = vmatpush1.msra.mxu0 %v77
    %198 = vmatprep.subr.mxu0 0.0
    %199 = vmatpush1.msra.mxu0 %v80
    %200 = vmatprep.subr.mxu0 0.0
    %201 = vmatpush1.msra.mxu0 %v83
    %202 = vmatprep.subr.mxu0 0.0
    %203 = vmatpush1.msra.mxu0 %v86
    %204 = vmatprep.subr.mxu0 0.0
    %205 = vmatpush1.msra.mxu0 %v89
    %206 = vmatprep.subr.mxu0 0.0
    %207 = vmatpush1.msra.mxu0 %v92
    %208 = vmatprep.subr.mxu0 0.0
    %209 = vmatpush1.msra.mxu0 %v95
    %210 = vmatprep.subr.mxu0 0.0
    %211 = vmatpush1.msra.mxu0 0.0
    %212 = vmatprep.subr.mxu0 0.0
    %213 = vmatpush1.msra.mxu0 0.0
    %214 = vmatprep.subr.mxu0 0.0
    %215 = vmatpush1.msra.mxu0 0.0
    %216 = vmatprep.subr.mxu0 0.0
    %217 = vmatpush1.msra.mxu0 0.0
    %218 = vmatprep.subr.mxu0 0.0
    %219 = vmatpush1.msra.mxu0 0.0
    %220 = vmatprep.subr.mxu0 0.0
    %221 = vmatpush1.msra.mxu0 0.0
    %222 = vmatprep.subr.mxu0 0.0
    %223 = vmatpush1.msra.mxu0 0.0
    %224 = vmatprep.subr.mxu0 0.0
    %225 = vmatpush1.msra.mxu0 0.0
    %226 = vmatprep.subr.mxu0 0.0
    %227 = vmatpush1.msra.mxu0 0.0
    %228 = vmatprep.subr.mxu0 0.0
    %229 = vmatpush1.msra.mxu0 0.0
    %230 = vmatprep.subr.mxu0 0.0
    %231 = vmatpush1.msra.mxu0 0.0
    %232 = vmatprep.subr.mxu0 0.0
    %233 = vmatpush1.msra.mxu0 0.0
    %234 = vmatprep.subr.mxu0 0.0
    %235 = vmatpush1.msra.mxu0 0.0
    %236 = vmatprep.subr.mxu0 0.0
    %237 = vmatpush1.msra.mxu0 0.0
    %238 = vmatprep.subr.mxu0 0.0
    %239 = vmatpush1.msra.mxu0 0.0
    %240 = vmatprep.subr.mxu0 0.0
    %241 = vmatpush1.msra.mxu0 0.0
    %242 = vmatprep.mubr.f32.mxu0 0.0
    %243 = vmatmul.mubr.f32.gmra.mrb[0].mxu0 %v103
    %v244 = vpop.f32.mrb[0].mxu0
    %v245 = vadd.f32 0.0, %v244
    %v246 = vpop.f32.mrb[0].mxu0
    %247 = vdwg.mxu0
    %v248 = vadd.f32 %v104, %v174
    %v249 = vxor.u32 %v248, 2147483648
    %v250 = vmul.f32 %v249, 1.442695
    %v251 = vpow.pop %v250
    %v252 = vadd.f32 %v251, 1.0
    %v253 = vrcp.pop %v252
    %v254 = vmul.f32 1.0, %v253
    %v255 = vadd.f32 %v105, %v176
    %v256 = vxor.u32 %v255, 2147483648
    %v257 = vmul.f32 %v256, 1.442695
    %v258 = vpow.pop %v257
    %v259 = vadd.f32 %v258, 1.0
    %v260 = vrcp.pop %v259
    %v261 = vmul.f32 1.0, %v260
    %v262 = vadd.f32 %v245, %v101
    %v263 = vmul.f32 %v254, %v262
    %v264 = vadd.f32 %v106, %v263
    %v265 = vtanh.pop %v264
    %v266 = vsub.f32 1.0, %v261
    %v267 = vmul.f32 %v266, %v265
    %v268 = vmul.f32 %v261, %v103
    %v269 = vadd.f32 %v267, %v268
    %s270 = scalar_lea.vmem [#allocation2], 24
    %v271 = vld [vmem:[%s270] sm:$0xff]
    %v272 = vld [vmem:[%s270 + $0x8] sm:$0xff]
    %v273 = vld [vmem:[%s270 + $0x10] sm:$0xff]
    %274 = vmatprep.subr.mxu0 %v49
    %275 = vmatpush1.msra.mxu0 %v48
    %276 = vmatprep.subr.mxu0 %v52
    %277 = vmatpush1.msra.mxu0 %v51
    %278 = vmatprep.subr.mxu0 %v55
    %279 = vmatpush1.msra.mxu0 %v54
    %280 = vmatprep.subr.mxu0 %v58
    %281 = vmatpush1.msra.mxu0 %v57
    %282 = vmatprep.subr.mxu0 %v61
    %283 = vmatpush1.msra.mxu0 %v60
    %284 = vmatprep.subr.mxu0 %v64
    %285 = vmatpush1.msra.mxu0 %v63
    %286 = vmatprep.subr.mxu0 %v67
    %287 = vmatpush1.msra.mxu0 %v66
    %288 = vmatprep.subr.mxu0 %v70
    %289 = vmatpush1.msra.mxu0 %v69
    %290 = vmatprep.subr.mxu0 %v73
    %291 = vmatpush1.msra.mxu0 %v72
    %292 = vmatprep.subr.mxu0 %v76
    %293 = vmatpush1.msra.mxu0 %v75
    %294 = vmatprep.subr.mxu0 %v79
    %295 = vmatpush1.msra.mxu0 %v78
    %296 = vmatprep.subr.mxu0 %v82
    %297 = vmatpush1.msra.mxu0 %v81
    %298 = vmatprep.subr.mxu0 %v85
    %299 = vmatpush1.msra.mxu0 %v84
    %300 = vmatprep.subr.mxu0 %v88
    %301 = vmatpush1.msra.mxu0 %v87
    %302 = vmatprep.subr.mxu0 %v91
    %303 = vmatpush1.msra.mxu0 %v90
    %304 = vmatprep.subr.mxu0 %v94
    %305 = vmatpush1.msra.mxu0 %v93
    %306 = vmatprep.subr.mxu0 0.0
    %307 = vmatpush1.msra.mxu0 0.0
    %308 = vmatprep.subr.mxu0 0.0
    %309 = vmatpush1.msra.mxu0 0.0
    %310 = vmatprep.subr.mxu0 0.0
    %311 = vmatpush1.msra.mxu0 0.0
    %312 = vmatprep.subr.mxu0 0.0
    %313 = vmatpush1.msra.mxu0 0.0
    %314 = vmatprep.subr.mxu0 0.0
    %315 = vmatpush1.msra.mxu0 0.0
    %316 = vmatprep.subr.mxu0 0.0
    %317 = vmatpush1.msra.mxu0 0.0
    %318 = vmatprep.subr.mxu0 0.0
    %319 = vmatpush1.msra.mxu0 0.0
    %320 = vmatprep.subr.mxu0 0.0
    %321 = vmatpush1.msra.mxu0 0.0
    %322 = vmatprep.subr.mxu0 0.0
    %323 = vmatpush1.msra.mxu0 0.0
    %324 = vmatprep.subr.mxu0 0.0
    %325 = vmatpush1.msra.mxu0 0.0
    %326 = vmatprep.subr.mxu0 0.0
    %327 = vmatpush1.msra.mxu0 0.0
    %328 = vmatprep.subr.mxu0 0.0
    %329 = vmatpush1.msra.mxu0 0.0
    %330 = vmatprep.subr.mxu0 0.0
    %331 = vmatpush1.msra.mxu0 0.0
    %332 = vmatprep.subr.mxu0 0.0
    %333 = vmatpush1.msra.mxu0 0.0
    %334 = vmatprep.subr.mxu0 0.0
    %335 = vmatpush1.msra.mxu0 0.0
    %336 = vmatprep.subr.mxu0 0.0
    %337 = vmatpush1.msra.mxu0 0.0
    %338 = vmatprep.mubr.f32.mxu0 0.0
    %339 = vmatmul.mubr.f32.gmra.mrb[0].mxu0 %v269
    %v340 = vpop.f32.mrb[0].mxu0
    %v341 = vadd.f32 0.0, %v340
    %v342 = vpop.f32.mrb[0].mxu0
    %v343 = vadd.f32 0.0, %v342
    %344 = vdwg.mxu0
    %345 = vmatprep.subr.mxu0 0.0
    %346 = vmatpush1.msra.mxu0 %v50
    %347 = vmatprep.subr.mxu0 0.0
    %348 = vmatpush1.msra.mxu0 %v53
    %349 = vmatprep.subr.mxu0 0.0
    %350 = vmatpush1.msra.mxu0 %v56
    %351 = vmatprep.subr.mxu0 0.0
    %352 = vmatpush1.msra.mxu0 %v59
    %353 = vmatprep.subr.mxu0 0.0
    %354 = vmatpush1.msra.mxu0 %v62
    %355 = vmatprep.subr.mxu0 0.0
    %356 = vmatpush1.msra.mxu0 %v65
    %357 = vmatprep.subr.mxu0 0.0
    %358 = vmatpush1.msra.mxu0 %v68
    %359 = vmatprep.subr.mxu0 0.0
    %360 = vmatpush1.msra.mxu0 %v71
    %361 = vmatprep.subr.mxu0 0.0
    %362 = vmatpush1.msra.mxu0 %v74
    %363 = vmatprep.subr.mxu0 0.0
    %364 = vmatpush1.msra.mxu0 %v77
    %365 = vmatprep.subr.mxu0 0.0
    %366 = vmatpush1.msra.mxu0 %v80
    %367 = vmatprep.subr.mxu0 0.0
    %368 = vmatpush1.msra.mxu0 %v83
    %369 = vmatprep.subr.mxu0 0.0
    %370 = vmatpush1.msra.mxu0 %v86
    %371 = vmatprep.subr.mxu0 0.0
    %372 = vmatpush1.msra.mxu0 %v89
    %373 = vmatprep.subr.mxu0 0.0
    %374 = vmatpush1.msra.mxu0 %v92
    %375 = vmatprep.subr.mxu0 0.0
    %376 = vmatpush1.msra.mxu0 %v95
    %377 = vmatprep.subr.mxu0 0.0
    %378 = vmatpush1.msra.mxu0 0.0
    %379 = vmatprep.subr.mxu0 0.0
    %380 = vmatpush1.msra.mxu0 0.0
    %381 = vmatprep.subr.mxu0 0.0
    %382 = vmatpush1.msra.mxu0 0.0
    %383 = vmatprep.subr.mxu0 0.0
    %384 = vmatpush1.msra.mxu0 0.0
    %385 = vmatprep.subr.mxu0 0.0
    %386 = vmatpush1.msra.mxu0 0.0
    %387 = vmatprep.subr.mxu0 0.0
    %388 = vmatpush1.msra.mxu0 0.0
    %389 = vmatprep.subr.mxu0 0.0
    %390 = vmatpush1.msra.mxu0 0.0
    %391 = vmatprep.subr.mxu0 0.0
    %392 = vmatpush1.msra.mxu0 0.0
    %393 = vmatprep.subr.mxu0 0.0
    %394 = vmatpush1.msra.mxu0 0.0
    %395 = vmatprep.subr.mxu0 0.0
    %396 = vmatpush1.msra.mxu0 0.0
    %397 = vmatprep.subr.mxu0 0.0
    %398 = vmatpush1.msra.mxu0 0.0
    %399 = vmatprep.subr.mxu0 0.0
    %400 = vmatpush1.msra.mxu0 0.0
    %401 = vmatprep.subr.mxu0 0.0
    %402 = vmatpush1.msra.mxu0 0.0
    %403 = vmatprep.subr.mxu0 0.0
    %404 = vmatpush1.msra.mxu0 0.0
    %405 = vmatprep.subr.mxu0 0.0
    %406 = vmatpush1.msra.mxu0 0.0
    %407 = vmatprep.subr.mxu0 0.0
    %408 = vmatpush1.msra.mxu0 0.0
    %409 = vmatprep.mubr.f32.mxu0 0.0
    %410 = vmatmul.mubr.f32.gmra.mrb[0].mxu0 %v269
    %v411 = vpop.f32.mrb[0].mxu0
    %v412 = vadd.f32 0.0, %v411
    %v413 = vpop.f32.mrb[0].mxu0
    %414 = vdwg.mxu0
    %v415 = vadd.f32 %v271, %v341
    %v416 = vxor.u32 %v415, 2147483648
    %v417 = vmul.f32 %v416, 1.442695
    %v418 = vpow.pop %v417
    %v419 = vadd.f32 %v418, 1.0
    %v420 = vrcp.pop %v419
    %v421 = vmul.f32 1.0, %v420
    %v422 = vadd.f32 %v272, %v343
    %v423 = vxor.u32 %v422, 2147483648
    %v424 = vmul.f32 %v423, 1.442695
    %v425 = vpow.pop %v424
    %v426 = vadd.f32 %v425, 1.0
    %v427 = vrcp.pop %v426
    %v428 = vmul.f32 1.0, %v427
    %v429 = vadd.f32 %v412, %v101
    %v430 = vmul.f32 %v421, %v429
    %v431 = vadd.f32 %v273, %v430
    %v432 = vtanh.pop %v431
    %v433 = vsub.f32 1.0, %v428
    %v434 = vmul.f32 %v433, %v432
    %v435 = vmul.f32 %v428, %v269
    %v436 = vadd.f32 %v434, %v435
    %s437 = scalar_lea.vmem [#allocation2], 48
    %v438 = vld [vmem:[%s437] sm:$0xff]
    %v439 = vld [vmem:[%s437 + $0x8] sm:$0xff]
    %v440 = vld [vmem:[%s437 + $0x10] sm:$0xff]
    %441 = vmatprep.subr.mxu0 %v49
    %442 = vmatpush1.msra.mxu0 %v48
    %443 = vmatprep.subr.mxu0 %v52
    %444 = vmatpush1.msra.mxu0 %v51
    %445 = vmatprep.subr.mxu0 %v55
    %446 = vmatpush1.msra.mxu0 %v54
    %447 = vmatprep.subr.mxu0 %v58
    %448 = vmatpush1.msra.mxu0 %v57
    %449 = vmatprep.subr.mxu0 %v61
    %450 = vmatpush1.msra.mxu0 %v60
    %451 = vmatprep.subr.mxu0 %v64
    %452 = vmatpush1.msra.mxu0 %v63
    %453 = vmatprep.subr.mxu0 %v67
    %454 = vmatpush1.msra.mxu0 %v66
    %455 = vmatprep.subr.mxu0 %v70
    %456 = vmatpush1.msra.mxu0 %v69
    %457 = vmatprep.subr.mxu0 %v73
    %458 = vmatpush1.msra.mxu0 %v72
    %459 = vmatprep.subr.mxu0 %v76
    %460 = vmatpush1.msra.mxu0 %v75
    %461 = vmatprep.subr.mxu0 %v79
    %462 = vmatpush1.msra.mxu0 %v78
    %463 = vmatprep.subr.mxu0 %v82
    %464 = vmatpush1.msra.mxu0 %v81
    %465 = vmatprep.subr.mxu0 %v85
    %466 = vmatpush1.msra.mxu0 %v84
    %467 = vmatprep.subr.mxu0 %v88
    %468 = vmatpush1.msra.mxu0 %v87
    %469 = vmatprep.subr.mxu0 %v91
    %470 = vmatpush1.msra.mxu0 %v90
    %471 = vmatprep.subr.mxu0 %v94
    %472 = vmatpush1.msra.mxu0 %v93
    %473 = vmatprep.subr.mxu0 0.0
    %474 = vmatpush1.msra.mxu0 0.0
    %475 = vmatprep.subr.mxu0 0.0
    %476 = vmatpush1.msra.mxu0 0.0
    %477 = vmatprep.subr.mxu0 0.0
    %478 = vmatpush1.msra.mxu0 0.0
    %479 = vmatprep.subr.mxu0 0.0
    %480 = vmatpush1.msra.mxu0 0.0
    %481 = vmatprep.subr.mxu0 0.0
    %482 = vmatpush1.msra.mxu0 0.0
    %483 = vmatprep.subr.mxu0 0.0
    %484 = vmatpush1.msra.mxu0 0.0
    %485 = vmatprep.subr.mxu0 0.0
    %486 = vmatpush1.msra.mxu0 0.0
    %487 = vmatprep.subr.mxu0 0.0
    %488 = vmatpush1.msra.mxu0 0.0
    %489 = vmatprep.subr.mxu0 0.0
    %490 = vmatpush1.msra.mxu0 0.0
    %491 = vmatprep.subr.mxu0 0.0
    %492 = vmatpush1.msra.mxu0 0.0
    %493 = vmatprep.subr.mxu0 0.0
    %494 = vmatpush1.msra.mxu0 0.0
    %495 = vmatprep.subr.mxu0 0.0
    %496 = vmatpush1.msra.mxu0 0.0
    %497 = vmatprep.subr.mxu0 0.0
    %498 = vmatpush1.msra.mxu0 0.0
    %499 = vmatprep.subr.mxu0 0.0
    %500 = vmatpush1.msra.mxu0 0.0
    %501 = vmatprep.subr.mxu0 0.0
    %502 = vmatpush1.msra.mxu0 0.0
    %503 = vmatprep.subr.mxu0 0.0
    %504 = vmatpush1.msra.mxu0 0.0
    %505 = vmatprep.mubr.f32.mxu0 0.0
    %506 = vmatmul.mubr.f32.gmra.mrb[0].mxu0 %v436
    %v507 = vpop.f32.mrb[0].mxu0
    %v508 = vadd.f32 0.0, %v507
    %v509 = vpop.f32.mrb[0].mxu0
    %v510 = vadd.f32 0.0, %v509
    %511 = vdwg.mxu0
    %512 = vmatprep.subr.mxu0 0.0
    %513 = vmatpush1.msra.mxu0 %v50
    %514 = vmatprep.subr.mxu0 0.0
    %515 = vmatpush1.msra.mxu0 %v53
    %516 = vmatprep.subr.mxu0 0.0
    %517 = vmatpush1.msra.mxu0 %v56
    %518 = vmatprep.subr.mxu0 0.0
    %519 = vmatpush1.msra.mxu0 %v59
    %520 = vmatprep.subr.mxu0 0.0
    %521 = vmatpush1.msra.mxu0 %v62
    %522 = vmatprep.subr.mxu0 0.0
    %523 = vmatpush1.msra.mxu0 %v65
    %524 = vmatprep.subr.mxu0 0.0
    %525 = vmatpush1.msra.mxu0 %v68
    %526 = vmatprep.subr.mxu0 0.0
    %527 = vmatpush1.msra.mxu0 %v71
    %528 = vmatprep.subr.mxu0 0.0
    %529 = vmatpush1.msra.mxu0 %v74
    %530 = vmatprep.subr.mxu0 0.0
    %531 = vmatpush1.msra.mxu0 %v77
    %532 = vmatprep.subr.mxu0 0.0
    %533 = vmatpush1.msra.mxu0 %v80
    %534 = vmatprep.subr.mxu0 0.0
    %535 = vmatpush1.msra.mxu0 %v83
    %536 = vmatprep.subr.mxu0 0.0
    %537 = vmatpush1.msra.mxu0 %v86
    %538 = vmatprep.subr.mxu0 0.0
    %539 = vmatpush1.msra.mxu0 %v89
    %540 = vmatprep.subr.mxu0 0.0
    %541 = vmatpush1.msra.mxu0 %v92
    %542 = vmatprep.subr.mxu0 0.0
    %543 = vmatpush1.msra.mxu0 %v95
    %544 = vmatprep.subr.mxu0 0.0
    %545 = vmatpush1.msra.mxu0 0.0
    %546 = vmatprep.subr.mxu0 0.0
    %547 = vmatpush1.msra.mxu0 0.0
    %548 = vmatprep.subr.mxu0 0.0
    %549 = vmatpush1.msra.mxu0 0.0
    %550 = vmatprep.subr.mxu0 0.0
    %551 = vmatpush1.msra.mxu0 0.0
    %552 = vmatprep.subr.mxu0 0.0
    %553 = vmatpush1.msra.mxu0 0.0
    %554 = vmatprep.subr.mxu0 0.0
    %555 = vmatpush1.msra.mxu0 0.0
    %556 = vmatprep.subr.mxu0 0.0
    %557 = vmatpush1.msra.mxu0 0.0
    %558 = vmatprep.subr.mxu0 0.0
    %559 = vmatpush1.msra.mxu0 0.0
    %560 = vmatprep.subr.mxu0 0.0
    %561 = vmatpush1.msra.mxu0 0.0
    %562 = vmatprep.subr.mxu0 0.0
    %563 = vmatpush1.msra.mxu0 0.0
    %564 = vmatprep.subr.mxu0 0.0
    %565 = vmatpush1.msra.mxu0 0.0
    %566 = vmatprep.subr.mxu0 0.0
    %567 = vmatpush1.msra.mxu0 0.0
    %568 = vmatprep.subr.mxu0 0.0
    %569 = vmatpush1.msra.mxu0 0.0
    %570 = vmatprep.subr.mxu0 0.0
    %571 = vmatpush1.msra.mxu0 0.0
    %572 = vmatprep.subr.mxu0 0.0
    %573 = vmatpush1.msra.mxu0 0.0
    %574 = vmatprep.subr.mxu0 0.0
    %575 = vmatpush1.msra.mxu0 0.0
    %576 = vmatprep.mubr.f32.mxu0 0.0
    %577 = vmatmul.mubr.f32.gmra.mrb[0].mxu0 %v436
    %v578 = vpop.f32.mrb[0].mxu0
    %v579 = vadd.f32 0.0, %v578
    %v580 = vpop.f32.mrb[0].mxu0
    %581 = vdwg.mxu0
    %v582 = vadd.f32 %v438, %v508
    %v583 = vxor.u32 %v582, 2147483648
    %v584 = vmul.f32 %v583, 1.442695
    %v585 = vpow.pop %v584
    %v586 = vadd.f32 %v585, 1.0
    %v587 = vrcp.pop %v586
    %v588 = vmul.f32 1.0, %v587
    %v589 = vadd.f32 %v439, %v510
    %v590 = vxor.u32 %v589, 2147483648
    %v591 = vmul.f32 %v590, 1.442695
    %v592 = vpow.pop %v591
    %v593 = vadd.f32 %v592, 1.0
    %v594 = vrcp.pop %v593
    %v595 = vmul.f32 1.0, %v594
    %v596 = vadd.f32 %v579, %v101
    %v597 = vmul.f32 %v588, %v596
    %v598 = vadd.f32 %v440, %v597
    %v599 = vtanh.pop %v598
    %v600 = vsub.f32 1.0, %v595
    %v601 = vmul.f32 %v600, %v599
    %v602 = vmul.f32 %v595, %v436
    %v603 = vadd.f32 %v601, %v602
    %s604 = scalar_lea.vmem [#allocation2], 72
    %v605 = vld [vmem:[%s604] sm:$0xff]
    %v606 = vld [vmem:[%s604 + $0x8] sm:$0xff]
    %v607 = vld [vmem:[%s604 + $0x10] sm:$0xff]
    %608 = vmatprep.subr.mxu0 %v49
    %609 = vmatpush1.msra.mxu0 %v48
    %610 = vmatprep.subr.mxu0 %v52
    %611 = vmatpush1.msra.mxu0 %v51
    %612 = vmatprep.subr.mxu0 %v55
    %613 = vmatpush1.msra.mxu0 %v54
    %614 = vmatprep.subr.mxu0 %v58
    %615 = vmatpush1.msra.mxu0 %v57
    %616 = vmatprep.subr.mxu0 %v61
    %617 = vmatpush1.msra.mxu0 %v60
    %618 = vmatprep.subr.mxu0 %v64
    %619 = vmatpush1.msra.mxu0 %v63
    %620 = vmatprep.subr.mxu0 %v67
    %621 = vmatpush1.msra.mxu0 %v66
    %622 = vmatprep.subr.mxu0 %v70
    %623 = vmatpush1.msra.mxu0 %v69
    %624 = vmatprep.subr.mxu0 %v73
    %625 = vmatpush1.msra.mxu0 %v72
    %626 = vmatprep.subr.mxu0 %v76
    %627 = vmatpush1.msra.mxu0 %v75
    %628 = vmatprep.subr.mxu0 %v79
    %629 = vmatpush1.msra.mxu0 %v78
    %630 = vmatprep.subr.mxu0 %v82
    %631 = vmatpush1.msra.mxu0 %v81
    %632 = vmatprep.subr.mxu0 %v85
    %633 = vmatpush1.msra.mxu0 %v84
    %634 = vmatprep.subr.mxu0 %v88
    %635 = vmatpush1.msra.mxu0 %v87
    %636 = vmatprep.subr.mxu0 %v91
    %637 = vmatpush1.msra.mxu0 %v90
    %638 = vmatprep.subr.mxu0 %v94
    %639 = vmatpush1.msra.mxu0 %v93
    %640 = vmatprep.subr.mxu0 0.0
    %641 = vmatpush1.msra.mxu0 0.0
    %642 = vmatprep.subr.mxu0 0.0
    %643 = vmatpush1.msra.mxu0 0.0
    %644 = vmatprep.subr.mxu0 0.0
    %645 = vmatpush1.msra.mxu0 0.0
    %646 = vmatprep.subr.mxu0 0.0
    %647 = vmatpush1.msra.mxu0 0.0
    %648 = vmatprep.subr.mxu0 0.0
    %649 = vmatpush1.msra.mxu0 0.0
    %650 = vmatprep.subr.mxu0 0.0
    %651 = vmatpush1.msra.mxu0 0.0
    %652 = vmatprep.subr.mxu0 0.0
    %653 = vmatpush1.msra.mxu0 0.0
    %654 = vmatprep.subr.mxu0 0.0
    %655 = vmatpush1.msra.mxu0 0.0
    %656 = vmatprep.subr.mxu0 0.0
    %657 = vmatpush1.msra.mxu0 0.0
    %658 = vmatprep.subr.mxu0 0.0
    %659 = vmatpush1.msra.mxu0 0.0
    %660 = vmatprep.subr.mxu0 0.0
    %661 = vmatpush1.msra.mxu0 0.0
    %662 = vmatprep.subr.mxu0 0.0
    %663 = vmatpush1.msra.mxu0 0.0
    %664 = vmatprep.subr.mxu0 0.0
    %665 = vmatpush1.msra.mxu0 0.0
    %666 = vmatprep.subr.mxu0 0.0
    %667 = vmatpush1.msra.mxu0 0.0
    %668 = vmatprep.subr.mxu0 0.0
    %669 = vmatpush1.msra.mxu0 0.0
    %670 = vmatprep.subr.mxu0 0.0
    %671 = vmatpush1.msra.mxu0 0.0
    %672 = vmatprep.mubr.f32.mxu0 0.0
    %673 = vmatmul.mubr.f32.gmra.mrb[0].mxu0 %v603
    %v674 = vpop.f32.mrb[0].mxu0
    %v675 = vadd.f32 0.0, %v674
    %v676 = vpop.f32.mrb[0].mxu0
    %v677 = vadd.f32 0.0, %v676
    %678 = vdwg.mxu0
    %679 = vmatprep.subr.mxu0 0.0
    %680 = vmatpush1.msra.mxu0 %v50
    %681 = vmatprep.subr.mxu0 0.0
    %682 = vmatpush1.msra.mxu0 %v53
    %683 = vmatprep.subr.mxu0 0.0
    %684 = vmatpush1.msra.mxu0 %v56
    %685 = vmatprep.subr.mxu0 0.0
    %686 = vmatpush1.msra.mxu0 %v59
    %687 = vmatprep.subr.mxu0 0.0
    %688 = vmatpush1.msra.mxu0 %v62
    %689 = vmatprep.subr.mxu0 0.0
    %690 = vmatpush1.msra.mxu0 %v65
    %691 = vmatprep.subr.mxu0 0.0
    %692 = vmatpush1.msra.mxu0 %v68
    %693 = vmatprep.subr.mxu0 0.0
    %694 = vmatpush1.msra.mxu0 %v71
    %695 = vmatprep.subr.mxu0 0.0
    %696 = vmatpush1.msra.mxu0 %v74
    %697 = vmatprep.subr.mxu0 0.0
    %698 = vmatpush1.msra.mxu0 %v77
    %699 = vmatprep.subr.mxu0 0.0
    %700 = vmatpush1.msra.mxu0 %v80
    %701 = vmatprep.subr.mxu0 0.0
    %702 = vmatpush1.msra.mxu0 %v83
    %703 = vmatprep.subr.mxu0 0.0
    %704 = vmatpush1.msra.mxu0 %v86
    %705 = vmatprep.subr.mxu0 0.0
    %706 = vmatpush1.msra.mxu0 %v89
    %707 = vmatprep.subr.mxu0 0.0
    %708 = vmatpush1.msra.mxu0 %v92
    %709 = vmatprep.subr.mxu0 0.0
    %710 = vmatpush1.msra.mxu0 %v95
    %711 = vmatprep.subr.mxu0 0.0
    %712 = vmatpush1.msra.mxu0 0.0
    %713 = vmatprep.subr.mxu0 0.0
    %714 = vmatpush1.msra.mxu0 0.0
    %715 = vmatprep.subr.mxu0 0.0
    %716 = vmatpush1.msra.mxu0 0.0
    %717 = vmatprep.subr.mxu0 0.0
    %718 = vmatpush1.msra.mxu0 0.0
    %719 = vmatprep.subr.mxu0 0.0
    %720 = vmatpush1.msra.mxu0 0.0
    %721 = vmatprep.subr.mxu0 0.0
    %722 = vmatpush1.msra.mxu0 0.0
    %723 = vmatprep.subr.mxu0 0.0
    %724 = vmatpush1.msra.mxu0 0.0
    %725 = vmatprep.subr.mxu0 0.0
    %726 = vmatpush1.msra.mxu0 0.0
    %727 = vmatprep.subr.mxu0 0.0
    %728 = vmatpush1.msra.mxu0 0.0
    %729 = vmatprep.subr.mxu0 0.0
    %730 = vmatpush1.msra.mxu0 0.0
    %731 = vmatprep.subr.mxu0 0.0
    %732 = vmatpush1.msra.mxu0 0.0
    %733 = vmatprep.subr.mxu0 0.0
    %734 = vmatpush1.msra.mxu0 0.0
    %735 = vmatprep.subr.mxu0 0.0
    %736 = vmatpush1.msra.mxu0 0.0
    %737 = vmatprep.subr.mxu0 0.0
    %738 = vmatpush1.msra.mxu0 0.0
    %739 = vmatprep.subr.mxu0 0.0
    %740 = vmatpush1.msra.mxu0 0.0
    %741 = vmatprep.subr.mxu0 0.0
    %742 = vmatpush1.msra.mxu0 0.0
    %743 = vmatprep.mubr.f32.mxu0 0.0
    %744 = vmatmul.mubr.f32.gmra.mrb[0].mxu0 %v603
    %v745 = vpop.f32.mrb[0].mxu0
    %v746 = vadd.f32 0.0, %v745
    %v747 = vpop.f32.mrb[0].mxu0
    %748 = vdwg.mxu0
    %v749 = vadd.f32 %v605, %v675
    %v750 = vxor.u32 %v749, 2147483648
    %v751 = vmul.f32 %v750, 1.442695
    %v752 = vpow.pop %v751
    %v753 = vadd.f32 %v752, 1.0
    %v754 = vrcp.pop %v753
    %v755 = vmul.f32 1.0, %v754
    %v756 = vadd.f32 %v606, %v677
    %v757 = vxor.u32 %v756, 2147483648
    %v758 = vmul.f32 %v757, 1.442695
    %v759 = vpow.pop %v758
    %v760 = vadd.f32 %v759, 1.0
    %v761 = vrcp.pop %v760
    %v762 = vmul.f32 1.0, %v761
    %v763 = vadd.f32 %v746, %v101
    %v764 = vmul.f32 %v755, %v763
    %v765 = vadd.f32 %v607, %v764
    %v766 = vtanh.pop %v765
    %v767 = vsub.f32 1.0, %v762
    %v768 = vmul.f32 %v767, %v766
    %v769 = vmul.f32 %v762, %v603
    %v770 = vadd.f32 %v768, %v769
    %s771 = scalar_lea.vmem [#allocation2], 96
    %v772 = vld [vmem:[%s771] sm:$0xff]
    %v773 = vld [vmem:[%s771 + $0x8] sm:$0xff]
    %v774 = vld [vmem:[%s771 + $0x10] sm:$0xff]
    %775 = vmatprep.subr.mxu0 %v49
    %776 = vmatpush1.msra.mxu0 %v48
    %777 = vmatprep.subr.mxu0 %v52
    %778 = vmatpush1.msra.mxu0 %v51
    %779 = vmatprep.subr.mxu0 %v55
    %780 = vmatpush1.msra.mxu0 %v54
    %781 = vmatprep.subr.mxu0 %v58
    %782 = vmatpush1.msra.mxu0 %v57
    %783 = vmatprep.subr.mxu0 %v61
    %784 = vmatpush1.msra.mxu0 %v60
    %785 = vmatprep.subr.mxu0 %v64
    %786 = vmatpush1.msra.mxu0 %v63
    %787 = vmatprep.subr.mxu0 %v67
    %788 = vmatpush1.msra.mxu0 %v66
    %789 = vmatprep.subr.mxu0 %v70
    %790 = vmatpush1.msra.mxu0 %v69
    %791 = vmatprep.subr.mxu0 %v73
    %792 = vmatpush1.msra.mxu0 %v72
    %793 = vmatprep.subr.mxu0 %v76
    %794 = vmatpush1.msra.mxu0 %v75
    %795 = vmatprep.subr.mxu0 %v79
    %796 = vmatpush1.msra.mxu0 %v78
    %797 = vmatprep.subr.mxu0 %v82
    %798 = vmatpush1.msra.mxu0 %v81
    %799 = vmatprep.subr.mxu0 %v85
    %800 = vmatpush1.msra.mxu0 %v84
    %801 = vmatprep.subr.mxu0 %v88
    %802 = vmatpush1.msra.mxu0 %v87
    %803 = vmatprep.subr.mxu0 %v91
    %804 = vmatpush1.msra.mxu0 %v90
    %805 = vmatprep.subr.mxu0 %v94
    %806 = vmatpush1.msra.mxu0 %v93
    %807 = vmatprep.subr.mxu0 0.0
    %808 = vmatpush1.msra.mxu0 0.0
    %809 = vmatprep.subr.mxu0 0.0
    %810 = vmatpush1.msra.mxu0 0.0
    %811 = vmatprep.subr.mxu0 0.0
    %812 = vmatpush1.msra.mxu0 0.0
    %813 = vmatprep.subr.mxu0 0.0
    %814 = vmatpush1.msra.mxu0 0.0
    %815 = vmatprep.subr.mxu0 0.0
    %816 = vmatpush1.msra.mxu0 0.0
    %817 = vmatprep.subr.mxu0 0.0
    %818 = vmatpush1.msra.mxu0 0.0
    %819 = vmatprep.subr.mxu0 0.0
    %820 = vmatpush1.msra.mxu0 0.0
    %821 = vmatprep.subr.mxu0 0.0
    %822 = vmatpush1.msra.mxu0 0.0
    %823 = vmatprep.subr.mxu0 0.0
    %824 = vmatpush1.msra.mxu0 0.0
    %825 = vmatprep.subr.mxu0 0.0
    %826 = vmatpush1.msra.mxu0 0.0
    %827 = vmatprep.subr.mxu0 0.0
    %828 = vmatpush1.msra.mxu0 0.0
    %829 = vmatprep.subr.mxu0 0.0
    %830 = vmatpush1.msra.mxu0 0.0
    %831 = vmatprep.subr.mxu0 0.0
    %832 = vmatpush1.msra.mxu0 0.0
    %833 = vmatprep.subr.mxu0 0.0
    %834 = vmatpush1.msra.mxu0 0.0
    %835 = vmatprep.subr.mxu0 0.0
    %836 = vmatpush1.msra.mxu0 0.0
    %837 = vmatprep.subr.mxu0 0.0
    %838 = vmatpush1.msra.mxu0 0.0
    %839 = vmatprep.mubr.f32.mxu0 0.0
    %840 = vmatmul.mubr.f32.gmra.mrb[0].mxu0 %v770
    %v841 = vpop.f32.mrb[0].mxu0
    %v842 = vadd.f32 0.0, %v841
    %v843 = vpop.f32.mrb[0].mxu0
    %v844 = vadd.f32 0.0, %v843
    %845 = vdwg.mxu0
    %846 = vmatprep.subr.mxu0 0.0
    %847 = vmatpush1.msra.mxu0 %v50
    %848 = vmatprep.subr.mxu0 0.0
    %849 = vmatpush1.msra.mxu0 %v53
    %850 = vmatprep.subr.mxu0 0.0
    %851 = vmatpush1.msra.mxu0 %v56
    %852 = vmatprep.subr.mxu0 0.0
    %853 = vmatpush1.msra.mxu0 %v59
    %854 = vmatprep.subr.mxu0 0.0
    %855 = vmatpush1.msra.mxu0 %v62
    %856 = vmatprep.subr.mxu0 0.0
    %857 = vmatpush1.msra.mxu0 %v65
    %858 = vmatprep.subr.mxu0 0.0
    %859 = vmatpush1.msra.mxu0 %v68
    %860 = vmatprep.subr.mxu0 0.0
    %861 = vmatpush1.msra.mxu0 %v71
    %862 = vmatprep.subr.mxu0 0.0
    %863 = vmatpush1.msra.mxu0 %v74
    %864 = vmatprep.subr.mxu0 0.0
    %865 = vmatpush1.msra.mxu0 %v77
    %866 = vmatprep.subr.mxu0 0.0
    %867 = vmatpush1.msra.mxu0 %v80
    %868 = vmatprep.subr.mxu0 0.0
    %869 = vmatpush1.msra.mxu0 %v83
    %870 = vmatprep.subr.mxu0 0.0
    %871 = vmatpush1.msra.mxu0 %v86
    %872 = vmatprep.subr.mxu0 0.0
    %873 = vmatpush1.msra.mxu0 %v89
    %874 = vmatprep.subr.mxu0 0.0
    %875 = vmatpush1.msra.mxu0 %v92
    %876 = vmatprep.subr.mxu0 0.0
    %877 = vmatpush1.msra.mxu0 %v95
    %878 = vmatprep.subr.mxu0 0.0
    %879 = vmatpush1.msra.mxu0 0.0
    %880 = vmatprep.subr.mxu0 0.0
    %881 = vmatpush1.msra.mxu0 0.0
    %882 = vmatprep.subr.mxu0 0.0
    %883 = vmatpush1.msra.mxu0 0.0
    %884 = vmatprep.subr.mxu0 0.0
    %885 = vmatpush1.msra.mxu0 0.0
    %886 = vmatprep.subr.mxu0 0.0
    %887 = vmatpush1.msra.mxu0 0.0
    %888 = vmatprep.subr.mxu0 0.0
    %889 = vmatpush1.msra.mxu0 0.0
    %890 = vmatprep.subr.mxu0 0.0
    %891 = vmatpush1.msra.mxu0 0.0
    %892 = vmatprep.subr.mxu0 0.0
    %893 = vmatpush1.msra.mxu0 0.0
    %894 = vmatprep.subr.mxu0 0.0
    %895 = vmatpush1.msra.mxu0 0.0
    %896 = vmatprep.subr.mxu0 0.0
    %897 = vmatpush1.msra.mxu0 0.0
    %898 = vmatprep.subr.mxu0 0.0
    %899 = vmatpush1.msra.mxu0 0.0
    %900 = vmatprep.subr.mxu0 0.0
    %901 = vmatpush1.msra.mxu0 0.0
    %902 = vmatprep.subr.mxu0 0.0
    %903 = vmatpush1.msra.mxu0 0.0
    %904 = vmatprep.subr.mxu0 0.0
    %905 = vmatpush1.msra.mxu0 0.0
    %906 = vmatprep.subr.mxu0 0.0
    %907 = vmatpush1.msra.mxu0 0.0
    %908 = vmatprep.subr.mxu0 0.0
    %909 = vmatpush1.msra.mxu0 0.0
    %910 = vmatprep.mubr.f32.mxu0 0.0
    %911 = vmatmul.mubr.f32.gmra.mrb[0].mxu0 %v770
    %v912 = vpop.f32.mrb[0].mxu0
    %v913 = vadd.f32 0.0, %v912
    %v914 = vpop.f32.mrb[0].mxu0
    %915 = vdwg.mxu0
    %v916 = vadd.f32 %v772, %v842
    %v917 = vxor.u32 %v916, 2147483648
    %v918 = vmul.f32 %v917, 1.442695
    %v919 = vpow.pop %v918
    %v920 = vadd.f32 %v919, 1.0
    %v921 = vrcp.pop %v920
    %v922 = vmul.f32 1.0, %v921
    %v923 = vadd.f32 %v773, %v844
    %v924 = vxor.u32 %v923, 2147483648
    %v925 = vmul.f32 %v924, 1.442695
    %v926 = vpow.pop %v925
    %v927 = vadd.f32 %v926, 1.0
    %v928 = vrcp.pop %v927
    %v929 = vmul.f32 1.0, %v928
    %v930 = vadd.f32 %v913, %v101
    %v931 = vmul.f32 %v922, %v930
    %v932 = vadd.f32 %v774, %v931
    %v933 = vtanh.pop %v932
    %v934 = vsub.f32 1.0, %v929
    %v935 = vmul.f32 %v934, %v933
    %v936 = vmul.f32 %v929, %v770
    %v937 = vadd.f32 %v935, %v936
    %s938 = scalar_lea.vmem [#allocation2], 120
    %v939 = vld [vmem:[%s938] sm:$0xff]
    %v940 = vld [vmem:[%s938 + $0x8] sm:$0xff]
    %v941 = vld [vmem:[%s938 + $0x10] sm:$0xff]
    %942 = vmatprep.subr.mxu0 %v49
    %943 = vmatpush1.msra.mxu0 %v48
    %944 = vmatprep.subr.mxu0 %v52
    %945 = vmatpush1.msra.mxu0 %v51
    %946 = vmatprep.subr.mxu0 %v55
    %947 = vmatpush1.msra.mxu0 %v54
    %948 = vmatprep.subr.mxu0 %v58
    %949 = vmatpush1.msra.mxu0 %v57
    %950 = vmatprep.subr.mxu0 %v61
    %951 = vmatpush1.msra.mxu0 %v60
    %952 = vmatprep.subr.mxu0 %v64
    %953 = vmatpush1.msra.mxu0 %v63
    %954 = vmatprep.subr.mxu0 %v67
    %955 = vmatpush1.msra.mxu0 %v66
    %956 = vmatprep.subr.mxu0 %v70
    %957 = vmatpush1.msra.mxu0 %v69
    %958 = vmatprep.subr.mxu0 %v73
    %959 = vmatpush1.msra.mxu0 %v72
    %960 = vmatprep.subr.mxu0 %v76
    %961 = vmatpush1.msra.mxu0 %v75
    %962 = vmatprep.subr.mxu0 %v79
    %963 = vmatpush1.msra.mxu0 %v78
    %964 = vmatprep.subr.mxu0 %v82
    %965 = vmatpush1.msra.mxu0 %v81
    %966 = vmatprep.subr.mxu0 %v85
    %967 = vmatpush1.msra.mxu0 %v84
    %968 = vmatprep.subr.mxu0 %v88
    %969 = vmatpush1.msra.mxu0 %v87
    %970 = vmatprep.subr.mxu0 %v91
    %971 = vmatpush1.msra.mxu0 %v90
    %972 = vmatprep.subr.mxu0 %v94
    %973 = vmatpush1.msra.mxu0 %v93
    %974 = vmatprep.subr.mxu0 0.0
    %975 = vmatpush1.msra.mxu0 0.0
    %976 = vmatprep.subr.mxu0 0.0
    %977 = vmatpush1.msra.mxu0 0.0
    %978 = vmatprep.subr.mxu0 0.0
    %979 = vmatpush1.msra.mxu0 0.0
    %980 = vmatprep.subr.mxu0 0.0
    %981 = vmatpush1.msra.mxu0 0.0
    %982 = vmatprep.subr.mxu0 0.0
    %983 = vmatpush1.msra.mxu0 0.0
    %984 = vmatprep.subr.mxu0 0.0
    %985 = vmatpush1.msra.mxu0 0.0
    %986 = vmatprep.subr.mxu0 0.0
    %987 = vmatpush1.msra.mxu0 0.0
    %988 = vmatprep.subr.mxu0 0.0
    %989 = vmatpush1.msra.mxu0 0.0
    %990 = vmatprep.subr.mxu0 0.0
    %991 = vmatpush1.msra.mxu0 0.0
    %992 = vmatprep.subr.mxu0 0.0
    %993 = vmatpush1.msra.mxu0 0.0
    %994 = vmatprep.subr.mxu0 0.0
    %995 = vmatpush1.msra.mxu0 0.0
    %996 = vmatprep.subr.mxu0 0.0
    %997 = vmatpush1.msra.mxu0 0.0
    %998 = vmatprep.subr.mxu0 0.0
    %999 = vmatpush1.msra.mxu0 0.0
    %1000 = vmatprep.subr.mxu0 0.0
    %1001 = vmatpush1.msra.mxu0 0.0
    %1002 = vmatprep.subr.mxu0 0.0
    %1003 = vmatpush1.msra.mxu0 0.0
    %1004 = vmatprep.subr.mxu0 0.0
    %1005 = vmatpush1.msra.mxu0 0.0
    %1006 = vmatprep.mubr.f32.mxu0 0.0
    %1007 = vmatmul.mubr.f32.gmra.mrb[0].mxu0 %v937
    %v1008 = vpop.f32.mrb[0].mxu0
    %v1009 = vadd.f32 0.0, %v1008
    %v1010 = vpop.f32.mrb[0].mxu0
    %v1011 = vadd.f32 0.0, %v1010
    %1012 = vdwg.mxu0
    %1013 = vmatprep.subr.mxu0 0.0
    %1014 = vmatpush1.msra.mxu0 %v50
    %1015 = vmatprep.subr.mxu0 0.0
    %1016 = vmatpush1.msra.mxu0 %v53
    %1017 = vmatprep.subr.mxu0 0.0
    %1018 = vmatpush1.msra.mxu0 %v56
    %1019 = vmatprep.subr.mxu0 0.0
    %1020 = vmatpush1.msra.mxu0 %v59
    %1021 = vmatprep.subr.mxu0 0.0
    %1022 = vmatpush1.msra.mxu0 %v62
    %1023 = vmatprep.subr.mxu0 0.0
    %1024 = vmatpush1.msra.mxu0 %v65
    %1025 = vmatprep.subr.mxu0 0.0
    %1026 = vmatpush1.msra.mxu0 %v68
    %1027 = vmatprep.subr.mxu0 0.0
    %1028 = vmatpush1.msra.mxu0 %v71
    %1029 = vmatprep.subr.mxu0 0.0
    %1030 = vmatpush1.msra.mxu0 %v74
    %1031 = vmatprep.subr.mxu0 0.0
    %1032 = vmatpush1.msra.mxu0 %v77
    %1033 = vmatprep.subr.mxu0 0.0
    %1034 = vmatpush1.msra.mxu0 %v80
    %1035 = vmatprep.subr.mxu0 0.0
    %1036 = vmatpush1.msra.mxu0 %v83
    %1037 = vmatprep.subr.mxu0 0.0
    %1038 = vmatpush1.msra.mxu0 %v86
    %1039 = vmatprep.subr.mxu0 0.0
    %1040 = vmatpush1.msra.mxu0 %v89
    %1041 = vmatprep.subr.mxu0 0.0
    %1042 = vmatpush1.msra.mxu0 %v92
    %1043 = vmatprep.subr.mxu0 0.0
    %1044 = vmatpush1.msra.mxu0 %v95
    %1045 = vmatprep.subr.mxu0 0.0
    %1046 = vmatpush1.msra.mxu0 0.0
    %1047 = vmatprep.subr.mxu0 0.0
    %1048 = vmatpush1.msra.mxu0 0.0
    %1049 = vmatprep.subr.mxu0 0.0
    %1050 = vmatpush1.msra.mxu0 0.0
    %1051 = vmatprep.subr.mxu0 0.0
    %1052 = vmatpush1.msra.mxu0 0.0
    %1053 = vmatprep.subr.mxu0 0.0
    %1054 = vmatpush1.msra.mxu0 0.0
    %1055 = vmatprep.subr.mxu0 0.0
    %1056 = vmatpush1.msra.mxu0 0.0
    %1057 = vmatprep.subr.mxu0 0.0
    %1058 = vmatpush1.msra.mxu0 0.0
    %1059 = vmatprep.subr.mxu0 0.0
    %1060 = vmatpush1.msra.mxu0 0.0
    %1061 = vmatprep.subr.mxu0 0.0
    %1062 = vmatpush1.msra.mxu0 0.0
    %1063 = vmatprep.subr.mxu0 0.0
    %1064 = vmatpush1.msra.mxu0 0.0
    %1065 = vmatprep.subr.mxu0 0.0
    %1066 = vmatpush1.msra.mxu0 0.0
    %1067 = vmatprep.subr.mxu0 0.0
    %1068 = vmatpush1.msra.mxu0 0.0
    %1069 = vmatprep.subr.mxu0 0.0
    %1070 = vmatpush1.msra.mxu0 0.0
    %1071 = vmatprep.subr.mxu0 0.0
    %1072 = vmatpush1.msra.mxu0 0.0
    %1073 = vmatprep.subr.mxu0 0.0
    %1074 = vmatpush1.msra.mxu0 0.0
    %1075 = vmatprep.subr.mxu0 0.0
    %1076 = vmatpush1.msra.mxu0 0.0
    %1077 = vmatprep.mubr.f32.mxu0 0.0
    %1078 = vmatmul.mubr.f32.gmra.mrb[0].mxu0 %v937
    %v1079 = vpop.f32.mrb[0].mxu0
    %v1080 = vadd.f32 0.0, %v1079
    %v1081 = vpop.f32.mrb[0].mxu0
    %1082 = vdwg.mxu0
    %v1083 = vadd.f32 %v939, %v1009
    %v1084 = vxor.u32 %v1083, 2147483648
    %v1085 = vmul.f32 %v1084, 1.442695
    %v1086 = vpow.pop %v1085
    %v1087 = vadd.f32 %v1086, 1.0
    %v1088 = vrcp.pop %v1087
    %v1089 = vmul.f32 1.0, %v1088
    %v1090 = vadd.f32 %v940, %v1011
    %v1091 = vxor.u32 %v1090, 2147483648
    %v1092 = vmul.f32 %v1091, 1.442695
    %v1093 = vpow.pop %v1092
    %v1094 = vadd.f32 %v1093, 1.0
    %v1095 = vrcp.pop %v1094
    %v1096 = vmul.f32 1.0, %v1095
    %v1097 = vadd.f32 %v1080, %v101
    %v1098 = vmul.f32 %v1089, %v1097
    %v1099 = vadd.f32 %v941, %v1098
    %v1100 = vtanh.pop %v1099
    %v1101 = vsub.f32 1.0, %v1096
    %v1102 = vmul.f32 %v1101, %v1100
    %v1103 = vmul.f32 %v1096, %v937
    %v1104 = vadd.f32 %v1102, %v1103
    %s1105 = scalar_lea.vmem [#allocation2], 144
    %v1106 = vld [vmem:[%s1105] sm:$0xff]
    %v1107 = vld [vmem:[%s1105 + $0x8] sm:$0xff]
    %v1108 = vld [vmem:[%s1105 + $0x10] sm:$0xff]
    %1109 = vmatprep.subr.mxu0 %v49
    %1110 = vmatpush1.msra.mxu0 %v48
    %1111 = vmatprep.subr.mxu0 %v52
    %1112 = vmatpush1.msra.mxu0 %v51
    %1113 = vmatprep.subr.mxu0 %v55
    %1114 = vmatpush1.msra.mxu0 %v54
    %1115 = vmatprep.subr.mxu0 %v58
    %1116 = vmatpush1.msra.mxu0 %v57
    %1117 = vmatprep.subr.mxu0 %v61
    %1118 = vmatpush1.msra.mxu0 %v60
    %1119 = vmatprep.subr.mxu0 %v64
    %1120 = vmatpush1.msra.mxu0 %v63
    %1121 = vmatprep.subr.mxu0 %v67
    %1122 = vmatpush1.msra.mxu0 %v66
    %1123 = vmatprep.subr.mxu0 %v70
    %1124 = vmatpush1.msra.mxu0 %v69
    %1125 = vmatprep.subr.mxu0 %v73
    %1126 = vmatpush1.msra.mxu0 %v72
    %1127 = vmatprep.subr.mxu0 %v76
    %1128 = vmatpush1.msra.mxu0 %v75
    %1129 = vmatprep.subr.mxu0 %v79
    %1130 = vmatpush1.msra.mxu0 %v78
    %1131 = vmatprep.subr.mxu0 %v82
    %1132 = vmatpush1.msra.mxu0 %v81
    %1133 = vmatprep.subr.mxu0 %v85
    %1134 = vmatpush1.msra.mxu0 %v84
    %1135 = vmatprep.subr.mxu0 %v88
    %1136 = vmatpush1.msra.mxu0 %v87
    %1137 = vmatprep.subr.mxu0 %v91
    %1138 = vmatpush1.msra.mxu0 %v90
    %1139 = vmatprep.subr.mxu0 %v94
    %1140 = vmatpush1.msra.mxu0 %v93
    %1141 = vmatprep.subr.mxu0 0.0
    %1142 = vmatpush1.msra.mxu0 0.0
    %1143 = vmatprep.subr.mxu0 0.0
    %1144 = vmatpush1.msra.mxu0 0.0
    %1145 = vmatprep.subr.mxu0 0.0
    %1146 = vmatpush1.msra.mxu0 0.0
    %1147 = vmatprep.subr.mxu0 0.0
    %1148 = vmatpush1.msra.mxu0 0.0
    %1149 = vmatprep.subr.mxu0 0.0
    %1150 = vmatpush1.msra.mxu0 0.0
    %1151 = vmatprep.subr.mxu0 0.0
    %1152 = vmatpush1.msra.mxu0 0.0
    %1153 = vmatprep.subr.mxu0 0.0
    %1154 = vmatpush1.msra.mxu0 0.0
    %1155 = vmatprep.subr.mxu0 0.0
    %1156 = vmatpush1.msra.mxu0 0.0
    %1157 = vmatprep.subr.mxu0 0.0
    %1158 = vmatpush1.msra.mxu0 0.0
    %1159 = vmatprep.subr.mxu0 0.0
    %1160 = vmatpush1.msra.mxu0 0.0
    %1161 = vmatprep.subr.mxu0 0.0
    %1162 = vmatpush1.msra.mxu0 0.0
    %1163 = vmatprep.subr.mxu0 0.0
    %1164 = vmatpush1.msra.mxu0 0.0
    %1165 = vmatprep.subr.mxu0 0.0
    %1166 = vmatpush1.msra.mxu0 0.0
    %1167 = vmatprep.subr.mxu0 0.0
    %1168 = vmatpush1.msra.mxu0 0.0
    %1169 = vmatprep.subr.mxu0 0.0
    %1170 = vmatpush1.msra.mxu0 0.0
    %1171 = vmatprep.subr.mxu0 0.0
    %1172 = vmatpush1.msra.mxu0 0.0
    %1173 = vmatprep.mubr.f32.mxu0 0.0
    %1174 = vmatmul.mubr.f32.gmra.mrb[0].mxu0 %v1104
    %v1175 = vpop.f32.mrb[0].mxu0
    %v1176 = vadd.f32 0.0, %v1175
    %v1177 = vpop.f32.mrb[0].mxu0
    %v1178 = vadd.f32 0.0, %v1177
    %1179 = vdwg.mxu0
    %1180 = vmatprep.subr.mxu0 0.0
    %1181 = vmatpush1.msra.mxu0 %v50
    %1182 = vmatprep.subr.mxu0 0.0
    %1183 = vmatpush1.msra.mxu0 %v53
    %1184 = vmatprep.subr.mxu0 0.0
    %1185 = vmatpush1.msra.mxu0 %v56
    %1186 = vmatprep.subr.mxu0 0.0
    %1187 = vmatpush1.msra.mxu0 %v59
    %1188 = vmatprep.subr.mxu0 0.0
    %1189 = vmatpush1.msra.mxu0 %v62
    %1190 = vmatprep.subr.mxu0 0.0
    %1191 = vmatpush1.msra.mxu0 %v65
    %1192 = vmatprep.subr.mxu0 0.0
    %1193 = vmatpush1.msra.mxu0 %v68
    %1194 = vmatprep.subr.mxu0 0.0
    %1195 = vmatpush1.msra.mxu0 %v71
    %1196 = vmatprep.subr.mxu0 0.0
    %1197 = vmatpush1.msra.mxu0 %v74
    %1198 = vmatprep.subr.mxu0 0.0
    %1199 = vmatpush1.msra.mxu0 %v77
    %1200 = vmatprep.subr.mxu0 0.0
    %1201 = vmatpush1.msra.mxu0 %v80
    %1202 = vmatprep.subr.mxu0 0.0
    %1203 = vmatpush1.msra.mxu0 %v83
    %1204 = vmatprep.subr.mxu0 0.0
    %1205 = vmatpush1.msra.mxu0 %v86
    %1206 = vmatprep.subr.mxu0 0.0
    %1207 = vmatpush1.msra.mxu0 %v89
    %1208 = vmatprep.subr.mxu0 0.0
    %1209 = vmatpush1.msra.mxu0 %v92
    %1210 = vmatprep.subr.mxu0 0.0
    %1211 = vmatpush1.msra.mxu0 %v95
    %1212 = vmatprep.subr.mxu0 0.0
    %1213 = vmatpush1.msra.mxu0 0.0
    %1214 = vmatprep.subr.mxu0 0.0
    %1215 = vmatpush1.msra.mxu0 0.0
    %1216 = vmatprep.subr.mxu0 0.0
    %1217 = vmatpush1.msra.mxu0 0.0
    %1218 = vmatprep.subr.mxu0 0.0
    %1219 = vmatpush1.msra.mxu0 0.0
    %1220 = vmatprep.subr.mxu0 0.0
    %1221 = vmatpush1.msra.mxu0 0.0
    %1222 = vmatprep.subr.mxu0 0.0
    %1223 = vmatpush1.msra.mxu0 0.0
    %1224 = vmatprep.subr.mxu0 0.0
    %1225 = vmatpush1.msra.mxu0 0.0
    %1226 = vmatprep.subr.mxu0 0.0
    %1227 = vmatpush1.msra.mxu0 0.0
    %1228 = vmatprep.subr.mxu0 0.0
    %1229 = vmatpush1.msra.mxu0 0.0
    %1230 = vmatprep.subr.mxu0 0.0
    %1231 = vmatpush1.msra.mxu0 0.0
    %1232 = vmatprep.subr.mxu0 0.0
    %1233 = vmatpush1.msra.mxu0 0.0
    %1234 = vmatprep.subr.mxu0 0.0
    %1235 = vmatpush1.msra.mxu0 0.0
    %1236 = vmatprep.subr.mxu0 0.0
    %1237 = vmatpush1.msra.mxu0 0.0
    %1238 = vmatprep.subr.mxu0 0.0
    %1239 = vmatpush1.msra.mxu0 0.0
    %1240 = vmatprep.subr.mxu0 0.0
    %1241 = vmatpush1.msra.mxu0 0.0
    %1242 = vmatprep.subr.mxu0 0.0
    %1243 = vmatpush1.msra.mxu0 0.0
    %1244 = vmatprep.mubr.f32.mxu0 0.0
    %1245 = vmatmul.mubr.f32.gmra.mrb[0].mxu0 %v1104
    %v1246 = vpop.f32.mrb[0].mxu0
    %v1247 = vadd.f32 0.0, %v1246
    %v1248 = vpop.f32.mrb[0].mxu0
    %1249 = vdwg.mxu0
    %v1250 = vadd.f32 %v1106, %v1176
    %v1251 = vxor.u32 %v1250, 2147483648
    %v1252 = vmul.f32 %v1251, 1.442695
    %v1253 = vpow.pop %v1252
    %v1254 = vadd.f32 %v1253, 1.0
    %v1255 = vrcp.pop %v1254
    %v1256 = vmul.f32 1.0, %v1255
    %v1257 = vadd.f32 %v1107, %v1178
    %v1258 = vxor.u32 %v1257, 2147483648
    %v1259 = vmul.f32 %v1258, 1.442695
    %v1260 = vpow.pop %v1259
    %v1261 = vadd.f32 %v1260, 1.0
    %v1262 = vrcp.pop %v1261
    %v1263 = vmul.f32 1.0, %v1262
    %v1264 = vadd.f32 %v1247, %v101
    %v1265 = vmul.f32 %v1256, %v1264
    %v1266 = vadd.f32 %v1108, %v1265
    %v1267 = vtanh.pop %v1266
    %v1268 = vsub.f32 1.0, %v1263
    %v1269 = vmul.f32 %v1268, %v1267
    %v1270 = vmul.f32 %v1263, %v1104
    %v1271 = vadd.f32 %v1269, %v1270
    %s1272 = scalar_lea.vmem [#allocation2], 168
    %v1273 = vld [vmem:[%s1272] sm:$0xff]
    %v1274 = vld [vmem:[%s1272 + $0x8] sm:$0xff]
    %v1275 = vld [vmem:[%s1272 + $0x10] sm:$0xff]
    %1276 = vmatprep.subr.mxu0 %v49
    %1277 = vmatpush1.msra.mxu0 %v48
    %1278 = vmatprep.subr.mxu0 %v52
    %1279 = vmatpush1.msra.mxu0 %v51
    %1280 = vmatprep.subr.mxu0 %v55
    %1281 = vmatpush1.msra.mxu0 %v54
    %1282 = vmatprep.subr.mxu0 %v58
    %1283 = vmatpush1.msra.mxu0 %v57
    %1284 = vmatprep.subr.mxu0 %v61
    %1285 = vmatpush1.msra.mxu0 %v60
    %1286 = vmatprep.subr.mxu0 %v64
    %1287 = vmatpush1.msra.mxu0 %v63
    %1288 = vmatprep.subr.mxu0 %v67
    %1289 = vmatpush1.msra.mxu0 %v66
    %1290 = vmatprep.subr.mxu0 %v70
    %1291 = vmatpush1.msra.mxu0 %v69
    %1292 = vmatprep.subr.mxu0 %v73
    %1293 = vmatpush1.msra.mxu0 %v72
    %1294 = vmatprep.subr.mxu0 %v76
    %1295 = vmatpush1.msra.mxu0 %v75
    %1296 = vmatprep.subr.mxu0 %v79
    %1297 = vmatpush1.msra.mxu0 %v78
    %1298 = vmatprep.subr.mxu0 %v82
    %1299 = vmatpush1.msra.mxu0 %v81
    %1300 = vmatprep.subr.mxu0 %v85
    %1301 = vmatpush1.msra.mxu0 %v84
    %1302 = vmatprep.subr.mxu0 %v88
    %1303 = vmatpush1.msra.mxu0 %v87
    %1304 = vmatprep.subr.mxu0 %v91
    %1305 = vmatpush1.msra.mxu0 %v90
    %1306 = vmatprep.subr.mxu0 %v94
    %1307 = vmatpush1.msra.mxu0 %v93
    %1308 = vmatprep.subr.mxu0 0.0
    %1309 = vmatpush1.msra.mxu0 0.0
    %1310 = vmatprep.subr.mxu0 0.0
    %1311 = vmatpush1.msra.mxu0 0.0
    %1312 = vmatprep.subr.mxu0 0.0
    %1313 = vmatpush1.msra.mxu0 0.0
    %1314 = vmatprep.subr.mxu0 0.0
    %1315 = vmatpush1.msra.mxu0 0.0
    %1316 = vmatprep.subr.mxu0 0.0
    %1317 = vmatpush1.msra.mxu0 0.0
    %1318 = vmatprep.subr.mxu0 0.0
    %1319 = vmatpush1.msra.mxu0 0.0
    %1320 = vmatprep.subr.mxu0 0.0
    %1321 = vmatpush1.msra.mxu0 0.0
    %1322 = vmatprep.subr.mxu0 0.0
    %1323 = vmatpush1.msra.mxu0 0.0
    %1324 = vmatprep.subr.mxu0 0.0
    %1325 = vmatpush1.msra.mxu0 0.0
    %1326 = vmatprep.subr.mxu0 0.0
    %1327 = vmatpush1.msra.mxu0 0.0
    %1328 = vmatprep.subr.mxu0 0.0
    %1329 = vmatpush1.msra.mxu0 0.0
    %1330 = vmatprep.subr.mxu0 0.0
    %1331 = vmatpush1.msra.mxu0 0.0
    %1332 = vmatprep.subr.mxu0 0.0
    %1333 = vmatpush1.msra.mxu0 0.0
    %1334 = vmatprep.subr.mxu0 0.0
    %1335 = vmatpush1.msra.mxu0 0.0
    %1336 = vmatprep.subr.mxu0 0.0
    %1337 = vmatpush1.msra.mxu0 0.0
    %1338 = vmatprep.subr.mxu0 0.0
    %1339 = vmatpush1.msra.mxu0 0.0
    %1340 = vmatprep.mubr.f32.mxu0 0.0
    %1341 = vmatmul.mubr.f32.gmra.mrb[0].mxu0 %v1271
    %v1342 = vpop.f32.mrb[0].mxu0
    %v1343 = vadd.f32 0.0, %v1342
    %v1344 = vpop.f32.mrb[0].mxu0
    %v1345 = vadd.f32 0.0, %v1344
    %1346 = vdwg.mxu0
    %1347 = vmatprep.subr.mxu0 0.0
    %1348 = vmatpush1.msra.mxu0 %v50
    %1349 = vmatprep.subr.mxu0 0.0
    %1350 = vmatpush1.msra.mxu0 %v53
    %1351 = vmatprep.subr.mxu0 0.0
    %1352 = vmatpush1.msra.mxu0 %v56
    %1353 = vmatprep.subr.mxu0 0.0
    %1354 = vmatpush1.msra.mxu0 %v59
    %1355 = vmatprep.subr.mxu0 0.0
    %1356 = vmatpush1.msra.mxu0 %v62
    %1357 = vmatprep.subr.mxu0 0.0
    %1358 = vmatpush1.msra.mxu0 %v65
    %1359 = vmatprep.subr.mxu0 0.0
    %1360 = vmatpush1.msra.mxu0 %v68
    %1361 = vmatprep.subr.mxu0 0.0
    %1362 = vmatpush1.msra.mxu0 %v71
    %1363 = vmatprep.subr.mxu0 0.0
    %1364 = vmatpush1.msra.mxu0 %v74
    %1365 = vmatprep.subr.mxu0 0.0
    %1366 = vmatpush1.msra.mxu0 %v77
    %1367 = vmatprep.subr.mxu0 0.0
    %1368 = vmatpush1.msra.mxu0 %v80
    %1369 = vmatprep.subr.mxu0 0.0
    %1370 = vmatpush1.msra.mxu0 %v83
    %1371 = vmatprep.subr.mxu0 0.0
    %1372 = vmatpush1.msra.mxu0 %v86
    %1373 = vmatprep.subr.mxu0 0.0
    %1374 = vmatpush1.msra.mxu0 %v89
    %1375 = vmatprep.subr.mxu0 0.0
    %1376 = vmatpush1.msra.mxu0 %v92
    %1377 = vmatprep.subr.mxu0 0.0
    %1378 = vmatpush1.msra.mxu0 %v95
    %1379 = vmatprep.subr.mxu0 0.0
    %1380 = vmatpush1.msra.mxu0 0.0
    %1381 = vmatprep.subr.mxu0 0.0
    %1382 = vmatpush1.msra.mxu0 0.0
    %1383 = vmatprep.subr.mxu0 0.0
    %1384 = vmatpush1.msra.mxu0 0.0
    %1385 = vmatprep.subr.mxu0 0.0
    %1386 = vmatpush1.msra.mxu0 0.0
    %1387 = vmatprep.subr.mxu0 0.0
    %1388 = vmatpush1.msra.mxu0 0.0
    %1389 = vmatprep.subr.mxu0 0.0
    %1390 = vmatpush1.msra.mxu0 0.0
    %1391 = vmatprep.subr.mxu0 0.0
    %1392 = vmatpush1.msra.mxu0 0.0
    %1393 = vmatprep.subr.mxu0 0.0
    %1394 = vmatpush1.msra.mxu0 0.0
    %1395 = vmatprep.subr.mxu0 0.0
    %1396 = vmatpush1.msra.mxu0 0.0
    %1397 = vmatprep.subr.mxu0 0.0
    %1398 = vmatpush1.msra.mxu0 0.0
    %1399 = vmatprep.subr.mxu0 0.0
    %1400 = vmatpush1.msra.mxu0 0.0
    %1401 = vmatprep.subr.mxu0 0.0
    %1402 = vmatpush1.msra.mxu0 0.0
    %1403 = vmatprep.subr.mxu0 0.0
    %1404 = vmatpush1.msra.mxu0 0.0
    %1405 = vmatprep.subr.mxu0 0.0
    %1406 = vmatpush1.msra.mxu0 0.0
    %1407 = vmatprep.subr.mxu0 0.0
    %1408 = vmatpush1.msra.mxu0 0.0
    %1409 = vmatprep.subr.mxu0 0.0
    %1410 = vmatpush1.msra.mxu0 0.0
    %1411 = vmatprep.mubr.f32.mxu0 0.0
    %1412 = vmatmul.mubr.f32.gmra.mrb[0].mxu0 %v1271
    %v1413 = vpop.f32.mrb[0].mxu0
    %v1414 = vadd.f32 0.0, %v1413
    %v1415 = vpop.f32.mrb[0].mxu0
    %1416 = vdwg.mxu0
    %v1417 = vadd.f32 %v1273, %v1343
    %v1418 = vxor.u32 %v1417, 2147483648
    %v1419 = vmul.f32 %v1418, 1.442695
    %v1420 = vpow.pop %v1419
    %v1421 = vadd.f32 %v1420, 1.0
    %v1422 = vrcp.pop %v1421
    %v1423 = vmul.f32 1.0, %v1422
    %v1424 = vadd.f32 %v1274, %v1345
    %v1425 = vxor.u32 %v1424, 2147483648
    %v1426 = vmul.f32 %v1425, 1.442695
    %v1427 = vpow.pop %v1426
    %v1428 = vadd.f32 %v1427, 1.0
    %v1429 = vrcp.pop %v1428
    %v1430 = vmul.f32 1.0, %v1429
    %v1431 = vadd.f32 %v1414, %v101
    %v1432 = vmul.f32 %v1423, %v1431
    %v1433 = vadd.f32 %v1275, %v1432
    %v1434 = vtanh.pop %v1433
    %v1435 = vsub.f32 1.0, %v1430
    %v1436 = vmul.f32 %v1435, %v1434
    %v1437 = vmul.f32 %v1430, %v1271
    %v1438 = vadd.f32 %v1436, %v1437
    %1439 = vst [vmem:[#allocation7] sm:$0xff] %v1438
    // Predicated region
    $region26: #{tpu_custom_call.1} parent=1 // pred_check
      _
    $region27: #{tpu_custom_call.1} parent=1 // pred_check_branch
      %1441 = sbr.rel (0) target = $region29
    $region28: #{tpu_custom_call.1} parent=1 // pred_region
      %s1443 = ssub.s32 128, 128
      %1444 = vsyncadd [#allocation4], %s1443
      %s1446 = sshll.u32 [#allocation7], 4
      %s1447 = int_to_ptr.vmem [resolvable:$true] %s1446
      %1449 = dma.vmem_to_hbm [thread:$0]  %s1447, 128, %s3, [#allocation4]
    $region29: #{tpu_custom_call.1} parent=1 // pred_fallthru
      _
    // Predicated region
    $region30: #{tpu_custom_call.1} parent=1 // pred_check
      _
    $region31: #{tpu_custom_call.1} parent=1 // pred_check_branch
      %1451 = sbr.rel (0) target = $region33
    $region32: #{tpu_custom_call.1} parent=1 // pred_region
      %1452 = dma.done [#allocation4], 128
    $region33: #{tpu_custom_call.1} parent=1 // pred_fallthru
      _
    %1453 = vsyncpa [#allocation3], 1
    %1454 = vsyncpa [#allocation6], 1
    %1455 = vsyncpa [#allocation4], 1

</llo_original>
